<compile_context>
chip_gen: v5e
topology: v5e:2x2
jax: 0.10.0
libtpu: 0.0.40
codegen_flags: <defaults>
</compile_context>

<pallas_src>
import functools

import jax
import jax.numpy as jnp
import numpy as np
from jax.experimental import pallas as pl
from jax.experimental.pallas import tpu as pltpu

conv_out4 = 512
linear_out = 512
SELU_ALPHA = 1.6732632423543772
SELU_SCALE = 1.0507009873554805
LN_EPS = 1e-5
NEG_SENTINEL = -1e30      # finite stand-in for -inf: keeps LayerNorm NaN-free
LANE = 128
SUBLANE = 8


def _round_up(x, m):
    return ((x + m - 1) // m) * m


def _selu(x):
    return SELU_SCALE * jnp.where(x > 0, x, SELU_ALPHA * (jnp.exp(x) - 1.0))


def _layernorm(x, gamma, beta):
    mu = jnp.mean(x, axis=-1, keepdims=True)
    var = jnp.mean((x - mu) ** 2, axis=-1, keepdims=True)
    return (x - mu) * jax.lax.rsqrt(var + LN_EPS) * gamma + beta


# ------------------------- fused pooling + head kernel ------------------------
def _critic_kernel(ids_ref, feats_ref, jnt_ref,
                   g0_ref, be0_ref, w1_ref, b1_ref,
                   g1_ref, be1_ref, wo_ref, bo_ref,
                   out_ref, pool_ref, cat_ref, *, b_pad, jpad):
    t = pl.program_id(0)

    @pl.when(t == 0)
    def _init():
        pool_ref[...] = jnp.full((b_pad, conv_out4), NEG_SENTINEL, jnp.float32)

    # ---- pooling: column-chunked running segmented max into the pool scratch -
    ids = ids_ref[...]                                    # [TILE_N, 1] int32
    masks = [ids == b for b in range(b_pad)]              # hoisted compares

    n_chunks = conv_out4 // LANE
    for ci in range(n_chunks):                            # 4 lane chunks of 128
        col = pl.ds(ci * LANE, LANE)
        fchunk = feats_ref[:, col]                        # [TILE_N, 128]
        rows = [jnp.max(jnp.where(masks[b], fchunk, NEG_SENTINEL),
                        axis=0, keepdims=True)            # [1, 128]
                for b in range(b_pad)]
        slab = jnp.concatenate(rows, axis=0)              # [b_pad, 128] aligned
        pool_ref[:, col] = jnp.maximum(pool_ref[:, col], slab)

    # ---- MLP head, once on the last tile; everything stays in VMEM -----------
    @pl.when(t == pl.num_programs(0) - 1)
    def _head():
        # self.norm: LayerNorm(512) + SELU    (dropout1 = identity at eval)
        x = _selu(_layernorm(pool_ref[...], g0_ref[...], be0_ref[...]))
        # torch.cat((jnt_pos, jnt_goal, action, x), 1) -> one fused K=jpad+C dot
        cat_ref[:, pl.ds(0, jpad)] = jnt_ref[...]
        cat_ref[:, pl.ds(jpad, conv_out4)] = x
        h = jnp.dot(cat_ref[...], w1_ref[...],
                    preferred_element_type=jnp.float32) + b1_ref[...]
        h = _selu(_layernorm(h, g1_ref[...], be1_ref[...]))
        # dropout2 = identity at eval; self.out: Linear(512, 1) as VPU reduce
        out_ref[...] = (jnp.sum(h * wo_ref[...], axis=-1, keepdims=True)
                        + bo_ref[...])


# ------------------------------ VMEM budgeting --------------------------------
def _vmem_estimate(tile_n, c, b_pad, jpad):
    feats = 2 * tile_n * c * 4                      # double-buffered N tiles
    ids = 2 * tile_n * LANE * 4                     # lane-padded id column
    w1 = (jpad + c) * linear_out * 4                # resident, single copy
    small = 16 * max(c, linear_out) * 4 + b_pad * jpad * 4
    scratch = b_pad * c * 4 + b_pad * (jpad + c) * 4
    return feats + ids + w1 + small + scratch + (2 << 20)


# --------------------------------- wrapper ------------------------------------
def critic_forward(point_feats, point_batch_ids, jnt_pos, jnt_goal, action,
                   params, num_batches, *, tile_n=1024):
    n, c = point_feats.shape
    assert c == conv_out4
    j3 = 3 * jnt_pos.shape[1]
    b = num_batches
    b_pad = _round_up(max(b, SUBLANE), SUBLANE)        # pad M to sublane tile
    jpad = _round_up(j3, LANE)                         # lane-aligned joint slab

    # Generation-aware VMEM budget (v7x: 64 MiB physical, v5e/v6e: 128 MiB).
    try:
        vmem_cap = int(pltpu.get_tpu_info().vmem_capacity_bytes)
    except Exception:
        vmem_cap = 64 << 20
    budget = (vmem_cap * 3) // 4

    tile_n = max(SUBLANE, _round_up(min(tile_n, _round_up(n, SUBLANE)), SUBLANE))
    while tile_n > SUBLANE and _vmem_estimate(tile_n, c, b_pad, jpad) > budget:
        tile_n = max(SUBLANE, _round_up(tile_n // 2, SUBLANE))
    n_pad = _round_up(n, tile_n)
    num_tiles = n_pad // tile_n
    vmem_bytes = int(min(max(_vmem_estimate(tile_n, c, b_pad, jpad), 8 << 20),
                         budget))

    # Pad points; padded rows get id = -1 so they never match any batch.
    feats = jnp.pad(point_feats.astype(jnp.float32), ((0, n_pad - n), (0, 0)))
    ids = jnp.pad(point_batch_ids.astype(jnp.int32), ((0, n_pad - n), (0, 0)),
                  constant_values=-1)

    # Concat + pad joints (torch cat order: pos, goal, action) to [B_pad, jpad].
    jnt = jnp.concatenate([jnt_pos, jnt_goal, action], axis=1).astype(jnp.float32)
    jnt = jnp.pad(jnt, ((0, b_pad - b), (0, jpad - j3)))

    args = (ids, feats, jnt,
            params["ln0_g"], params["ln0_b"],
            params["w1"], params["b1"],
            params["ln1_g"], params["ln1_b"],
            params["w_out"], params["b_out"])

    # Residents: whole array copied into VMEM once, not pipeline double-buffered.
    resident = pl.BlockSpec(memory_space=pltpu.MemorySpace.VMEM)
    in_specs = [
        pl.BlockSpec((tile_n, 1), lambda t: (t, 0)),     # batch ids, N-tiled
        pl.BlockSpec((tile_n, c), lambda t: (t, 0)),     # point feats, N-tiled
    ] + [resident] * (len(args) - 2)

    cost = pl.CostEstimate(
        flops=int(2 * b_pad * (jpad + c) * linear_out
                  + 2 * b_pad * linear_out
                  + 2 * n_pad * c * b_pad),
        transcendentals=int(2 * b_pad * linear_out),
        bytes_accessed=int(4 * (n_pad * (c + 1)
                                + (jpad + c) * linear_out
                                + b_pad * (jpad + 1) + 8 * c + b_pad)),
    )

    out = pl.pallas_call(
        functools.partial(_critic_kernel, b_pad=b_pad, jpad=jpad),
        out_shape=jax.ShapeDtypeStruct((b_pad, 1), jnp.float32),
        grid=(num_tiles,),
        in_specs=in_specs,
        out_specs=pl.BlockSpec((b_pad, 1), lambda t: (0, 0)),
        scratch_shapes=[pltpu.VMEM((b_pad, conv_out4), jnp.float32),   # pool max
                        pltpu.VMEM((b_pad, jpad + conv_out4), jnp.float32)],
        compiler_params=pltpu.CompilerParams(
            # N-tile axis carries the VMEM max-accumulator -> reduction axis.
            dimension_semantics=("arbitrary",),
            vmem_limit_bytes=vmem_bytes),
        cost_estimate=cost,
    )(*args)
    return out[:b]


# ----------------------------- reference (JAX) --------------------------------
def reference_forward(point_feats, point_batch_ids, jnt_pos, jnt_goal, action,
                      params, num_batches, jnt_dim):
    ids = point_batch_ids[:, 0]
    pooled = jnp.stack([
        jnp.max(jnp.where((ids == b)[:, None], point_feats, -jnp.inf), axis=0)
        for b in range(num_batches)
    ])
    x = _selu(_layernorm(pooled, params["ln0_g"], params["ln0_b"]))
    jnt = jnp.concatenate([jnt_pos, jnt_goal, action], axis=1)
    j3 = 3 * jnt_dim
    jpad = _round_up(j3, LANE)
    w1_jnt = params["w1"][:j3]
    w1_x = params["w1"][jpad:]
    h = jnt @ w1_jnt + x @ w1_x + params["b1"]
    h = _selu(_layernorm(h, params["ln1_g"], params["ln1_b"]))
    return h @ params["w_out"].T + params["b_out"]


# ------------------------------- param init -----------------------------------
def init_params(key, jnt_dim):
    j3 = 3 * jnt_dim
    jpad = _round_up(j3, LANE)
    fan_in1 = conv_out4 + j3
    lim1 = 1.0 / np.sqrt(fan_in1)
    limo = 1.0 / np.sqrt(linear_out)
    ks = jax.random.split(key, 5)
    # Fused Linear(conv_out4 + 3*jnt_dim, linear_out) weight:
    #   rows [0:3J]      = joint part (cat order: jnt_pos, jnt_goal, action)
    #   rows [3J:jpad]   = zero padding
    #   rows [jpad:+512] = feature part
    # (If importing torch weights: torch stores W as [out, in]; use W.T and
    #  slice its rows 0:3J / 3J: into this layout.)
    w1 = jnp.zeros((jpad + conv_out4, linear_out), jnp.float32)
    w1 = w1.at[:j3].set(
        jax.random.uniform(ks[0], (j3, linear_out), jnp.float32, -lim1, lim1))
    w1 = w1.at[jpad:].set(
        jax.random.uniform(ks[1], (conv_out4, linear_out), jnp.float32,
                           -lim1, lim1))
    return {
        "ln0_g": jnp.ones((1, conv_out4), jnp.float32),
        "ln0_b": jnp.zeros((1, conv_out4), jnp.float32),
        "w1": w1,
        "b1": jax.random.uniform(ks[2], (1, linear_out), jnp.float32,
                                 -lim1, lim1),
        "ln1_g": jnp.ones((1, linear_out), jnp.float32),
        "ln1_b": jnp.zeros((1, linear_out), jnp.float32),
        # Linear(512, 1) weight stored as a [1, 512] row (VPU mul + reduce).
        "w_out": jax.random.uniform(ks[3], (1, linear_out), jnp.float32,
                                    -limo, limo),
        "b_out": jax.random.uniform(ks[4], (1, 1), jnp.float32, -limo, limo),
    }


# ----------------------------------- main --------------------------------------
if __name__ == "__main__":
    B = 4            # batch size
    JNT_DIM = 6      # per-joint vector length
    N_POINTS = 384   # total sparse points across the batch (post conv stack)
    TILE_N = 128     # small tile here to exercise the multi-tile running max
                     # (production default is tile_n=1024)

    key = jax.random.PRNGKey(0)
    k_feat, k_pos, k_goal, k_act, k_par = jax.random.split(key, 5)

    # Per-point features that would come out of the Minkowski conv stack,
    # right before MinkowskiGlobalMaxPooling (see TODO above).
    point_feats = jax.random.normal(k_feat, (N_POINTS, conv_out4), jnp.float32)
    # Batch index per point (each batch guaranteed non-empty).
    point_batch_ids = (jnp.arange(N_POINTS, dtype=jnp.int32) % B)[:, None]

    jnt_pos = jax.random.normal(k_pos, (B, JNT_DIM), jnp.float32)
    jnt_goal = jax.random.normal(k_goal, (B, JNT_DIM), jnp.float32)
    action = jax.random.normal(k_act, (B, JNT_DIM), jnp.float32)

    params = init_params(k_par, JNT_DIM)

    q = critic_forward(point_feats, point_batch_ids, jnt_pos, jnt_goal, action,
                       params, B, tile_n=TILE_N)
    q = jax.block_until_ready(q)

    q_ref = reference_forward(point_feats, point_batch_ids, jnt_pos, jnt_goal,
                              action, params, B, JNT_DIM)
    assert q.shape == (B, 1)
    np.testing.assert_allclose(np.asarray(q), np.asarray(q_ref),
                               rtol=1e-4, atol=1e-4)
    print("KERNEL_OK")
</pallas_src>

<mosaic_0001>
module attributes {stable_mosaic.version = 11 : i64} {
  func.func @_critic_kernel(%arg0: i32, %arg1: memref<128x1xi32, #tpu.memory_space<vmem>>, %arg2: memref<128x512xf32, #tpu.memory_space<vmem>>, %arg3: memref<8x128xf32, #tpu.memory_space<vmem>>, %arg4: memref<1x512xf32, #tpu.memory_space<vmem>>, %arg5: memref<1x512xf32, #tpu.memory_space<vmem>>, %arg6: memref<640x512xf32, #tpu.memory_space<vmem>>, %arg7: memref<1x512xf32, #tpu.memory_space<vmem>>, %arg8: memref<1x512xf32, #tpu.memory_space<vmem>>, %arg9: memref<1x512xf32, #tpu.memory_space<vmem>>, %arg10: memref<1x512xf32, #tpu.memory_space<vmem>>, %arg11: memref<1x1xf32, #tpu.memory_space<vmem>>, %arg12: memref<8x1xf32, #tpu.memory_space<vmem>>, %arg13: memref<8x512xf32, #tpu.memory_space<vmem>>, %arg14: memref<8x640xf32, #tpu.memory_space<vmem>>) attributes {dimension_semantics = [#tpu.dimension_semantics<arbitrary>], iteration_bounds = array<i64: 3>, scalar_prefetch = 0 : i64, scratch_operands = 2 : i64, tpu.core_type = #tpu.core_type<tc>, window_params = [{transform_indices = @transform_0, window_bounds = array<i64: 128, 1>}, {transform_indices = @transform_1, window_bounds = array<i64: 128, 512>}, {pipeline_mode = #tpu.pipeline_mode<synchronous>, transform_indices = @transform_2, window_bounds = array<i64: 8, 128>}, {pipeline_mode = #tpu.pipeline_mode<synchronous>, transform_indices = @transform_3, window_bounds = array<i64: 1, 512>}, {pipeline_mode = #tpu.pipeline_mode<synchronous>, transform_indices = @transform_4, window_bounds = array<i64: 1, 512>}, {pipeline_mode = #tpu.pipeline_mode<synchronous>, transform_indices = @transform_5, window_bounds = array<i64: 640, 512>}, {pipeline_mode = #tpu.pipeline_mode<synchronous>, transform_indices = @transform_6, window_bounds = array<i64: 1, 512>}, {pipeline_mode = #tpu.pipeline_mode<synchronous>, transform_indices = @transform_7, window_bounds = array<i64: 1, 512>}, {pipeline_mode = #tpu.pipeline_mode<synchronous>, transform_indices = @transform_8, window_bounds = array<i64: 1, 512>}, {pipeline_mode = #tpu.pipeline_mode<synchronous>, transform_indices = @transform_9, window_bounds = array<i64: 1, 512>}, {pipeline_mode = #tpu.pipeline_mode<synchronous>, transform_indices = @transform_10, window_bounds = array<i64: 1, 1>}, {pipeline_mode = #tpu.pipeline_mode<synchronous>, transform_indices = @transform_11, window_bounds = array<i64: 8, 1>}]} {
    %c0_i32 = arith.constant 0 : i32
    %0 = arith.cmpi eq, %arg0, %c0_i32 : i32
    %1 = arith.extui %0 : i1 to i32
    %c0_i32_0 = arith.constant 0 : i32
    %2 = arith.cmpi ne, %1, %c0_i32_0 : i32
    scf.if %2 {
      %cst_89 = arith.constant -1.000000e+30 : f32
      %235 = vector.broadcast %cst_89 : f32 to vector<8x512xf32>
      %c0_90 = arith.constant 0 : index
      %c0_91 = arith.constant 0 : index
      %236 = vector.load %arg13[%c0_90, %c0_91] : memref<8x512xf32, #tpu.memory_space<vmem>>, vector<8x512xf32>
      tpu.vector_store %arg13[%c0_90, %c0_91], %235 {strides = array<i32>} : memref<8x512xf32, #tpu.memory_space<vmem>>, vector<8x512xf32>,
    } else {
    }
    %c0 = arith.constant 0 : index
    %c0_1 = arith.constant 0 : index
    %3 = vector.load %arg1[%c0, %c0_1] : memref<128x1xi32, #tpu.memory_space<vmem>>, vector<128x1xi32>
    %c0_i32_2 = arith.constant 0 : i32
    %4 = vector.broadcast %c0_i32_2 : i32 to vector<128x1xi32>
    %5 = arith.cmpi eq, %3, %4 : vector<128x1xi32>
    %c1_i32 = arith.constant 1 : i32
    %6 = vector.broadcast %c1_i32 : i32 to vector<128x1xi32>
    %7 = arith.cmpi eq, %3, %6 : vector<128x1xi32>
    %c2_i32 = arith.constant 2 : i32
    %8 = vector.broadcast %c2_i32 : i32 to vector<128x1xi32>
    %9 = arith.cmpi eq, %3, %8 : vector<128x1xi32>
    %c3_i32 = arith.constant 3 : i32
    %10 = vector.broadcast %c3_i32 : i32 to vector<128x1xi32>
    %11 = arith.cmpi eq, %3, %10 : vector<128x1xi32>
    %c4_i32 = arith.constant 4 : i32
    %12 = vector.broadcast %c4_i32 : i32 to vector<128x1xi32>
    %13 = arith.cmpi eq, %3, %12 : vector<128x1xi32>
    %c5_i32 = arith.constant 5 : i32
    %14 = vector.broadcast %c5_i32 : i32 to vector<128x1xi32>
    %15 = arith.cmpi eq, %3, %14 : vector<128x1xi32>
    %c6_i32 = arith.constant 6 : i32
    %16 = vector.broadcast %c6_i32 : i32 to vector<128x1xi32>
    %17 = arith.cmpi eq, %3, %16 : vector<128x1xi32>
    %c7_i32 = arith.constant 7 : i32
    %18 = vector.broadcast %c7_i32 : i32 to vector<128x1xi32>
    %19 = arith.cmpi eq, %3, %18 : vector<128x1xi32>
    %c0_3 = arith.constant 0 : index
    %c0_4 = arith.constant 0 : index
    %20 = vector.load %arg2[%c0_3, %c0_4] : memref<128x512xf32, #tpu.memory_space<vmem>>, vector<128x128xf32>
    %cst = arith.constant -1.000000e+30 : f32
    %21 = vector.shape_cast %5 : vector<128x1xi1> to vector<128x1xi1>
    %22 = vector.broadcast %21 : vector<128x1xi1> to vector<128x128xi1>
    %23 = vector.broadcast %cst : f32 to vector<128x128xf32>
    %24 = arith.select %22, %20, %23 : vector<128x128xi1>, vector<128x128xf32>
    %cst_5 = arith.constant dense<0xFF800000> : vector<128xf32>
    %25 = vector.multi_reduction <maximumf>, %24, %cst_5 [0] : vector<128x128xf32> to vector<128xf32>
    %26 = vector.shape_cast %25 : vector<128xf32> to vector<1x128xf32>
    %cst_6 = arith.constant -1.000000e+30 : f32
    %27 = vector.shape_cast %7 : vector<128x1xi1> to vector<128x1xi1>
    %28 = vector.broadcast %27 : vector<128x1xi1> to vector<128x128xi1>
    %29 = vector.broadcast %cst_6 : f32 to vector<128x128xf32>
    %30 = arith.select %28, %20, %29 : vector<128x128xi1>, vector<128x128xf32>
    %cst_7 = arith.constant dense<0xFF800000> : vector<128xf32>
    %31 = vector.multi_reduction <maximumf>, %30, %cst_7 [0] : vector<128x128xf32> to vector<128xf32>
    %32 = vector.shape_cast %31 : vector<128xf32> to vector<1x128xf32>
    %cst_8 = arith.constant -1.000000e+30 : f32
    %33 = vector.shape_cast %9 : vector<128x1xi1> to vector<128x1xi1>
    %34 = vector.broadcast %33 : vector<128x1xi1> to vector<128x128xi1>
    %35 = vector.broadcast %cst_8 : f32 to vector<128x128xf32>
    %36 = arith.select %34, %20, %35 : vector<128x128xi1>, vector<128x128xf32>
    %cst_9 = arith.constant dense<0xFF800000> : vector<128xf32>
    %37 = vector.multi_reduction <maximumf>, %36, %cst_9 [0] : vector<128x128xf32> to vector<128xf32>
    %38 = vector.shape_cast %37 : vector<128xf32> to vector<1x128xf32>
    %cst_10 = arith.constant -1.000000e+30 : f32
    %39 = vector.shape_cast %11 : vector<128x1xi1> to vector<128x1xi1>
    %40 = vector.broadcast %39 : vector<128x1xi1> to vector<128x128xi1>
    %41 = vector.broadcast %cst_10 : f32 to vector<128x128xf32>
    %42 = arith.select %40, %20, %41 : vector<128x128xi1>, vector<128x128xf32>
    %cst_11 = arith.constant dense<0xFF800000> : vector<128xf32>
    %43 = vector.multi_reduction <maximumf>, %42, %cst_11 [0] : vector<128x128xf32> to vector<128xf32>
    %44 = vector.shape_cast %43 : vector<128xf32> to vector<1x128xf32>
    %cst_12 = arith.constant -1.000000e+30 : f32
    %45 = vector.shape_cast %13 : vector<128x1xi1> to vector<128x1xi1>
    %46 = vector.broadcast %45 : vector<128x1xi1> to vector<128x128xi1>
    %47 = vector.broadcast %cst_12 : f32 to vector<128x128xf32>
    %48 = arith.select %46, %20, %47 : vector<128x128xi1>, vector<128x128xf32>
    %cst_13 = arith.constant dense<0xFF800000> : vector<128xf32>
    %49 = vector.multi_reduction <maximumf>, %48, %cst_13 [0] : vector<128x128xf32> to vector<128xf32>
    %50 = vector.shape_cast %49 : vector<128xf32> to vector<1x128xf32>
    %cst_14 = arith.constant -1.000000e+30 : f32
    %51 = vector.shape_cast %15 : vector<128x1xi1> to vector<128x1xi1>
    %52 = vector.broadcast %51 : vector<128x1xi1> to vector<128x128xi1>
    %53 = vector.broadcast %cst_14 : f32 to vector<128x128xf32>
    %54 = arith.select %52, %20, %53 : vector<128x128xi1>, vector<128x128xf32>
    %cst_15 = arith.constant dense<0xFF800000> : vector<128xf32>
    %55 = vector.multi_reduction <maximumf>, %54, %cst_15 [0] : vector<128x128xf32> to vector<128xf32>
    %56 = vector.shape_cast %55 : vector<128xf32> to vector<1x128xf32>
    %cst_16 = arith.constant -1.000000e+30 : f32
    %57 = vector.shape_cast %17 : vector<128x1xi1> to vector<128x1xi1>
    %58 = vector.broadcast %57 : vector<128x1xi1> to vector<128x128xi1>
    %59 = vector.broadcast %cst_16 : f32 to vector<128x128xf32>
    %60 = arith.select %58, %20, %59 : vector<128x128xi1>, vector<128x128xf32>
    %cst_17 = arith.constant dense<0xFF800000> : vector<128xf32>
    %61 = vector.multi_reduction <maximumf>, %60, %cst_17 [0] : vector<128x128xf32> to vector<128xf32>
    %62 = vector.shape_cast %61 : vector<128xf32> to vector<1x128xf32>
    %cst_18 = arith.constant -1.000000e+30 : f32
    %63 = vector.shape_cast %19 : vector<128x1xi1> to vector<128x1xi1>
    %64 = vector.broadcast %63 : vector<128x1xi1> to vector<128x128xi1>
    %65 = vector.broadcast %cst_18 : f32 to vector<128x128xf32>
    %66 = arith.select %64, %20, %65 : vector<128x128xi1>, vector<128x128xf32>
    %cst_19 = arith.constant dense<0xFF800000> : vector<128xf32>
    %67 = vector.multi_reduction <maximumf>, %66, %cst_19 [0] : vector<128x128xf32> to vector<128xf32>
    %68 = vector.shape_cast %67 : vector<128xf32> to vector<1x128xf32>
    %69 = tpu.concatenate %26, %32, %38, %44, %50, %56, %62, %68 in 0 : vector<1x128xf32>, vector<1x128xf32>, vector<1x128xf32>, vector<1x128xf32>, vector<1x128xf32>, vector<1x128xf32>, vector<1x128xf32>, vector<1x128xf32> -> vector<8x128xf32>
    %c0_20 = arith.constant 0 : index
    %c0_21 = arith.constant 0 : index
    %70 = vector.load %arg13[%c0_20, %c0_21] : memref<8x512xf32, #tpu.memory_space<vmem>>, vector<8x128xf32>
    %71 = arith.maximumf %70, %69 : vector<8x128xf32>
    %c0_22 = arith.constant 0 : index
    %c0_23 = arith.constant 0 : index
    %72 = vector.load %arg13[%c0_22, %c0_23] : memref<8x512xf32, #tpu.memory_space<vmem>>, vector<8x128xf32>
    tpu.vector_store %arg13[%c0_22, %c0_23], %71 {strides = array<i32>} : memref<8x512xf32, #tpu.memory_space<vmem>>, vector<8x128xf32>,
    %c0_24 = arith.constant 0 : index
    %c128 = arith.constant 128 : index
    %73 = vector.load %arg2[%c0_24, %c128] : memref<128x512xf32, #tpu.memory_space<vmem>>, vector<128x128xf32>
    %cst_25 = arith.constant -1.000000e+30 : f32
    %74 = vector.shape_cast %5 : vector<128x1xi1> to vector<128x1xi1>
    %75 = vector.broadcast %74 : vector<128x1xi1> to vector<128x128xi1>
    %76 = vector.broadcast %cst_25 : f32 to vector<128x128xf32>
    %77 = arith.select %75, %73, %76 : vector<128x128xi1>, vector<128x128xf32>
    %cst_26 = arith.constant dense<0xFF800000> : vector<128xf32>
    %78 = vector.multi_reduction <maximumf>, %77, %cst_26 [0] : vector<128x128xf32> to vector<128xf32>
    %79 = vector.shape_cast %78 : vector<128xf32> to vector<1x128xf32>
    %cst_27 = arith.constant -1.000000e+30 : f32
    %80 = vector.shape_cast %7 : vector<128x1xi1> to vector<128x1xi1>
    %81 = vector.broadcast %80 : vector<128x1xi1> to vector<128x128xi1>
    %82 = vector.broadcast %cst_27 : f32 to vector<128x128xf32>
    %83 = arith.select %81, %73, %82 : vector<128x128xi1>, vector<128x128xf32>
    %cst_28 = arith.constant dense<0xFF800000> : vector<128xf32>
    %84 = vector.multi_reduction <maximumf>, %83, %cst_28 [0] : vector<128x128xf32> to vector<128xf32>
    %85 = vector.shape_cast %84 : vector<128xf32> to vector<1x128xf32>
    %cst_29 = arith.constant -1.000000e+30 : f32
    %86 = vector.shape_cast %9 : vector<128x1xi1> to vector<128x1xi1>
    %87 = vector.broadcast %86 : vector<128x1xi1> to vector<128x128xi1>
    %88 = vector.broadcast %cst_29 : f32 to vector<128x128xf32>
    %89 = arith.select %87, %73, %88 : vector<128x128xi1>, vector<128x128xf32>
    %cst_30 = arith.constant dense<0xFF800000> : vector<128xf32>
    %90 = vector.multi_reduction <maximumf>, %89, %cst_30 [0] : vector<128x128xf32> to vector<128xf32>
    %91 = vector.shape_cast %90 : vector<128xf32> to vector<1x128xf32>
    %cst_31 = arith.constant -1.000000e+30 : f32
    %92 = vector.shape_cast %11 : vector<128x1xi1> to vector<128x1xi1>
    %93 = vector.broadcast %92 : vector<128x1xi1> to vector<128x128xi1>
    %94 = vector.broadcast %cst_31 : f32 to vector<128x128xf32>
    %95 = arith.select %93, %73, %94 : vector<128x128xi1>, vector<128x128xf32>
    %cst_32 = arith.constant dense<0xFF800000> : vector<128xf32>
    %96 = vector.multi_reduction <maximumf>, %95, %cst_32 [0] : vector<128x128xf32> to vector<128xf32>
    %97 = vector.shape_cast %96 : vector<128xf32> to vector<1x128xf32>
    %cst_33 = arith.constant -1.000000e+30 : f32
    %98 = vector.shape_cast %13 : vector<128x1xi1> to vector<128x1xi1>
    %99 = vector.broadcast %98 : vector<128x1xi1> to vector<128x128xi1>
    %100 = vector.broadcast %cst_33 : f32 to vector<128x128xf32>
    %101 = arith.select %99, %73, %100 : vector<128x128xi1>, vector<128x128xf32>
    %cst_34 = arith.constant dense<0xFF800000> : vector<128xf32>
    %102 = vector.multi_reduction <maximumf>, %101, %cst_34 [0] : vector<128x128xf32> to vector<128xf32>
    %103 = vector.shape_cast %102 : vector<128xf32> to vector<1x128xf32>
    %cst_35 = arith.constant -1.000000e+30 : f32
    %104 = vector.shape_cast %15 : vector<128x1xi1> to vector<128x1xi1>
    %105 = vector.broadcast %104 : vector<128x1xi1> to vector<128x128xi1>
    %106 = vector.broadcast %cst_35 : f32 to vector<128x128xf32>
    %107 = arith.select %105, %73, %106 : vector<128x128xi1>, vector<128x128xf32>
    %cst_36 = arith.constant dense<0xFF800000> : vector<128xf32>
    %108 = vector.multi_reduction <maximumf>, %107, %cst_36 [0] : vector<128x128xf32> to vector<128xf32>
    %109 = vector.shape_cast %108 : vector<128xf32> to vector<1x128xf32>
    %cst_37 = arith.constant -1.000000e+30 : f32
    %110 = vector.shape_cast %17 : vector<128x1xi1> to vector<128x1xi1>
    %111 = vector.broadcast %110 : vector<128x1xi1> to vector<128x128xi1>
    %112 = vector.broadcast %cst_37 : f32 to vector<128x128xf32>
    %113 = arith.select %111, %73, %112 : vector<128x128xi1>, vector<128x128xf32>
    %cst_38 = arith.constant dense<0xFF800000> : vector<128xf32>
    %114 = vector.multi_reduction <maximumf>, %113, %cst_38 [0] : vector<128x128xf32> to vector<128xf32>
    %115 = vector.shape_cast %114 : vector<128xf32> to vector<1x128xf32>
    %cst_39 = arith.constant -1.000000e+30 : f32
    %116 = vector.shape_cast %19 : vector<128x1xi1> to vector<128x1xi1>
    %117 = vector.broadcast %116 : vector<128x1xi1> to vector<128x128xi1>
    %118 = vector.broadcast %cst_39 : f32 to vector<128x128xf32>
    %119 = arith.select %117, %73, %118 : vector<128x128xi1>, vector<128x128xf32>
    %cst_40 = arith.constant dense<0xFF800000> : vector<128xf32>
    %120 = vector.multi_reduction <maximumf>, %119, %cst_40 [0] : vector<128x128xf32> to vector<128xf32>
    %121 = vector.shape_cast %120 : vector<128xf32> to vector<1x128xf32>
    %122 = tpu.concatenate %79, %85, %91, %97, %103, %109, %115, %121 in 0 : vector<1x128xf32>, vector<1x128xf32>, vector<1x128xf32>, vector<1x128xf32>, vector<1x128xf32>, vector<1x128xf32>, vector<1x128xf32>, vector<1x128xf32> -> vector<8x128xf32>
    %c0_41 = arith.constant 0 : index
    %c128_42 = arith.constant 128 : index
    %123 = vector.load %arg13[%c0_41, %c128_42] : memref<8x512xf32, #tpu.memory_space<vmem>>, vector<8x128xf32>
    %124 = arith.maximumf %123, %122 : vector<8x128xf32>
    %c0_43 = arith.constant 0 : index
    %c128_44 = arith.constant 128 : index
    %125 = vector.load %arg13[%c0_43, %c128_44] : memref<8x512xf32, #tpu.memory_space<vmem>>, vector<8x128xf32>
    tpu.vector_store %arg13[%c0_43, %c128_44], %124 {strides = array<i32>} : memref<8x512xf32, #tpu.memory_space<vmem>>, vector<8x128xf32>,
    %c0_45 = arith.constant 0 : index
    %c256 = arith.constant 256 : index
    %126 = vector.load %arg2[%c0_45, %c256] : memref<128x512xf32, #tpu.memory_space<vmem>>, vector<128x128xf32>
    %cst_46 = arith.constant -1.000000e+30 : f32
    %127 = vector.shape_cast %5 : vector<128x1xi1> to vector<128x1xi1>
    %128 = vector.broadcast %127 : vector<128x1xi1> to vector<128x128xi1>
    %129 = vector.broadcast %cst_46 : f32 to vector<128x128xf32>
    %130 = arith.select %128, %126, %129 : vector<128x128xi1>, vector<128x128xf32>
    %cst_47 = arith.constant dense<0xFF800000> : vector<128xf32>
    %131 = vector.multi_reduction <maximumf>, %130, %cst_47 [0] : vector<128x128xf32> to vector<128xf32>
    %132 = vector.shape_cast %131 : vector<128xf32> to vector<1x128xf32>
    %cst_48 = arith.constant -1.000000e+30 : f32
    %133 = vector.shape_cast %7 : vector<128x1xi1> to vector<128x1xi1>
    %134 = vector.broadcast %133 : vector<128x1xi1> to vector<128x128xi1>
    %135 = vector.broadcast %cst_48 : f32 to vector<128x128xf32>
    %136 = arith.select %134, %126, %135 : vector<128x128xi1>, vector<128x128xf32>
    %cst_49 = arith.constant dense<0xFF800000> : vector<128xf32>
    %137 = vector.multi_reduction <maximumf>, %136, %cst_49 [0] : vector<128x128xf32> to vector<128xf32>
    %138 = vector.shape_cast %137 : vector<128xf32> to vector<1x128xf32>
    %cst_50 = arith.constant -1.000000e+30 : f32
    %139 = vector.shape_cast %9 : vector<128x1xi1> to vector<128x1xi1>
    %140 = vector.broadcast %139 : vector<128x1xi1> to vector<128x128xi1>
    %141 = vector.broadcast %cst_50 : f32 to vector<128x128xf32>
    %142 = arith.select %140, %126, %141 : vector<128x128xi1>, vector<128x128xf32>
    %cst_51 = arith.constant dense<0xFF800000> : vector<128xf32>
    %143 = vector.multi_reduction <maximumf>, %142, %cst_51 [0] : vector<128x128xf32> to vector<128xf32>
    %144 = vector.shape_cast %143 : vector<128xf32> to vector<1x128xf32>
    %cst_52 = arith.constant -1.000000e+30 : f32
    %145 = vector.shape_cast %11 : vector<128x1xi1> to vector<128x1xi1>
    %146 = vector.broadcast %145 : vector<128x1xi1> to vector<128x128xi1>
    %147 = vector.broadcast %cst_52 : f32 to vector<128x128xf32>
    %148 = arith.select %146, %126, %147 : vector<128x128xi1>, vector<128x128xf32>
    %cst_53 = arith.constant dense<0xFF800000> : vector<128xf32>
    %149 = vector.multi_reduction <maximumf>, %148, %cst_53 [0] : vector<128x128xf32> to vector<128xf32>
    %150 = vector.shape_cast %149 : vector<128xf32> to vector<1x128xf32>
    %cst_54 = arith.constant -1.000000e+30 : f32
    %151 = vector.shape_cast %13 : vector<128x1xi1> to vector<128x1xi1>
    %152 = vector.broadcast %151 : vector<128x1xi1> to vector<128x128xi1>
    %153 = vector.broadcast %cst_54 : f32 to vector<128x128xf32>
    %154 = arith.select %152, %126, %153 : vector<128x128xi1>, vector<128x128xf32>
    %cst_55 = arith.constant dense<0xFF800000> : vector<128xf32>
    %155 = vector.multi_reduction <maximumf>, %154, %cst_55 [0] : vector<128x128xf32> to vector<128xf32>
    %156 = vector.shape_cast %155 : vector<128xf32> to vector<1x128xf32>
    %cst_56 = arith.constant -1.000000e+30 : f32
    %157 = vector.shape_cast %15 : vector<128x1xi1> to vector<128x1xi1>
    %158 = vector.broadcast %157 : vector<128x1xi1> to vector<128x128xi1>
    %159 = vector.broadcast %cst_56 : f32 to vector<128x128xf32>
    %160 = arith.select %158, %126, %159 : vector<128x128xi1>, vector<128x128xf32>
    %cst_57 = arith.constant dense<0xFF800000> : vector<128xf32>
    %161 = vector.multi_reduction <maximumf>, %160, %cst_57 [0] : vector<128x128xf32> to vector<128xf32>
    %162 = vector.shape_cast %161 : vector<128xf32> to vector<1x128xf32>
    %cst_58 = arith.constant -1.000000e+30 : f32
    %163 = vector.shape_cast %17 : vector<128x1xi1> to vector<128x1xi1>
    %164 = vector.broadcast %163 : vector<128x1xi1> to vector<128x128xi1>
    %165 = vector.broadcast %cst_58 : f32 to vector<128x128xf32>
    %166 = arith.select %164, %126, %165 : vector<128x128xi1>, vector<128x128xf32>
    %cst_59 = arith.constant dense<0xFF800000> : vector<128xf32>
    %167 = vector.multi_reduction <maximumf>, %166, %cst_59 [0] : vector<128x128xf32> to vector<128xf32>
    %168 = vector.shape_cast %167 : vector<128xf32> to vector<1x128xf32>
    %cst_60 = arith.constant -1.000000e+30 : f32
    %169 = vector.shape_cast %19 : vector<128x1xi1> to vector<128x1xi1>
    %170 = vector.broadcast %169 : vector<128x1xi1> to vector<128x128xi1>
    %171 = vector.broadcast %cst_60 : f32 to vector<128x128xf32>
    %172 = arith.select %170, %126, %171 : vector<128x128xi1>, vector<128x128xf32>
    %cst_61 = arith.constant dense<0xFF800000> : vector<128xf32>
    %173 = vector.multi_reduction <maximumf>, %172, %cst_61 [0] : vector<128x128xf32> to vector<128xf32>
    %174 = vector.shape_cast %173 : vector<128xf32> to vector<1x128xf32>
    %175 = tpu.concatenate %132, %138, %144, %150, %156, %162, %168, %174 in 0 : vector<1x128xf32>, vector<1x128xf32>, vector<1x128xf32>, vector<1x128xf32>, vector<1x128xf32>, vector<1x128xf32>, vector<1x128xf32>, vector<1x128xf32> -> vector<8x128xf32>
    %c0_62 = arith.constant 0 : index
    %c256_63 = arith.constant 256 : index
    %176 = vector.load %arg13[%c0_62, %c256_63] : memref<8x512xf32, #tpu.memory_space<vmem>>, vector<8x128xf32>
    %177 = arith.maximumf %176, %175 : vector<8x128xf32>
    %c0_64 = arith.constant 0 : index
    %c256_65 = arith.constant 256 : index
    %178 = vector.load %arg13[%c0_64, %c256_65] : memref<8x512xf32, #tpu.memory_space<vmem>>, vector<8x128xf32>
    tpu.vector_store %arg13[%c0_64, %c256_65], %177 {strides = array<i32>} : memref<8x512xf32, #tpu.memory_space<vmem>>, vector<8x128xf32>,
    %c0_66 = arith.constant 0 : index
    %c384 = arith.constant 384 : index
    %179 = vector.load %arg2[%c0_66, %c384] : memref<128x512xf32, #tpu.memory_space<vmem>>, vector<128x128xf32>
    %cst_67 = arith.constant -1.000000e+30 : f32
    %180 = vector.shape_cast %5 : vector<128x1xi1> to vector<128x1xi1>
    %181 = vector.broadcast %180 : vector<128x1xi1> to vector<128x128xi1>
    %182 = vector.broadcast %cst_67 : f32 to vector<128x128xf32>
    %183 = arith.select %181, %179, %182 : vector<128x128xi1>, vector<128x128xf32>
    %cst_68 = arith.constant dense<0xFF800000> : vector<128xf32>
    %184 = vector.multi_reduction <maximumf>, %183, %cst_68 [0] : vector<128x128xf32> to vector<128xf32>
    %185 = vector.shape_cast %184 : vector<128xf32> to vector<1x128xf32>
    %cst_69 = arith.constant -1.000000e+30 : f32
    %186 = vector.shape_cast %7 : vector<128x1xi1> to vector<128x1xi1>
    %187 = vector.broadcast %186 : vector<128x1xi1> to vector<128x128xi1>
    %188 = vector.broadcast %cst_69 : f32 to vector<128x128xf32>
    %189 = arith.select %187, %179, %188 : vector<128x128xi1>, vector<128x128xf32>
    %cst_70 = arith.constant dense<0xFF800000> : vector<128xf32>
    %190 = vector.multi_reduction <maximumf>, %189, %cst_70 [0] : vector<128x128xf32> to vector<128xf32>
    %191 = vector.shape_cast %190 : vector<128xf32> to vector<1x128xf32>
    %cst_71 = arith.constant -1.000000e+30 : f32
    %192 = vector.shape_cast %9 : vector<128x1xi1> to vector<128x1xi1>
    %193 = vector.broadcast %192 : vector<128x1xi1> to vector<128x128xi1>
    %194 = vector.broadcast %cst_71 : f32 to vector<128x128xf32>
    %195 = arith.select %193, %179, %194 : vector<128x128xi1>, vector<128x128xf32>
    %cst_72 = arith.constant dense<0xFF800000> : vector<128xf32>
    %196 = vector.multi_reduction <maximumf>, %195, %cst_72 [0] : vector<128x128xf32> to vector<128xf32>
    %197 = vector.shape_cast %196 : vector<128xf32> to vector<1x128xf32>
    %cst_73 = arith.constant -1.000000e+30 : f32
    %198 = vector.shape_cast %11 : vector<128x1xi1> to vector<128x1xi1>
    %199 = vector.broadcast %198 : vector<128x1xi1> to vector<128x128xi1>
    %200 = vector.broadcast %cst_73 : f32 to vector<128x128xf32>
    %201 = arith.select %199, %179, %200 : vector<128x128xi1>, vector<128x128xf32>
    %cst_74 = arith.constant dense<0xFF800000> : vector<128xf32>
    %202 = vector.multi_reduction <maximumf>, %201, %cst_74 [0] : vector<128x128xf32> to vector<128xf32>
    %203 = vector.shape_cast %202 : vector<128xf32> to vector<1x128xf32>
    %cst_75 = arith.constant -1.000000e+30 : f32
    %204 = vector.shape_cast %13 : vector<128x1xi1> to vector<128x1xi1>
    %205 = vector.broadcast %204 : vector<128x1xi1> to vector<128x128xi1>
    %206 = vector.broadcast %cst_75 : f32 to vector<128x128xf32>
    %207 = arith.select %205, %179, %206 : vector<128x128xi1>, vector<128x128xf32>
    %cst_76 = arith.constant dense<0xFF800000> : vector<128xf32>
    %208 = vector.multi_reduction <maximumf>, %207, %cst_76 [0] : vector<128x128xf32> to vector<128xf32>
    %209 = vector.shape_cast %208 : vector<128xf32> to vector<1x128xf32>
    %cst_77 = arith.constant -1.000000e+30 : f32
    %210 = vector.shape_cast %15 : vector<128x1xi1> to vector<128x1xi1>
    %211 = vector.broadcast %210 : vector<128x1xi1> to vector<128x128xi1>
    %212 = vector.broadcast %cst_77 : f32 to vector<128x128xf32>
    %213 = arith.select %211, %179, %212 : vector<128x128xi1>, vector<128x128xf32>
    %cst_78 = arith.constant dense<0xFF800000> : vector<128xf32>
    %214 = vector.multi_reduction <maximumf>, %213, %cst_78 [0] : vector<128x128xf32> to vector<128xf32>
    %215 = vector.shape_cast %214 : vector<128xf32> to vector<1x128xf32>
    %cst_79 = arith.constant -1.000000e+30 : f32
    %216 = vector.shape_cast %17 : vector<128x1xi1> to vector<128x1xi1>
    %217 = vector.broadcast %216 : vector<128x1xi1> to vector<128x128xi1>
    %218 = vector.broadcast %cst_79 : f32 to vector<128x128xf32>
    %219 = arith.select %217, %179, %218 : vector<128x128xi1>, vector<128x128xf32>
    %cst_80 = arith.constant dense<0xFF800000> : vector<128xf32>
    %220 = vector.multi_reduction <maximumf>, %219, %cst_80 [0] : vector<128x128xf32> to vector<128xf32>
    %221 = vector.shape_cast %220 : vector<128xf32> to vector<1x128xf32>
    %cst_81 = arith.constant -1.000000e+30 : f32
    %222 = vector.shape_cast %19 : vector<128x1xi1> to vector<128x1xi1>
    %223 = vector.broadcast %222 : vector<128x1xi1> to vector<128x128xi1>
    %224 = vector.broadcast %cst_81 : f32 to vector<128x128xf32>
    %225 = arith.select %223, %179, %224 : vector<128x128xi1>, vector<128x128xf32>
    %cst_82 = arith.constant dense<0xFF800000> : vector<128xf32>
    %226 = vector.multi_reduction <maximumf>, %225, %cst_82 [0] : vector<128x128xf32> to vector<128xf32>
    %227 = vector.shape_cast %226 : vector<128xf32> to vector<1x128xf32>
    %228 = tpu.concatenate %185, %191, %197, %203, %209, %215, %221, %227 in 0 : vector<1x128xf32>, vector<1x128xf32>, vector<1x128xf32>, vector<1x128xf32>, vector<1x128xf32>, vector<1x128xf32>, vector<1x128xf32>, vector<1x128xf32> -> vector<8x128xf32>
    %c0_83 = arith.constant 0 : index
    %c384_84 = arith.constant 384 : index
    %229 = vector.load %arg13[%c0_83, %c384_84] : memref<8x512xf32, #tpu.memory_space<vmem>>, vector<8x128xf32>
    %230 = arith.maximumf %229, %228 : vector<8x128xf32>
    %c0_85 = arith.constant 0 : index
    %c384_86 = arith.constant 384 : index
    %231 = vector.load %arg13[%c0_85, %c384_86] : memref<8x512xf32, #tpu.memory_space<vmem>>, vector<8x128xf32>
    tpu.vector_store %arg13[%c0_85, %c384_86], %230 {strides = array<i32>} : memref<8x512xf32, #tpu.memory_space<vmem>>, vector<8x128xf32>,
    %c2_i32_87 = arith.constant 2 : i32
    %232 = arith.cmpi eq, %arg0, %c2_i32_87 : i32
    %233 = arith.extui %232 : i1 to i32
    %c0_i32_88 = arith.constant 0 : i32
    %234 = arith.cmpi ne, %233, %c0_i32_88 : i32
    scf.if %234 {
      %c0_89 = arith.constant 0 : index
      %c0_90 = arith.constant 0 : index
      %235 = vector.load %arg13[%c0_89, %c0_90] : memref<8x512xf32, #tpu.memory_space<vmem>>, vector<8x512xf32>
      %c0_91 = arith.constant 0 : index
      %c0_92 = arith.constant 0 : index
      %236 = vector.load %arg4[%c0_91, %c0_92] : memref<1x512xf32, #tpu.memory_space<vmem>>, vector<1x512xf32>
      %c0_93 = arith.constant 0 : index
      %c0_94 = arith.constant 0 : index
      %237 = vector.load %arg5[%c0_93, %c0_94] : memref<1x512xf32, #tpu.memory_space<vmem>>, vector<1x512xf32>
      %cst_95 = arith.constant dense<0.000000e+00> : vector<8xf32>
      %238 = vector.multi_reduction <add>, %235, %cst_95 [1] : vector<8x512xf32> to vector<8xf32>
      %239 = vector.shape_cast %238 : vector<8xf32> to vector<8x1xf32>
      %cst_96 = arith.constant 5.120000e+02 : f32
      %240 = vector.broadcast %cst_96 : f32 to vector<8x1xf32>
      %241 = arith.divf %239, %240 : vector<8x1xf32>
      %242 = vector.broadcast %241 : vector<8x1xf32> to vector<8x512xf32>
      %243 = arith.subf %235, %242 : vector<8x512xf32>
      %244 = arith.mulf %243, %243 : vector<8x512xf32>
      %cst_97 = arith.constant dense<0.000000e+00> : vector<8xf32>
      %245 = vector.multi_reduction <add>, %244, %cst_97 [1] : vector<8x512xf32> to vector<8xf32>
      %246 = vector.shape_cast %245 : vector<8xf32> to vector<8x1xf32>
      %cst_98 = arith.constant 5.120000e+02 : f32
      %247 = vector.broadcast %cst_98 : f32 to vector<8x1xf32>
      %248 = arith.divf %246, %247 : vector<8x1xf32>
      %249 = vector.broadcast %241 : vector<8x1xf32> to vector<8x512xf32>
      %250 = arith.subf %235, %249 : vector<8x512xf32>
      %cst_99 = arith.constant 9.99999974E-6 : f32
      %251 = vector.broadcast %cst_99 : f32 to vector<8x1xf32>
      %252 = arith.addf %248, %251 : vector<8x1xf32>
      %253 = math.rsqrt %252 : vector<8x1xf32>
      %254 = vector.broadcast %253 : vector<8x1xf32> to vector<8x512xf32>
      %255 = arith.mulf %250, %254 : vector<8x512xf32>
      %256 = vector.broadcast %236 : vector<1x512xf32> to vector<8x512xf32>
      %257 = arith.mulf %255, %256 : vector<8x512xf32>
      %258 = vector.broadcast %237 : vector<1x512xf32> to vector<8x512xf32>
      %259 = arith.addf %257, %258 : vector<8x512xf32>
      %cst_100 = arith.constant 0.000000e+00 : f32
      %260 = vector.broadcast %cst_100 : f32 to vector<8x512xf32>
      %261 = arith.cmpf ogt, %259, %260 : vector<8x512xf32>
      %262 = math.exp %259 : vector<8x512xf32>
      %cst_101 = arith.constant 1.000000e+00 : f32
      %263 = vector.broadcast %cst_101 : f32 to vector<8x512xf32>
      %264 = arith.subf %262, %263 : vector<8x512xf32>
      %cst_102 = arith.constant 1.67326319 : f32
      %265 = vector.broadcast %cst_102 : f32 to vector<8x512xf32>
      %266 = arith.mulf %265, %264 : vector<8x512xf32>
      %267 = arith.select %261, %259, %266 : vector<8x512xi1>, vector<8x512xf32>
      %cst_103 = arith.constant 1.05070102 : f32
      %268 = vector.broadcast %cst_103 : f32 to vector<8x512xf32>
      %269 = arith.mulf %268, %267 : vector<8x512xf32>
      %c0_104 = arith.constant 0 : index
      %c0_105 = arith.constant 0 : index
      %270 = vector.load %arg3[%c0_104, %c0_105] : memref<8x128xf32, #tpu.memory_space<vmem>>, vector<8x128xf32>
      %c0_106 = arith.constant 0 : index
      %c0_107 = arith.constant 0 : index
      %271 = vector.load %arg14[%c0_106, %c0_107] : memref<8x640xf32, #tpu.memory_space<vmem>>, vector<8x128xf32>
      tpu.vector_store %arg14[%c0_106, %c0_107], %270 {strides = array<i32>} : memref<8x640xf32, #tpu.memory_space<vmem>>, vector<8x128xf32>,
      %c0_108 = arith.constant 0 : index
      %c128_109 = arith.constant 128 : index
      %272 = vector.load %arg14[%c0_108, %c128_109] : memref<8x640xf32, #tpu.memory_space<vmem>>, vector<8x512xf32>
      tpu.vector_store %arg14[%c0_108, %c128_109], %269 {strides = array<i32>} : memref<8x640xf32, #tpu.memory_space<vmem>>, vector<8x512xf32>,
      %c0_110 = arith.constant 0 : index
      %c0_111 = arith.constant 0 : index
      %273 = vector.load %arg14[%c0_110, %c0_111] : memref<8x640xf32, #tpu.memory_space<vmem>>, vector<8x640xf32>
      %c0_112 = arith.constant 0 : index
      %c0_113 = arith.constant 0 : index
      %274 = vector.load %arg6[%c0_112, %c0_113] : memref<640x512xf32, #tpu.memory_space<vmem>>, vector<640x512xf32>
      %cst_114 = arith.constant dense<0.000000e+00> : vector<8x512xf32>
      %275 = tpu.matmul %273, %274, %cst_114 {dimension_numbers = #tpu.dot_dimension_numbers<[1], [0], [0], [1], [0, 0, 1, 1], [], []>} : vector<8x640xf32>, vector<640x512xf32>, vector<8x512xf32> -> vector<8x512xf32>
      %c0_115 = arith.constant 0 : index
      %c0_116 = arith.constant 0 : index
      %276 = vector.load %arg7[%c0_115, %c0_116] : memref<1x512xf32, #tpu.memory_space<vmem>>, vector<1x512xf32>
      %277 = vector.broadcast %276 : vector<1x512xf32> to vector<8x512xf32>
      %278 = arith.addf %275, %277 : vector<8x512xf32>
      %c0_117 = arith.constant 0 : index
      %c0_118 = arith.constant 0 : index
      %279 = vector.load %arg8[%c0_117, %c0_118] : memref<1x512xf32, #tpu.memory_space<vmem>>, vector<1x512xf32>
      %c0_119 = arith.constant 0 : index
      %c0_120 = arith.constant 0 : index
      %280 = vector.load %arg9[%c0_119, %c0_120] : memref<1x512xf32, #tpu.memory_space<vmem>>, vector<1x512xf32>
      %cst_121 = arith.constant dense<0.000000e+00> : vector<8xf32>
      %281 = vector.multi_reduction <add>, %278, %cst_121 [1] : vector<8x512xf32> to vector<8xf32>
      %282 = vector.shape_cast %281 : vector<8xf32> to vector<8x1xf32>
      %cst_122 = arith.constant 5.120000e+02 : f32
      %283 = vector.broadcast %cst_122 : f32 to vector<8x1xf32>
      %284 = arith.divf %282, %283 : vector<8x1xf32>
      %285 = vector.broadcast %284 : vector<8x1xf32> to vector<8x512xf32>
      %286 = arith.subf %278, %285 : vector<8x512xf32>
      %287 = arith.mulf %286, %286 : vector<8x512xf32>
      %cst_123 = arith.constant dense<0.000000e+00> : vector<8xf32>
      %288 = vector.multi_reduction <add>, %287, %cst_123 [1] : vector<8x512xf32> to vector<8xf32>
      %289 = vector.shape_cast %288 : vector<8xf32> to vector<8x1xf32>
      %cst_124 = arith.constant 5.120000e+02 : f32
      %290 = vector.broadcast %cst_124 : f32 to vector<8x1xf32>
      %291 = arith.divf %289, %290 : vector<8x1xf32>
      %292 = vector.broadcast %284 : vector<8x1xf32> to vector<8x512xf32>
      %293 = arith.subf %278, %292 : vector<8x512xf32>
      %cst_125 = arith.constant 9.99999974E-6 : f32
      %294 = vector.broadcast %cst_125 : f32 to vector<8x1xf32>
      %295 = arith.addf %291, %294 : vector<8x1xf32>
      %296 = math.rsqrt %295 : vector<8x1xf32>
      %297 = vector.broadcast %296 : vector<8x1xf32> to vector<8x512xf32>
      %298 = arith.mulf %293, %297 : vector<8x512xf32>
      %299 = vector.broadcast %279 : vector<1x512xf32> to vector<8x512xf32>
      %300 = arith.mulf %298, %299 : vector<8x512xf32>
      %301 = vector.broadcast %280 : vector<1x512xf32> to vector<8x512xf32>
      %302 = arith.addf %300, %301 : vector<8x512xf32>
      %cst_126 = arith.constant 0.000000e+00 : f32
      %303 = vector.broadcast %cst_126 : f32 to vector<8x512xf32>
      %304 = arith.cmpf ogt, %302, %303 : vector<8x512xf32>
      %305 = math.exp %302 : vector<8x512xf32>
      %cst_127 = arith.constant 1.000000e+00 : f32
      %306 = vector.broadcast %cst_127 : f32 to vector<8x512xf32>
      %307 = arith.subf %305, %306 : vector<8x512xf32>
      %cst_128 = arith.constant 1.67326319 : f32
      %308 = vector.broadcast %cst_128 : f32 to vector<8x512xf32>
      %309 = arith.mulf %308, %307 : vector<8x512xf32>
      %310 = arith.select %304, %302, %309 : vector<8x512xi1>, vector<8x512xf32>
      %cst_129 = arith.constant 1.05070102 : f32
      %311 = vector.broadcast %cst_129 : f32 to vector<8x512xf32>
      %312 = arith.mulf %311, %310 : vector<8x512xf32>
      %c0_130 = arith.constant 0 : index
      %c0_131 = arith.constant 0 : index
      %313 = vector.load %arg10[%c0_130, %c0_131] : memref<1x512xf32, #tpu.memory_space<vmem>>, vector<1x512xf32>
      %314 = vector.broadcast %313 : vector<1x512xf32> to vector<8x512xf32>
      %315 = arith.mulf %312, %314 : vector<8x512xf32>
      %cst_132 = arith.constant dense<0.000000e+00> : vector<8xf32>
      %316 = vector.multi_reduction <add>, %315, %cst_132 [1] : vector<8x512xf32> to vector<8xf32>
      %317 = vector.shape_cast %316 : vector<8xf32> to vector<8x1xf32>
      %c0_133 = arith.constant 0 : index
      %c0_134 = arith.constant 0 : index
      %318 = vector.load %arg11[%c0_133, %c0_134] : memref<1x1xf32, #tpu.memory_space<vmem>>, vector<1x1xf32>
      %319 = vector.broadcast %318 : vector<1x1xf32> to vector<8x1xf32>
      %320 = arith.addf %317, %319 : vector<8x1xf32>
      %c0_135 = arith.constant 0 : index
      %c0_136 = arith.constant 0 : index
      %321 = vector.load %arg12[%c0_135, %c0_136] : memref<8x1xf32, #tpu.memory_space<vmem>>, vector<8x1xf32>
      tpu.vector_store %arg12[%c0_135, %c0_136], %320 {strides = array<i32>} : memref<8x1xf32, #tpu.memory_space<vmem>>, vector<8x1xf32>,
    } else {
    }
    return
  }
  func.func @transform_0(%arg0: i32) -> (i32, i32) {
    %c0_i32 = arith.constant 0 : i32
    %c0_i32_0 = arith.constant 0 : i32
    return %arg0, %c0_i32 : i32, i32
  }
  func.func @transform_1(%arg0: i32) -> (i32, i32) {
    %c0_i32 = arith.constant 0 : i32
    %c0_i32_0 = arith.constant 0 : i32
    return %arg0, %c0_i32 : i32, i32
  }
  func.func @transform_2(%arg0: i32) -> (i32, i32) {
    %c0_i32 = arith.constant 0 : i32
    %c0_i32_0 = arith.constant 0 : i32
    %c0_i32_1 = arith.constant 0 : i32
    return %c0_i32, %c0_i32_0 : i32, i32
  }
  func.func @transform_3(%arg0: i32) -> (i32, i32) {
    %c0_i32 = arith.constant 0 : i32
    %c0_i32_0 = arith.constant 0 : i32
    %c0_i32_1 = arith.constant 0 : i32
    return %c0_i32, %c0_i32_0 : i32, i32
  }
  func.func @transform_4(%arg0: i32) -> (i32, i32) {
    %c0_i32 = arith.constant 0 : i32
    %c0_i32_0 = arith.constant 0 : i32
    %c0_i32_1 = arith.constant 0 : i32
    return %c0_i32, %c0_i32_0 : i32, i32
  }
  func.func @transform_5(%arg0: i32) -> (i32, i32) {
    %c0_i32 = arith.constant 0 : i32
    %c0_i32_0 = arith.constant 0 : i32
    %c0_i32_1 = arith.constant 0 : i32
    return %c0_i32, %c0_i32_0 : i32, i32
  }
  func.func @transform_6(%arg0: i32) -> (i32, i32) {
    %c0_i32 = arith.constant 0 : i32
    %c0_i32_0 = arith.constant 0 : i32
    %c0_i32_1 = arith.constant 0 : i32
    return %c0_i32, %c0_i32_0 : i32, i32
  }
  func.func @transform_7(%arg0: i32) -> (i32, i32) {
    %c0_i32 = arith.constant 0 : i32
    %c0_i32_0 = arith.constant 0 : i32
    %c0_i32_1 = arith.constant 0 : i32
    return %c0_i32, %c0_i32_0 : i32, i32
  }
  func.func @transform_8(%arg0: i32) -> (i32, i32) {
    %c0_i32 = arith.constant 0 : i32
    %c0_i32_0 = arith.constant 0 : i32
    %c0_i32_1 = arith.constant 0 : i32
    return %c0_i32, %c0_i32_0 : i32, i32
  }
  func.func @transform_9(%arg0: i32) -> (i32, i32) {
    %c0_i32 = arith.constant 0 : i32
    %c0_i32_0 = arith.constant 0 : i32
    %c0_i32_1 = arith.constant 0 : i32
    return %c0_i32, %c0_i32_0 : i32, i32
  }
  func.func @transform_10(%arg0: i32) -> (i32, i32) {
    %c0_i32 = arith.constant 0 : i32
    %c0_i32_0 = arith.constant 0 : i32
    %c0_i32_1 = arith.constant 0 : i32
    return %c0_i32, %c0_i32_0 : i32, i32
  }
  func.func @transform_11(%arg0: i32) -> (i32, i32) {
    %c0_i32 = arith.constant 0 : i32
    %c0_i32_0 = arith.constant 0 : i32
    %c0_i32_1 = arith.constant 0 : i32
    return %c0_i32, %c0_i32_0 : i32, i32
  }
}

</mosaic_0001>

<llo_original>
// kernel: tpu_custom_call.1
$region0: #{tpu_custom_call.1}
  #allocation0 [shape = 'u32[]', space=smem, size = 0x4, offset = 0x4, fixed_abs, tag = 'smem constant byte address 0x4 - core index']
  #allocation1 [shape = 'u32[72,128]{1,0:T(1,128)}', space=vmem, size = 0x9000, scoped, tag = 'internal scratch']
  #allocation2 [shape = 'f32[8,512]{1,0:T(8,128)}', space=vmem, size = 0x4000, scoped, tag = 'scratch operand']
  #allocation3 [shape = 'f32[8,640]{1,0:T(8,128)}', space=vmem, size = 0x5000, scoped, tag = 'scratch operand']
  #allocation4 [shape = 'f32[1,1]{1,0:T(1,128)S(1)}', space=vmem, size = 0x200, scoped, tag = 'scoped memory for tpu_custom_call.1']
  %s0 = inlined_call_operand.vmem [shape: s32[384,1], index: 0, kind: input, shape index: {}]
  %s1 = inlined_call_operand.hbm [shape: f32[384,512], index: 1, kind: input, shape index: {}]
  %s2 = inlined_call_operand.hbm [shape: f32[8,128], index: 2, kind: input, shape index: {}]
  %s3 = inlined_call_operand.hbm [shape: f32[1,512], index: 3, kind: input, shape index: {}]
  %s4 = inlined_call_operand.hbm [shape: f32[1,512], index: 4, kind: input, shape index: {}]
  %s5 = inlined_call_operand.hbm [shape: f32[640,512], index: 5, kind: input, shape index: {}]
  %s6 = inlined_call_operand.hbm [shape: f32[1,512], index: 6, kind: input, shape index: {}]
  %s7 = inlined_call_operand.hbm [shape: f32[1,512], index: 7, kind: input, shape index: {}]
  %s8 = inlined_call_operand.hbm [shape: f32[1,512], index: 8, kind: input, shape index: {}]
  %s9 = inlined_call_operand.hbm [shape: f32[1,512], index: 9, kind: input, shape index: {}]
  %s10 = inlined_call_operand.<no memory space> [shape: f32[1,1], index: 10, kind: input, shape index: {}]
  %s11 = inlined_call_operand.vmem [shape: f32[8,1], index: 11, kind: output, shape index: {}]
  %s12 = sld [smem:[#allocation0]]
  $region121: #{tpu_custom_call.1} parent=0
    _
  %s14 = ssub.s32 1, %s12
  %s15 = scalar_select 0, %s14, %s12
  %v16 = vstv %s10
  %17 = vst [vmem:[#allocation4] sm:$0x1] %v16
  $region1: #{tpu_custom_call.1} parent=0
    #allocation5 [shape = 'u8[524288]{0}', space=vmem, size = 0x80000, scoped, tag = 'input window, operand 1']
    #allocation6 [shape = 's32[2]{0}', space=sflag, size = 0x8, scoped, tag = 'scoped memory for tpu_custom_call.1']
    #allocation7 [shape = 'u8[4096]{0}', space=vmem, size = 0x1000, scoped, tag = 'input window, operand 2, single buffered']
    #allocation8 [shape = 's32[1]{0}', space=sflag, size = 0x4, scoped, tag = 'scoped memory for tpu_custom_call.1']
    #allocation9 [shape = 'u8[2048]{0}', space=vmem, size = 0x800, scoped, tag = 'input window, operand 3, single buffered']
    #allocation10 [shape = 'u8[2048]{0}', space=vmem, size = 0x800, scoped, tag = 'input window, operand 4, single buffered']
    #allocation11 [shape = 's32[1]{0}', space=sflag, size = 0x4, scoped, tag = 'scoped memory for tpu_custom_call.1']
    #allocation12 [shape = 'u8[1310720]{0}', space=vmem, size = 0x140000, scoped, tag = 'input window, operand 5, single buffered']
    #allocation13 [shape = 'u8[2048]{0}', space=vmem, size = 0x800, scoped, tag = 'input window, operand 6, single buffered']
    #allocation14 [shape = 's32[1]{0}', space=sflag, size = 0x4, scoped, tag = 'scoped memory for tpu_custom_call.1']
    #allocation15 [shape = 'u8[2048]{0}', space=vmem, size = 0x800, scoped, tag = 'input window, operand 7, single buffered']
    #allocation16 [shape = 'u8[2048]{0}', space=vmem, size = 0x800, scoped, tag = 'input window, operand 8, single buffered']
    #allocation17 [shape = 's32[1]{0}', space=sflag, size = 0x4, scoped, tag = 'scoped memory for tpu_custom_call.1']
    #allocation18 [shape = 'u8[2048]{0}', space=vmem, size = 0x800, scoped, tag = 'input window, operand 9, single buffered']
    %18 = vsyncpa [#allocation6], 0
    %s19 = scalar_lea.sflag [#allocation6], 1
    %20 = vsyncpa %s19, 0
    %21 = vsyncpa [#allocation8], 0
    %22 = vsyncpa [#allocation11], 0
    %23 = vsyncpa [#allocation14], 0
    %24 = vsyncpa [#allocation17], 0
    loop: start=0, step=1, limit=5
    $region2: #{tpu_custom_call.1} parent=1 // loop_pre_header
      _
    $region3: #{tpu_custom_call.1} parent=1 // loop_header
      %s26 = sphi 0, %s30
      %p27 = scmp.ge.s32.totalorder %s26, 5
      %s36 = sphi 0, %s38
      %s39 = sphi 0, %s36
      %s40 = sphi 0, %s39
      %s56 = sphi 0, %s40
      %s62 = sphi 0, %s64
      %s65 = sphi 0, %s62
      %s66 = sphi 0, %s65
      %s82 = sphi 0, %s66
      %s86 = sphi 0, %s86
      %s88 = sphi 0, %s86
      %s89 = sphi 0, %s88
      %s103 = sphi 0, %s89
      %s107 = sphi 0, %s107
      %s109 = sphi 0, %s107
      %s110 = sphi 0, %s109
      %s124 = sphi 0, %s110
      %s128 = sphi 0, %s128
      %s130 = sphi 0, %s128
      %s131 = sphi 0, %s130
      %s145 = sphi 0, %s131
      %s149 = sphi 0, %s149
      %s151 = sphi 0, %s149
      %s152 = sphi 0, %s151
      %s166 = sphi 0, %s152
      %s170 = sphi 0, %s170
      %s172 = sphi 0, %s170
      %s173 = sphi 0, %s172
      %s187 = sphi 0, %s173
      %s191 = sphi 0, %s191
      %s193 = sphi 0, %s191
      %s194 = sphi 0, %s193
      %s208 = sphi 0, %s194
      %s212 = sphi 0, %s212
      %s214 = sphi 0, %s212
      %s215 = sphi 0, %s214
      %s229 = sphi 0, %s215
      %s233 = sphi 0, %s233
      %s235 = sphi 0, %s233
      %s236 = sphi 0, %s235
      %s250 = sphi 0, %s236
      %s254 = sphi 0, %s254
      %s256 = sphi 0, %s254
      %s257 = sphi 0, %s256
      %s271 = sphi 0, %s257
      %s275 = sphi 0, %s275
      %s277 = sphi 0, %s275
      %s278 = sphi 0, %s277
      %s292 = sphi 0, %s278
    $region4: #{tpu_custom_call.1} parent=1 // loop_header_branch
      %29 = sbr.rel (%p27) target = $region8
    $region5: #{tpu_custom_call.1} parent=1 // loop_body
      %s31 = ssub.s32 %s26, 1
      %s32 = ssub.s32 %s26, 2
      %s33 = sadd.s32 %s26, 1
      %s34 = ssub.s32 %s26, %s33
      %p35 = scmp.eq.s32.totalorder %s34, 0
      %s37 = sadd.s32 %s36, 1
      %s38 = scalar_select %p35, %s36, %s37
      %p41 = pneg %p35
      %p42 = scmp.eq.s32.totalorder %s26, 2
      %p43 = por %p41, %p42
      %p44 = scmp.ne.s32.totalorder %s36, %s39
      %p45 = scmp.eq.s32.totalorder %s26, 0
      %p46 = por %p44, %p45
      %p47 = scmp.ne.s32.totalorder %s36, %s39
      %p48 = scmp.eq.s32.totalorder %s31, 2
      %p49 = por %p47, %p48
      %p50 = scmp.ne.s32.totalorder %s39, %s40
      %p51 = scmp.eq.s32.totalorder %s31, 0
      %p52 = por %p50, %p51
      %p53 = scmp.ne.s32.totalorder %s39, %s40
      %p54 = scmp.eq.s32.totalorder %s32, 2
      %p55 = por %p53, %p54
      %p57 = scmp.ne.s32.totalorder %s40, %s56
      %p58 = scmp.eq.s32.totalorder %s32, 0
      %p59 = por %p57, %p58
      %s60 = ssub.s32 %s26, %s33
      %p61 = scmp.eq.s32.totalorder %s60, 0
      %s63 = sadd.s32 %s62, 1
      %s64 = scalar_select %p61, %s62, %s63
      %p67 = pneg %p61
      %p68 = scmp.eq.s32.totalorder %s26, 2
      %p69 = por %p67, %p68
      %p70 = scmp.ne.s32.totalorder %s62, %s65
      %p71 = scmp.eq.s32.totalorder %s26, 0
      %p72 = por %p70, %p71
      %p73 = scmp.ne.s32.totalorder %s62, %s65
      %p74 = scmp.eq.s32.totalorder %s31, 2
      %p75 = por %p73, %p74
      %p76 = scmp.ne.s32.totalorder %s65, %s66
      %p77 = scmp.eq.s32.totalorder %s31, 0
      %p78 = por %p76, %p77
      %p79 = scmp.ne.s32.totalorder %s65, %s66
      %p80 = scmp.eq.s32.totalorder %s32, 2
      %p81 = por %p79, %p80
      %p83 = scmp.ne.s32.totalorder %s66, %s82
      %p84 = scmp.eq.s32.totalorder %s32, 0
      %p85 = por %p83, %p84
      %s87 = sadd.s32 %s86, 1
      %p90 = scmp.eq.s32.totalorder %s26, 2
      %p91 = scmp.ne.s32.totalorder %s86, %s88
      %p92 = scmp.eq.s32.totalorder %s26, 0
      %p93 = por %p91, %p92
      %p94 = scmp.ne.s32.totalorder %s86, %s88
      %p95 = scmp.eq.s32.totalorder %s31, 2
      %p96 = por %p94, %p95
      %p97 = scmp.ne.s32.totalorder %s88, %s89
      %p98 = scmp.eq.s32.totalorder %s31, 0
      %p99 = por %p97, %p98
      %p100 = scmp.ne.s32.totalorder %s88, %s89
      %p101 = scmp.eq.s32.totalorder %s32, 2
      %p102 = por %p100, %p101
      %p104 = scmp.ne.s32.totalorder %s89, %s103
      %p105 = scmp.eq.s32.totalorder %s32, 0
      %p106 = por %p104, %p105
      %s108 = sadd.s32 %s107, 1
      %p111 = scmp.eq.s32.totalorder %s26, 2
      %p112 = scmp.ne.s32.totalorder %s107, %s109
      %p113 = scmp.eq.s32.totalorder %s26, 0
      %p114 = por %p112, %p113
      %p115 = scmp.ne.s32.totalorder %s107, %s109
      %p116 = scmp.eq.s32.totalorder %s31, 2
      %p117 = por %p115, %p116
      %p118 = scmp.ne.s32.totalorder %s109, %s110
      %p119 = scmp.eq.s32.totalorder %s31, 0
      %p120 = por %p118, %p119
      %p121 = scmp.ne.s32.totalorder %s109, %s110
      %p122 = scmp.eq.s32.totalorder %s32, 2
      %p123 = por %p121, %p122
      %p125 = scmp.ne.s32.totalorder %s110, %s124
      %p126 = scmp.eq.s32.totalorder %s32, 0
      %p127 = por %p125, %p126
      %s129 = sadd.s32 %s128, 1
      %p132 = scmp.eq.s32.totalorder %s26, 2
      %p133 = scmp.ne.s32.totalorder %s128, %s130
      %p134 = scmp.eq.s32.totalorder %s26, 0
      %p135 = por %p133, %p134
      %p136 = scmp.ne.s32.totalorder %s128, %s130
      %p137 = scmp.eq.s32.totalorder %s31, 2
      %p138 = por %p136, %p137
      %p139 = scmp.ne.s32.totalorder %s130, %s131
      %p140 = scmp.eq.s32.totalorder %s31, 0
      %p141 = por %p139, %p140
      %p142 = scmp.ne.s32.totalorder %s130, %s131
      %p143 = scmp.eq.s32.totalorder %s32, 2
      %p144 = por %p142, %p143
      %p146 = scmp.ne.s32.totalorder %s131, %s145
      %p147 = scmp.eq.s32.totalorder %s32, 0
      %p148 = por %p146, %p147
      %s150 = sadd.s32 %s149, 1
      %p153 = scmp.eq.s32.totalorder %s26, 2
      %p154 = scmp.ne.s32.totalorder %s149, %s151
      %p155 = scmp.eq.s32.totalorder %s26, 0
      %p156 = por %p154, %p155
      %p157 = scmp.ne.s32.totalorder %s149, %s151
      %p158 = scmp.eq.s32.totalorder %s31, 2
      %p159 = por %p157, %p158
      %p160 = scmp.ne.s32.totalorder %s151, %s152
      %p161 = scmp.eq.s32.totalorder %s31, 0
      %p162 = por %p160, %p161
      %p163 = scmp.ne.s32.totalorder %s151, %s152
      %p164 = scmp.eq.s32.totalorder %s32, 2
      %p165 = por %p163, %p164
      %p167 = scmp.ne.s32.totalorder %s152, %s166
      %p168 = scmp.eq.s32.totalorder %s32, 0
      %p169 = por %p167, %p168
      %s171 = sadd.s32 %s170, 1
      %p174 = scmp.eq.s32.totalorder %s26, 2
      %p175 = scmp.ne.s32.totalorder %s170, %s172
      %p176 = scmp.eq.s32.totalorder %s26, 0
      %p177 = por %p175, %p176
      %p178 = scmp.ne.s32.totalorder %s170, %s172
      %p179 = scmp.eq.s32.totalorder %s31, 2
      %p180 = por %p178, %p179
      %p181 = scmp.ne.s32.totalorder %s172, %s173
      %p182 = scmp.eq.s32.totalorder %s31, 0
      %p183 = por %p181, %p182
      %p184 = scmp.ne.s32.totalorder %s172, %s173
      %p185 = scmp.eq.s32.totalorder %s32, 2
      %p186 = por %p184, %p185
      %p188 = scmp.ne.s32.totalorder %s173, %s187
      %p189 = scmp.eq.s32.totalorder %s32, 0
      %p190 = por %p188, %p189
      %s192 = sadd.s32 %s191, 1
      %p195 = scmp.eq.s32.totalorder %s26, 2
      %p196 = scmp.ne.s32.totalorder %s191, %s193
      %p197 = scmp.eq.s32.totalorder %s26, 0
      %p198 = por %p196, %p197
      %p199 = scmp.ne.s32.totalorder %s191, %s193
      %p200 = scmp.eq.s32.totalorder %s31, 2
      %p201 = por %p199, %p200
      %p202 = scmp.ne.s32.totalorder %s193, %s194
      %p203 = scmp.eq.s32.totalorder %s31, 0
      %p204 = por %p202, %p203
      %p205 = scmp.ne.s32.totalorder %s193, %s194
      %p206 = scmp.eq.s32.totalorder %s32, 2
      %p207 = por %p205, %p206
      %p209 = scmp.ne.s32.totalorder %s194, %s208
      %p210 = scmp.eq.s32.totalorder %s32, 0
      %p211 = por %p209, %p210
      %s213 = sadd.s32 %s212, 1
      %p216 = scmp.eq.s32.totalorder %s26, 2
      %p217 = scmp.ne.s32.totalorder %s212, %s214
      %p218 = scmp.eq.s32.totalorder %s26, 0
      %p219 = por %p217, %p218
      %p220 = scmp.ne.s32.totalorder %s212, %s214
      %p221 = scmp.eq.s32.totalorder %s31, 2
      %p222 = por %p220, %p221
      %p223 = scmp.ne.s32.totalorder %s214, %s215
      %p224 = scmp.eq.s32.totalorder %s31, 0
      %p225 = por %p223, %p224
      %p226 = scmp.ne.s32.totalorder %s214, %s215
      %p227 = scmp.eq.s32.totalorder %s32, 2
      %p228 = por %p226, %p227
      %p230 = scmp.ne.s32.totalorder %s215, %s229
      %p231 = scmp.eq.s32.totalorder %s32, 0
      %p232 = por %p230, %p231
      %s234 = sadd.s32 %s233, 1
      %p237 = scmp.eq.s32.totalorder %s26, 2
      %p238 = scmp.ne.s32.totalorder %s233, %s235
      %p239 = scmp.eq.s32.totalorder %s26, 0
      %p240 = por %p238, %p239
      %p241 = scmp.ne.s32.totalorder %s233, %s235
      %p242 = scmp.eq.s32.totalorder %s31, 2
      %p243 = por %p241, %p242
      %p244 = scmp.ne.s32.totalorder %s235, %s236
      %p245 = scmp.eq.s32.totalorder %s31, 0
      %p246 = por %p244, %p245
      %p247 = scmp.ne.s32.totalorder %s235, %s236
      %p248 = scmp.eq.s32.totalorder %s32, 2
      %p249 = por %p247, %p248
      %p251 = scmp.ne.s32.totalorder %s236, %s250
      %p252 = scmp.eq.s32.totalorder %s32, 0
      %p253 = por %p251, %p252
      %s255 = sadd.s32 %s254, 1
      %p258 = scmp.eq.s32.totalorder %s26, 2
      %p259 = scmp.ne.s32.totalorder %s254, %s256
      %p260 = scmp.eq.s32.totalorder %s26, 0
      %p261 = por %p259, %p260
      %p262 = scmp.ne.s32.totalorder %s254, %s256
      %p263 = scmp.eq.s32.totalorder %s31, 2
      %p264 = por %p262, %p263
      %p265 = scmp.ne.s32.totalorder %s256, %s257
      %p266 = scmp.eq.s32.totalorder %s31, 0
      %p267 = por %p265, %p266
      %p268 = scmp.ne.s32.totalorder %s256, %s257
      %p269 = scmp.eq.s32.totalorder %s32, 2
      %p270 = por %p268, %p269
      %p272 = scmp.ne.s32.totalorder %s257, %s271
      %p273 = scmp.eq.s32.totalorder %s32, 0
      %p274 = por %p272, %p273
      %s276 = sadd.s32 %s275, 1
      %p279 = scmp.eq.s32.totalorder %s26, 2
      %p280 = scmp.ne.s32.totalorder %s275, %s277
      %p281 = scmp.eq.s32.totalorder %s26, 0
      %p282 = por %p280, %p281
      %p283 = scmp.ne.s32.totalorder %s275, %s277
      %p284 = scmp.eq.s32.totalorder %s31, 2
      %p285 = por %p283, %p284
      %p286 = scmp.ne.s32.totalorder %s277, %s278
      %p287 = scmp.eq.s32.totalorder %s31, 0
      %p288 = por %p286, %p287
      %p289 = scmp.ne.s32.totalorder %s277, %s278
      %p290 = scmp.eq.s32.totalorder %s32, 2
      %p291 = por %p289, %p290
      %p293 = scmp.ne.s32.totalorder %s278, %s292
      %p294 = scmp.eq.s32.totalorder %s32, 0
      %p295 = por %p293, %p294
      %p296 = scmp.le.s32.totalorder 1, %s26
      %p297 = scmp.lt.s32.totalorder %s26, 4
      %p298 = pnand %p296, %p297
      %p299 = pneg %p298
      // Predicated region
      $region9: #{tpu_custom_call.1} parent=5 // pred_check
        _
      $region10: #{tpu_custom_call.1} parent=5 // pred_check_branch
        %301 = sbr.rel (%p298) target = $region12
      $region11: #{tpu_custom_call.1} parent=5 // pred_region
        %s302 = ssub.s32 %s26, 1
        // Predicated region
        $region13: #{tpu_custom_call.1} parent=11 // pred_check
          %p303 = pneg %p99
        $region14: #{tpu_custom_call.1} parent=11 // pred_check_branch
          %305 = sbr.rel (%p303) target = $region16
        $region15: #{tpu_custom_call.1} parent=11 // pred_region
          %307 = vsyncadd [#allocation8], 0
          %s309 = sshll.u32 %s2, 4
          %s310 = int_to_ptr.hbm [resolvable:$true] %s309
          %s311 = sshll.u32 [#allocation7], 4
          %s312 = int_to_ptr.vmem [resolvable:$true] %s311
          %314 = dma.hbm_to_vmem [thread:$0]  %s310, 128, %s312, [#allocation8]
        $region16: #{tpu_custom_call.1} parent=11 // pred_fallthru
          _
        // Predicated region
        $region17: #{tpu_custom_call.1} parent=11 // pred_check
          %p315 = pneg %p120
        $region18: #{tpu_custom_call.1} parent=11 // pred_check_branch
          %317 = sbr.rel (%p315) target = $region20
        $region19: #{tpu_custom_call.1} parent=11 // pred_region
          %319 = vsyncadd [#allocation8], 0
          %s321 = sshll.u32 %s3, 4
          %s322 = int_to_ptr.hbm [resolvable:$true] %s321
          %s323 = sshll.u32 [#allocation9], 4
          %s324 = int_to_ptr.vmem [resolvable:$true] %s323
          %326 = dma.hbm_to_vmem [thread:$0]  %s322, 64, %s324, [#allocation8]
        $region20: #{tpu_custom_call.1} parent=11 // pred_fallthru
          _
        // Predicated region
        $region21: #{tpu_custom_call.1} parent=11 // pred_check
          %p327 = pneg %p141
        $region22: #{tpu_custom_call.1} parent=11 // pred_check_branch
          %329 = sbr.rel (%p327) target = $region24
        $region23: #{tpu_custom_call.1} parent=11 // pred_region
          %331 = vsyncadd [#allocation11], 0
          %s333 = sshll.u32 %s4, 4
          %s334 = int_to_ptr.hbm [resolvable:$true] %s333
          %s335 = sshll.u32 [#allocation10], 4
          %s336 = int_to_ptr.vmem [resolvable:$true] %s335
          %338 = dma.hbm_to_vmem [thread:$0]  %s334, 64, %s336, [#allocation11]
        $region24: #{tpu_custom_call.1} parent=11 // pred_fallthru
          _
        // Predicated region
        $region25: #{tpu_custom_call.1} parent=11 // pred_check
          %p339 = pneg %p162
        $region26: #{tpu_custom_call.1} parent=11 // pred_check_branch
          %341 = sbr.rel (%p339) target = $region28
        $region27: #{tpu_custom_call.1} parent=11 // pred_region
          %343 = vsyncadd [#allocation11], 0
          %s344 = sshll.u32 %s5, 4
          %s345 = int_to_ptr.hbm [resolvable:$true] %s344
          %s346 = sshll.u32 [#allocation12], 4
          %s347 = int_to_ptr.vmem [resolvable:$true] %s346
          %352 = dma.hbm_to_vmem [thread:$0]  %s345, 40960, %s347, [#allocation11], 512, 512, 32
        $region28: #{tpu_custom_call.1} parent=11 // pred_fallthru
          _
        // Predicated region
        $region29: #{tpu_custom_call.1} parent=11 // pred_check
          %p353 = pneg %p183
        $region30: #{tpu_custom_call.1} parent=11 // pred_check_branch
          %355 = sbr.rel (%p353) target = $region32
        $region31: #{tpu_custom_call.1} parent=11 // pred_region
          %357 = vsyncadd [#allocation14], 0
          %s359 = sshll.u32 %s6, 4
          %s360 = int_to_ptr.hbm [resolvable:$true] %s359
          %s361 = sshll.u32 [#allocation13], 4
          %s362 = int_to_ptr.vmem [resolvable:$true] %s361
          %364 = dma.hbm_to_vmem [thread:$0]  %s360, 64, %s362, [#allocation14]
        $region32: #{tpu_custom_call.1} parent=11 // pred_fallthru
          _
        // Predicated region
        $region33: #{tpu_custom_call.1} parent=11 // pred_check
          %p365 = pneg %p204
        $region34: #{tpu_custom_call.1} parent=11 // pred_check_branch
          %367 = sbr.rel (%p365) target = $region36
        $region35: #{tpu_custom_call.1} parent=11 // pred_region
          %369 = vsyncadd [#allocation14], 0
          %s371 = sshll.u32 %s7, 4
          %s372 = int_to_ptr.hbm [resolvable:$true] %s371
          %s373 = sshll.u32 [#allocation15], 4
          %s374 = int_to_ptr.vmem [resolvable:$true] %s373
          %376 = dma.hbm_to_vmem [thread:$0]  %s372, 64, %s374, [#allocation14]
        $region36: #{tpu_custom_call.1} parent=11 // pred_fallthru
          _
        // Predicated region
        $region37: #{tpu_custom_call.1} parent=11 // pred_check
          %p377 = pneg %p225
        $region38: #{tpu_custom_call.1} parent=11 // pred_check_branch
          %379 = sbr.rel (%p377) target = $region40
        $region39: #{tpu_custom_call.1} parent=11 // pred_region
          %381 = vsyncadd [#allocation17], 0
          %s383 = sshll.u32 %s8, 4
          %s384 = int_to_ptr.hbm [resolvable:$true] %s383
          %s385 = sshll.u32 [#allocation16], 4
          %s386 = int_to_ptr.vmem [resolvable:$true] %s385
          %388 = dma.hbm_to_vmem [thread:$0]  %s384, 64, %s386, [#allocation17]
        $region40: #{tpu_custom_call.1} parent=11 // pred_fallthru
          _
        // Predicated region
        $region41: #{tpu_custom_call.1} parent=11 // pred_check
          %p389 = pneg %p246
        $region42: #{tpu_custom_call.1} parent=11 // pred_check_branch
          %391 = sbr.rel (%p389) target = $region44
        $region43: #{tpu_custom_call.1} parent=11 // pred_region
          %393 = vsyncadd [#allocation17], 0
          %s395 = sshll.u32 %s9, 4
          %s396 = int_to_ptr.hbm [resolvable:$true] %s395
          %s397 = sshll.u32 [#allocation18], 4
          %s398 = int_to_ptr.vmem [resolvable:$true] %s397
          %400 = dma.hbm_to_vmem [thread:$0]  %s396, 64, %s398, [#allocation17]
        $region44: #{tpu_custom_call.1} parent=11 // pred_fallthru
          _
        // Predicated region
        $region45: #{tpu_custom_call.1} parent=11 // pred_check
          %p401 = pneg %p267
        $region46: #{tpu_custom_call.1} parent=11 // pred_check_branch
          %403 = sbr.rel (%p401) target = $region48
        $region47: #{tpu_custom_call.1} parent=11 // pred_region
          _
        $region48: #{tpu_custom_call.1} parent=11 // pred_fallthru
          _
      $region12: #{tpu_custom_call.1} parent=5 // pred_fallthru
        _
      %p404 = scmp.lt.s32.totalorder %s26, 3
      // Predicated region
      $region49: #{tpu_custom_call.1} parent=5 // pred_check
        %p405 = pneg %p404
      $region50: #{tpu_custom_call.1} parent=5 // pred_check_branch
        %407 = sbr.rel (%p405) target = $region52
      $region51: #{tpu_custom_call.1} parent=5 // pred_region
        // Predicated region
        $region53: #{tpu_custom_call.1} parent=51 // pred_check
          %p408 = pneg %p46
        $region54: #{tpu_custom_call.1} parent=51 // pred_check_branch
          %410 = sbr.rel (%p408) target = $region56
        $region55: #{tpu_custom_call.1} parent=51 // pred_region
          %s411 = smul.u32 16, %s26
          %p412 = scmp.lt.s32.totalorder %s411, 47
          %s413 = scalar_select %p412, %s411, 47
          %s414 = smul.addr %s413, 8
          %s415 = scalar_lea.vmem %s0, %s414
          %s416 = smul.u32 16, %s26
        $region56: #{tpu_custom_call.1} parent=51 // pred_fallthru
          _
        // Predicated region
        $region57: #{tpu_custom_call.1} parent=51 // pred_check
          %p417 = pneg %p72
        $region58: #{tpu_custom_call.1} parent=51 // pred_check_branch
          %419 = sbr.rel (%p417) target = $region60
        $region59: #{tpu_custom_call.1} parent=51 // pred_region
          %s420 = sand.u32 %s62, 1
          %s421 = scalar_lea.sflag [#allocation6], %s420
          %s422 = sand.u32 %s62, 1
          %s423 = smul.addr %s422, 512
          %s424 = scalar_lea.vmem [#allocation5], %s423
          %s425 = smul.u32 16, %s26
          %427 = vsyncadd %s421, 0
          %s428 = smul.addr %s425, 4
          %s429 = smul.addr %s428, 8
          %s430 = scalar_lea.hbm %s1, %s429
          %s431 = sshll.u32 %s430, 4
          %s432 = int_to_ptr.hbm [resolvable:$true] %s431
          %s433 = sshll.u32 %s424, 4
          %s434 = int_to_ptr.vmem [resolvable:$true] %s433
          %439 = dma.hbm_to_vmem [thread:$0]  %s432, 8192, %s434, %s421, 512, 512, 32
        $region60: #{tpu_custom_call.1} parent=51 // pred_fallthru
          _
      $region52: #{tpu_custom_call.1} parent=5 // pred_fallthru
        _
      %p440 = scmp.le.s32.totalorder 1, %s26
      %p441 = scmp.lt.s32.totalorder %s26, 4
      %p442 = pnand %p440, %p441
      %p443 = pneg %p442
      // Predicated region
      $region61: #{tpu_custom_call.1} parent=5 // pred_check
        _
      $region62: #{tpu_custom_call.1} parent=5 // pred_check_branch
        %445 = sbr.rel (%p442) target = $region64
      $region63: #{tpu_custom_call.1} parent=5 // pred_region
        %s446 = ssub.s32 %s26, 1
        %s447 = sand.u32 %s65, 1
        %s448 = scalar_lea.sflag [#allocation6], %s447
        %s449 = sand.u32 %s65, 1
        %s450 = smul.addr %s449, 512
        %s451 = scalar_lea.vmem [#allocation5], %s450
        // Predicated region
        $region65: #{tpu_custom_call.1} parent=63 // pred_check
          %p452 = pneg %p78
        $region66: #{tpu_custom_call.1} parent=63 // pred_check_branch
          %454 = sbr.rel (%p452) target = $region68
        $region67: #{tpu_custom_call.1} parent=63 // pred_region
          %456 = dma.done %s448, 8192
        $region68: #{tpu_custom_call.1} parent=63 // pred_fallthru
          _
        // Predicated region
        $region69: #{tpu_custom_call.1} parent=63 // pred_check
          %p457 = pneg %p99
        $region70: #{tpu_custom_call.1} parent=63 // pred_check_branch
          %459 = sbr.rel (%p457) target = $region72
        $region71: #{tpu_custom_call.1} parent=63 // pred_region
          %461 = dma.done [#allocation8], 128
        $region72: #{tpu_custom_call.1} parent=63 // pred_fallthru
          _
        // Predicated region
        $region73: #{tpu_custom_call.1} parent=63 // pred_check
          %p462 = pneg %p120
        $region74: #{tpu_custom_call.1} parent=63 // pred_check_branch
          %464 = sbr.rel (%p462) target = $region76
        $region75: #{tpu_custom_call.1} parent=63 // pred_region
          %466 = dma.done [#allocation8], 64
        $region76: #{tpu_custom_call.1} parent=63 // pred_fallthru
          _
        // Predicated region
        $region77: #{tpu_custom_call.1} parent=63 // pred_check
          %p467 = pneg %p141
        $region78: #{tpu_custom_call.1} parent=63 // pred_check_branch
          %469 = sbr.rel (%p467) target = $region80
        $region79: #{tpu_custom_call.1} parent=63 // pred_region
          %471 = dma.done [#allocation11], 64
        $region80: #{tpu_custom_call.1} parent=63 // pred_fallthru
          _
        // Predicated region
        $region81: #{tpu_custom_call.1} parent=63 // pred_check
          %p472 = pneg %p162
        $region82: #{tpu_custom_call.1} parent=63 // pred_check_branch
          %474 = sbr.rel (%p472) target = $region84
        $region83: #{tpu_custom_call.1} parent=63 // pred_region
          %476 = dma.done [#allocation11], 40960
        $region84: #{tpu_custom_call.1} parent=63 // pred_fallthru
          _
        // Predicated region
        $region85: #{tpu_custom_call.1} parent=63 // pred_check
          %p477 = pneg %p183
        $region86: #{tpu_custom_call.1} parent=63 // pred_check_branch
          %479 = sbr.rel (%p477) target = $region88
        $region87: #{tpu_custom_call.1} parent=63 // pred_region
          %481 = dma.done [#allocation14], 64
        $region88: #{tpu_custom_call.1} parent=63 // pred_fallthru
          _
        // Predicated region
        $region89: #{tpu_custom_call.1} parent=63 // pred_check
          %p482 = pneg %p204
        $region90: #{tpu_custom_call.1} parent=63 // pred_check_branch
          %484 = sbr.rel (%p482) target = $region92
        $region91: #{tpu_custom_call.1} parent=63 // pred_region
          %486 = dma.done [#allocation14], 64
        $region92: #{tpu_custom_call.1} parent=63 // pred_fallthru
          _
        // Predicated region
        $region93: #{tpu_custom_call.1} parent=63 // pred_check
          %p487 = pneg %p225
        $region94: #{tpu_custom_call.1} parent=63 // pred_check_branch
          %489 = sbr.rel (%p487) target = $region96
        $region95: #{tpu_custom_call.1} parent=63 // pred_region
          %491 = dma.done [#allocation17], 64
        $region96: #{tpu_custom_call.1} parent=63 // pred_fallthru
          _
        // Predicated region
        $region97: #{tpu_custom_call.1} parent=63 // pred_check
          %p492 = pneg %p246
        $region98: #{tpu_custom_call.1} parent=63 // pred_check_branch
          %494 = sbr.rel (%p492) target = $region100
        $region99: #{tpu_custom_call.1} parent=63 // pred_region
          %496 = dma.done [#allocation17], 64
        $region100: #{tpu_custom_call.1} parent=63 // pred_fallthru
          _
        %s497 = smul.u32 16, %s31
        %p498 = scmp.lt.s32.totalorder %s497, 47
        %s499 = scalar_select %p498, %s497, 47
        %s500 = smul.addr %s499, 8
        %s501 = scalar_lea.vmem %s0, %s500
        %p502 = pneg %p52
        %p503 = pneg %p49
        %s504 = sand.u32 %s65, 1
        %s505 = scalar_lea.sflag [#allocation6], %s504
        %s506 = sand.u32 %s65, 1
        %s507 = smul.addr %s506, 512
        %s508 = scalar_lea.vmem [#allocation5], %s507
        %p509 = pneg %p78
        %p510 = pneg %p75
        %p511 = pneg %p99
        %p512 = pneg %p96
        %p513 = pneg %p120
        %p514 = pneg %p117
        %p515 = pneg %p141
        %p516 = pneg %p138
        %p517 = pneg %p162
        %p518 = pneg %p159
        %p519 = pneg %p183
        %p520 = pneg %p180
        %p521 = pneg %p204
        %p522 = pneg %p201
        %p523 = pneg %p225
        %p524 = pneg %p222
        %p525 = pneg %p246
        %p526 = pneg %p243
        %p527 = pneg %p267
        %p528 = pneg %p264
        %p529 = pneg %p288
        %p530 = pneg %p285
        %s531 = smul.u32 16, %s31
        %p532 = scmp.lt.s32.totalorder %s531, 47
        %s533 = scalar_select %p532, %s531, 47
        %s534 = smul.addr %s533, 8
        %s535 = scalar_lea.vmem %s0, %s534
        %s536 = smul.u32 16, %s31
        %s537 = smul.u32 16, %s31
        %p538 = scmp.eq.s32.totalorder %s31, 0
        // Predicated region
        $region101: #{tpu_custom_call.1} parent=63 // pred_check
          %p539 = pneg %p538
        $region102: #{tpu_custom_call.1} parent=63 // pred_check_branch
          %541 = sbr.rel (%p539) target = $region104
        $region103: #{tpu_custom_call.1} parent=63 // pred_region
          %542 = vst [vmem:[#allocation2] sm:$0xff] -1e+30
          %543 = vst [vmem:[#allocation2 + $0x8] sm:$0xff] -1e+30
          %544 = vst [vmem:[#allocation2 + $0x10] sm:$0xff] -1e+30
          %545 = vst [vmem:[#allocation2 + $0x18] sm:$0xff] -1e+30
        $region104: #{tpu_custom_call.1} parent=63 // pred_fallthru
          _
        %v546 = vld [vmem:[%s535] sm:$0xff]
        %v547 = vld [vmem:[%s535 + $0x8] sm:$0xff]
        %v548 = vld [vmem:[%s535 + $0x10] sm:$0xff]
        %v549 = vld [vmem:[%s535 + $0x18] sm:$0xff]
        %v550 = vld [vmem:[%s535 + $0x20] sm:$0xff]
        %v551 = vld [vmem:[%s535 + $0x28] sm:$0xff]
        %v552 = vld [vmem:[%s535 + $0x30] sm:$0xff]
        %v553 = vld [vmem:[%s535 + $0x38] sm:$0xff]
        %v554 = vld [vmem:[%s535 + $0x40] sm:$0xff]
        %v555 = vld [vmem:[%s535 + $0x48] sm:$0xff]
        %v556 = vld [vmem:[%s535 + $0x50] sm:$0xff]
        %v557 = vld [vmem:[%s535 + $0x58] sm:$0xff]
        %v558 = vld [vmem:[%s535 + $0x60] sm:$0xff]
        %v559 = vld [vmem:[%s535 + $0x68] sm:$0xff]
        %v560 = vld [vmem:[%s535 + $0x70] sm:$0xff]
        %v561 = vld [vmem:[%s535 + $0x78] sm:$0xff]
        %vm562 = vcmp.eq.s32.totalorder %v546, 0
        %vm563 = vcmp.eq.s32.totalorder %v547, 0
        %vm564 = vcmp.eq.s32.totalorder %v548, 0
        %vm565 = vcmp.eq.s32.totalorder %v549, 0
        %vm566 = vcmp.eq.s32.totalorder %v550, 0
        %vm567 = vcmp.eq.s32.totalorder %v551, 0
        %vm568 = vcmp.eq.s32.totalorder %v552, 0
        %vm569 = vcmp.eq.s32.totalorder %v553, 0
        %vm570 = vcmp.eq.s32.totalorder %v554, 0
        %vm571 = vcmp.eq.s32.totalorder %v555, 0
        %vm572 = vcmp.eq.s32.totalorder %v556, 0
        %vm573 = vcmp.eq.s32.totalorder %v557, 0
        %vm574 = vcmp.eq.s32.totalorder %v558, 0
        %vm575 = vcmp.eq.s32.totalorder %v559, 0
        %vm576 = vcmp.eq.s32.totalorder %v560, 0
        %vm577 = vcmp.eq.s32.totalorder %v561, 0
        %vm578 = vcmp.eq.s32.totalorder %v546, 1
        %vm579 = vcmp.eq.s32.totalorder %v547, 1
        %vm580 = vcmp.eq.s32.totalorder %v548, 1
        %vm581 = vcmp.eq.s32.totalorder %v549, 1
        %vm582 = vcmp.eq.s32.totalorder %v550, 1
        %vm583 = vcmp.eq.s32.totalorder %v551, 1
        %vm584 = vcmp.eq.s32.totalorder %v552, 1
        %vm585 = vcmp.eq.s32.totalorder %v553, 1
        %vm586 = vcmp.eq.s32.totalorder %v554, 1
        %vm587 = vcmp.eq.s32.totalorder %v555, 1
        %vm588 = vcmp.eq.s32.totalorder %v556, 1
        %vm589 = vcmp.eq.s32.totalorder %v557, 1
        %vm590 = vcmp.eq.s32.totalorder %v558, 1
        %vm591 = vcmp.eq.s32.totalorder %v559, 1
        %vm592 = vcmp.eq.s32.totalorder %v560, 1
        %vm593 = vcmp.eq.s32.totalorder %v561, 1
        %vm594 = vcmp.eq.s32.totalorder %v546, 2
        %vm595 = vcmp.eq.s32.totalorder %v547, 2
        %vm596 = vcmp.eq.s32.totalorder %v548, 2
        %vm597 = vcmp.eq.s32.totalorder %v549, 2
        %vm598 = vcmp.eq.s32.totalorder %v550, 2
        %vm599 = vcmp.eq.s32.totalorder %v551, 2
        %vm600 = vcmp.eq.s32.totalorder %v552, 2
        %vm601 = vcmp.eq.s32.totalorder %v553, 2
        %vm602 = vcmp.eq.s32.totalorder %v554, 2
        %vm603 = vcmp.eq.s32.totalorder %v555, 2
        %vm604 = vcmp.eq.s32.totalorder %v556, 2
        %vm605 = vcmp.eq.s32.totalorder %v557, 2
        %vm606 = vcmp.eq.s32.totalorder %v558, 2
        %vm607 = vcmp.eq.s32.totalorder %v559, 2
        %vm608 = vcmp.eq.s32.totalorder %v560, 2
        %vm609 = vcmp.eq.s32.totalorder %v561, 2
        %vm610 = vcmp.eq.s32.totalorder %v546, 3
        %vm611 = vcmp.eq.s32.totalorder %v547, 3
        %vm612 = vcmp.eq.s32.totalorder %v548, 3
        %vm613 = vcmp.eq.s32.totalorder %v549, 3
        %vm614 = vcmp.eq.s32.totalorder %v550, 3
        %vm615 = vcmp.eq.s32.totalorder %v551, 3
        %vm616 = vcmp.eq.s32.totalorder %v552, 3
        %vm617 = vcmp.eq.s32.totalorder %v553, 3
        %vm618 = vcmp.eq.s32.totalorder %v554, 3
        %vm619 = vcmp.eq.s32.totalorder %v555, 3
        %vm620 = vcmp.eq.s32.totalorder %v556, 3
        %vm621 = vcmp.eq.s32.totalorder %v557, 3
        %vm622 = vcmp.eq.s32.totalorder %v558, 3
        %vm623 = vcmp.eq.s32.totalorder %v559, 3
        %vm624 = vcmp.eq.s32.totalorder %v560, 3
        %vm625 = vcmp.eq.s32.totalorder %v561, 3
        %vm626 = vcmp.eq.s32.totalorder %v546, 4
        %vm627 = vcmp.eq.s32.totalorder %v547, 4
        %vm628 = vcmp.eq.s32.totalorder %v548, 4
        %vm629 = vcmp.eq.s32.totalorder %v549, 4
        %vm630 = vcmp.eq.s32.totalorder %v550, 4
        %vm631 = vcmp.eq.s32.totalorder %v551, 4
        %vm632 = vcmp.eq.s32.totalorder %v552, 4
        %vm633 = vcmp.eq.s32.totalorder %v553, 4
        %vm634 = vcmp.eq.s32.totalorder %v554, 4
        %vm635 = vcmp.eq.s32.totalorder %v555, 4
        %vm636 = vcmp.eq.s32.totalorder %v556, 4
        %vm637 = vcmp.eq.s32.totalorder %v557, 4
        %vm638 = vcmp.eq.s32.totalorder %v558, 4
        %vm639 = vcmp.eq.s32.totalorder %v559, 4
        %vm640 = vcmp.eq.s32.totalorder %v560, 4
        %vm641 = vcmp.eq.s32.totalorder %v561, 4
        %vm642 = vcmp.eq.s32.totalorder %v546, 5
        %vm643 = vcmp.eq.s32.totalorder %v547, 5
        %vm644 = vcmp.eq.s32.totalorder %v548, 5
        %vm645 = vcmp.eq.s32.totalorder %v549, 5
        %vm646 = vcmp.eq.s32.totalorder %v550, 5
        %vm647 = vcmp.eq.s32.totalorder %v551, 5
        %vm648 = vcmp.eq.s32.totalorder %v552, 5
        %vm649 = vcmp.eq.s32.totalorder %v553, 5
        %vm650 = vcmp.eq.s32.totalorder %v554, 5
        %vm651 = vcmp.eq.s32.totalorder %v555, 5
        %vm652 = vcmp.eq.s32.totalorder %v556, 5
        %vm653 = vcmp.eq.s32.totalorder %v557, 5
        %vm654 = vcmp.eq.s32.totalorder %v558, 5
        %vm655 = vcmp.eq.s32.totalorder %v559, 5
        %vm656 = vcmp.eq.s32.totalorder %v560, 5
        %vm657 = vcmp.eq.s32.totalorder %v561, 5
        %vm658 = vcmp.eq.s32.totalorder %v546, 6
        %vm659 = vcmp.eq.s32.totalorder %v547, 6
        %vm660 = vcmp.eq.s32.totalorder %v548, 6
        %vm661 = vcmp.eq.s32.totalorder %v549, 6
        %vm662 = vcmp.eq.s32.totalorder %v550, 6
        %vm663 = vcmp.eq.s32.totalorder %v551, 6
        %vm664 = vcmp.eq.s32.totalorder %v552, 6
        %vm665 = vcmp.eq.s32.totalorder %v553, 6
        %vm666 = vcmp.eq.s32.totalorder %v554, 6
        %vm667 = vcmp.eq.s32.totalorder %v555, 6
        %vm668 = vcmp.eq.s32.totalorder %v556, 6
        %vm669 = vcmp.eq.s32.totalorder %v557, 6
        %vm670 = vcmp.eq.s32.totalorder %v558, 6
        %vm671 = vcmp.eq.s32.totalorder %v559, 6
        %vm672 = vcmp.eq.s32.totalorder %v560, 6
        %vm673 = vcmp.eq.s32.totalorder %v561, 6
        %vm674 = vcmp.eq.s32.totalorder %v546, 7
        %vm675 = vcmp.eq.s32.totalorder %v547, 7
        %vm676 = vcmp.eq.s32.totalorder %v548, 7
        %vm677 = vcmp.eq.s32.totalorder %v549, 7
        %vm678 = vcmp.eq.s32.totalorder %v550, 7
        %vm679 = vcmp.eq.s32.totalorder %v551, 7
        %vm680 = vcmp.eq.s32.totalorder %v552, 7
        %vm681 = vcmp.eq.s32.totalorder %v553, 7
        %vm682 = vcmp.eq.s32.totalorder %v554, 7
        %vm683 = vcmp.eq.s32.totalorder %v555, 7
        %vm684 = vcmp.eq.s32.totalorder %v556, 7
        %vm685 = vcmp.eq.s32.totalorder %v557, 7
        %vm686 = vcmp.eq.s32.totalorder %v558, 7
        %vm687 = vcmp.eq.s32.totalorder %v559, 7
        %vm688 = vcmp.eq.s32.totalorder %v560, 7
        %vm689 = vcmp.eq.s32.totalorder %v561, 7
        %v690 = vld [vmem:[%s451] sm:$0xff]
        %v691 = vld [vmem:[%s451 + $0x20] sm:$0xff]
        %v692 = vld [vmem:[%s451 + $0x40] sm:$0xff]
        %v693 = vld [vmem:[%s451 + $0x60] sm:$0xff]
        %v694 = vld [vmem:[%s451 + $0x80] sm:$0xff]
        %v695 = vld [vmem:[%s451 + $0xa0] sm:$0xff]
        %v696 = vld [vmem:[%s451 + $0xc0] sm:$0xff]
        %v697 = vld [vmem:[%s451 + $0xe0] sm:$0xff]
        %v698 = vld [vmem:[%s451 + $0x100] sm:$0xff]
        %v699 = vld [vmem:[%s451 + $0x120] sm:$0xff]
        %v700 = vld [vmem:[%s451 + $0x140] sm:$0xff]
        %v701 = vld [vmem:[%s451 + $0x160] sm:$0xff]
        %v702 = vld [vmem:[%s451 + $0x180] sm:$0xff]
        %v703 = vld [vmem:[%s451 + $0x1a0] sm:$0xff]
        %v704 = vld [vmem:[%s451 + $0x1c0] sm:$0xff]
        %v705 = vld [vmem:[%s451 + $0x1e0] sm:$0xff]
        %v706 = vsel %vm562, 1, 0
        %v707 = vsel %vm563, 1, 0
        %v708 = vsel %vm564, 1, 0
        %v709 = vsel %vm565, 1, 0
        %v710 = vsel %vm566, 1, 0
        %v711 = vsel %vm567, 1, 0
        %v712 = vsel %vm568, 1, 0
        %v713 = vsel %vm569, 1, 0
        %v714 = vsel %vm570, 1, 0
        %v715 = vsel %vm571, 1, 0
        %v716 = vsel %vm572, 1, 0
        %v717 = vsel %vm573, 1, 0
        %v718 = vsel %vm574, 1, 0
        %v719 = vsel %vm575, 1, 0
        %v720 = vsel %vm576, 1, 0
        %v721 = vsel %vm577, 1, 0
        %722 = vset.pattern.permute.xlu0 0
        %723 = vperm.xlu0 %722, %v706
        %v724 = vpop.permute.xlu0 %723
        %725 = vset.pattern.permute.xlu0 0
        %726 = vperm.xlu0 %725, %v707
        %v727 = vpop.permute.xlu0 %726
        %728 = vset.pattern.permute.xlu0 0
        %729 = vperm.xlu0 %728, %v708
        %v730 = vpop.permute.xlu0 %729
        %731 = vset.pattern.permute.xlu0 0
        %732 = vperm.xlu0 %731, %v709
        %v733 = vpop.permute.xlu0 %732
        %734 = vset.pattern.permute.xlu0 0
        %735 = vperm.xlu0 %734, %v710
        %v736 = vpop.permute.xlu0 %735
        %737 = vset.pattern.permute.xlu0 0
        %738 = vperm.xlu0 %737, %v711
        %v739 = vpop.permute.xlu0 %738
        %740 = vset.pattern.permute.xlu0 0
        %741 = vperm.xlu0 %740, %v712
        %v742 = vpop.permute.xlu0 %741
        %743 = vset.pattern.permute.xlu0 0
        %744 = vperm.xlu0 %743, %v713
        %v745 = vpop.permute.xlu0 %744
        %746 = vset.pattern.permute.xlu0 0
        %747 = vperm.xlu0 %746, %v714
        %v748 = vpop.permute.xlu0 %747
        %749 = vset.pattern.permute.xlu0 0
        %750 = vperm.xlu0 %749, %v715
        %v751 = vpop.permute.xlu0 %750
        %752 = vset.pattern.permute.xlu0 0
        %753 = vperm.xlu0 %752, %v716
        %v754 = vpop.permute.xlu0 %753
        %755 = vset.pattern.permute.xlu0 0
        %756 = vperm.xlu0 %755, %v717
        %v757 = vpop.permute.xlu0 %756
        %758 = vset.pattern.permute.xlu0 0
        %759 = vperm.xlu0 %758, %v718
        %v760 = vpop.permute.xlu0 %759
        %761 = vset.pattern.permute.xlu0 0
        %762 = vperm.xlu0 %761, %v719
        %v763 = vpop.permute.xlu0 %762
        %764 = vset.pattern.permute.xlu0 0
        %765 = vperm.xlu0 %764, %v720
        %v766 = vpop.permute.xlu0 %765
        %767 = vset.pattern.permute.xlu0 0
        %768 = vperm.xlu0 %767, %v721
        %v769 = vpop.permute.xlu0 %768
        %vm770 = vcmp.eq.s32.totalorder %v724, 1
        %vm771 = vcmp.eq.s32.totalorder %v727, 1
        %vm772 = vcmp.eq.s32.totalorder %v730, 1
        %vm773 = vcmp.eq.s32.totalorder %v733, 1
        %vm774 = vcmp.eq.s32.totalorder %v736, 1
        %vm775 = vcmp.eq.s32.totalorder %v739, 1
        %vm776 = vcmp.eq.s32.totalorder %v742, 1
        %vm777 = vcmp.eq.s32.totalorder %v745, 1
        %vm778 = vcmp.eq.s32.totalorder %v748, 1
        %vm779 = vcmp.eq.s32.totalorder %v751, 1
        %vm780 = vcmp.eq.s32.totalorder %v754, 1
        %vm781 = vcmp.eq.s32.totalorder %v757, 1
        %vm782 = vcmp.eq.s32.totalorder %v760, 1
        %vm783 = vcmp.eq.s32.totalorder %v763, 1
        %vm784 = vcmp.eq.s32.totalorder %v766, 1
        %vm785 = vcmp.eq.s32.totalorder %v769, 1
        %v786 = vsel %vm770, %v690, -1e+30
        %v787 = vsel %vm771, %v691, -1e+30
        %v788 = vsel %vm772, %v692, -1e+30
        %v789 = vsel %vm773, %v693, -1e+30
        %v790 = vsel %vm774, %v694, -1e+30
        %v791 = vsel %vm775, %v695, -1e+30
        %v792 = vsel %vm776, %v696, -1e+30
        %v793 = vsel %vm777, %v697, -1e+30
        %v794 = vsel %vm778, %v698, -1e+30
        %v795 = vsel %vm779, %v699, -1e+30
        %v796 = vsel %vm780, %v700, -1e+30
        %v797 = vsel %vm781, %v701, -1e+30
        %v798 = vsel %vm782, %v702, -1e+30
        %v799 = vsel %vm783, %v703, -1e+30
        %v800 = vsel %vm784, %v704, -1e+30
        %v801 = vsel %vm785, %v705, -1e+30
        %v802 = vmax.f32 %v786, %v790
        %v803 = vmax.f32 %v787, %v791
        %v804 = vmax.f32 %v788, %v792
        %v805 = vmax.f32 %v789, %v793
        %v806 = vmax.f32 %v802, %v794
        %v807 = vmax.f32 %v803, %v795
        %v808 = vmax.f32 %v804, %v796
        %v809 = vmax.f32 %v805, %v797
        %v810 = vmax.f32 %v806, %v798
        %v811 = vmax.f32 %v807, %v799
        %v812 = vmax.f32 %v808, %v800
        %v813 = vmax.f32 %v809, %v801
        %v814 = vmax.f32 %v810, %v811
        %v815 = vmax.f32 %v812, %v813
        %v816 = vmax.f32 %v814, %v815
        %v817 = vrot.slane %v816, 4
        %v818 = vmax.f32 %v816, %v817
        %v819 = vrot.slane %v818, 2
        %v820 = vmax.f32 %v818, %v819
        %v821 = vrot.slane %v820, 1
        %v822 = vmax.f32 %v820, %v821
        %v823 = vsel %vm578, 1, 0
        %v824 = vsel %vm579, 1, 0
        %v825 = vsel %vm580, 1, 0
        %v826 = vsel %vm581, 1, 0
        %v827 = vsel %vm582, 1, 0
        %v828 = vsel %vm583, 1, 0
        %v829 = vsel %vm584, 1, 0
        %v830 = vsel %vm585, 1, 0
        %v831 = vsel %vm586, 1, 0
        %v832 = vsel %vm587, 1, 0
        %v833 = vsel %vm588, 1, 0
        %v834 = vsel %vm589, 1, 0
        %v835 = vsel %vm590, 1, 0
        %v836 = vsel %vm591, 1, 0
        %v837 = vsel %vm592, 1, 0
        %v838 = vsel %vm593, 1, 0
        %839 = vset.pattern.permute.xlu0 0
        %840 = vperm.xlu0 %839, %v823
        %v841 = vpop.permute.xlu0 %840
        %842 = vset.pattern.permute.xlu0 0
        %843 = vperm.xlu0 %842, %v824
        %v844 = vpop.permute.xlu0 %843
        %845 = vset.pattern.permute.xlu0 0
        %846 = vperm.xlu0 %845, %v825
        %v847 = vpop.permute.xlu0 %846
        %848 = vset.pattern.permute.xlu0 0
        %849 = vperm.xlu0 %848, %v826
        %v850 = vpop.permute.xlu0 %849
        %851 = vset.pattern.permute.xlu0 0
        %852 = vperm.xlu0 %851, %v827
        %v853 = vpop.permute.xlu0 %852
        %854 = vset.pattern.permute.xlu0 0
        %855 = vperm.xlu0 %854, %v828
        %v856 = vpop.permute.xlu0 %855
        %857 = vset.pattern.permute.xlu0 0
        %858 = vperm.xlu0 %857, %v829
        %v859 = vpop.permute.xlu0 %858
        %860 = vset.pattern.permute.xlu0 0
        %861 = vperm.xlu0 %860, %v830
        %v862 = vpop.permute.xlu0 %861
        %863 = vset.pattern.permute.xlu0 0
        %864 = vperm.xlu0 %863, %v831
        %v865 = vpop.permute.xlu0 %864
        %866 = vset.pattern.permute.xlu0 0
        %867 = vperm.xlu0 %866, %v832
        %v868 = vpop.permute.xlu0 %867
        %869 = vset.pattern.permute.xlu0 0
        %870 = vperm.xlu0 %869, %v833
        %v871 = vpop.permute.xlu0 %870
        %872 = vset.pattern.permute.xlu0 0
        %873 = vperm.xlu0 %872, %v834
        %v874 = vpop.permute.xlu0 %873
        %875 = vset.pattern.permute.xlu0 0
        %876 = vperm.xlu0 %875, %v835
        %v877 = vpop.permute.xlu0 %876
        %878 = vset.pattern.permute.xlu0 0
        %879 = vperm.xlu0 %878, %v836
        %v880 = vpop.permute.xlu0 %879
        %881 = vset.pattern.permute.xlu0 0
        %882 = vperm.xlu0 %881, %v837
        %v883 = vpop.permute.xlu0 %882
        %884 = vset.pattern.permute.xlu0 0
        %885 = vperm.xlu0 %884, %v838
        %v886 = vpop.permute.xlu0 %885
        %vm887 = vcmp.eq.s32.totalorder %v841, 1
        %vm888 = vcmp.eq.s32.totalorder %v844, 1
        %vm889 = vcmp.eq.s32.totalorder %v847, 1
        %vm890 = vcmp.eq.s32.totalorder %v850, 1
        %vm891 = vcmp.eq.s32.totalorder %v853, 1
        %vm892 = vcmp.eq.s32.totalorder %v856, 1
        %vm893 = vcmp.eq.s32.totalorder %v859, 1
        %vm894 = vcmp.eq.s32.totalorder %v862, 1
        %vm895 = vcmp.eq.s32.totalorder %v865, 1
        %vm896 = vcmp.eq.s32.totalorder %v868, 1
        %vm897 = vcmp.eq.s32.totalorder %v871, 1
        %vm898 = vcmp.eq.s32.totalorder %v874, 1
        %vm899 = vcmp.eq.s32.totalorder %v877, 1
        %vm900 = vcmp.eq.s32.totalorder %v880, 1
        %vm901 = vcmp.eq.s32.totalorder %v883, 1
        %vm902 = vcmp.eq.s32.totalorder %v886, 1
        %v903 = vsel %vm887, %v690, -1e+30
        %v904 = vsel %vm888, %v691, -1e+30
        %v905 = vsel %vm889, %v692, -1e+30
        %v906 = vsel %vm890, %v693, -1e+30
        %v907 = vsel %vm891, %v694, -1e+30
        %v908 = vsel %vm892, %v695, -1e+30
        %v909 = vsel %vm893, %v696, -1e+30
        %v910 = vsel %vm894, %v697, -1e+30
        %v911 = vsel %vm895, %v698, -1e+30
        %v912 = vsel %vm896, %v699, -1e+30
        %v913 = vsel %vm897, %v700, -1e+30
        %v914 = vsel %vm898, %v701, -1e+30
        %v915 = vsel %vm899, %v702, -1e+30
        %v916 = vsel %vm900, %v703, -1e+30
        %v917 = vsel %vm901, %v704, -1e+30
        %v918 = vsel %vm902, %v705, -1e+30
        %v919 = vmax.f32 %v903, %v907
        %v920 = vmax.f32 %v904, %v908
        %v921 = vmax.f32 %v905, %v909
        %v922 = vmax.f32 %v906, %v910
        %v923 = vmax.f32 %v919, %v911
        %v924 = vmax.f32 %v920, %v912
        %v925 = vmax.f32 %v921, %v913
        %v926 = vmax.f32 %v922, %v914
        %v927 = vmax.f32 %v923, %v915
        %v928 = vmax.f32 %v924, %v916
        %v929 = vmax.f32 %v925, %v917
        %v930 = vmax.f32 %v926, %v918
        %v931 = vmax.f32 %v927, %v928
        %v932 = vmax.f32 %v929, %v930
        %v933 = vmax.f32 %v931, %v932
        %v934 = vrot.slane %v933, 4
        %v935 = vmax.f32 %v933, %v934
        %v936 = vrot.slane %v935, 2
        %v937 = vmax.f32 %v935, %v936
        %v938 = vrot.slane %v937, 1
        %v939 = vmax.f32 %v937, %v938
        %v940 = vsel %vm594, 1, 0
        %v941 = vsel %vm595, 1, 0
        %v942 = vsel %vm596, 1, 0
        %v943 = vsel %vm597, 1, 0
        %v944 = vsel %vm598, 1, 0
        %v945 = vsel %vm599, 1, 0
        %v946 = vsel %vm600, 1, 0
        %v947 = vsel %vm601, 1, 0
        %v948 = vsel %vm602, 1, 0
        %v949 = vsel %vm603, 1, 0
        %v950 = vsel %vm604, 1, 0
        %v951 = vsel %vm605, 1, 0
        %v952 = vsel %vm606, 1, 0
        %v953 = vsel %vm607, 1, 0
        %v954 = vsel %vm608, 1, 0
        %v955 = vsel %vm609, 1, 0
        %956 = vset.pattern.permute.xlu0 0
        %957 = vperm.xlu0 %956, %v940
        %v958 = vpop.permute.xlu0 %957
        %959 = vset.pattern.permute.xlu0 0
        %960 = vperm.xlu0 %959, %v941
        %v961 = vpop.permute.xlu0 %960
        %962 = vset.pattern.permute.xlu0 0
        %963 = vperm.xlu0 %962, %v942
        %v964 = vpop.permute.xlu0 %963
        %965 = vset.pattern.permute.xlu0 0
        %966 = vperm.xlu0 %965, %v943
        %v967 = vpop.permute.xlu0 %966
        %968 = vset.pattern.permute.xlu0 0
        %969 = vperm.xlu0 %968, %v944
        %v970 = vpop.permute.xlu0 %969
        %971 = vset.pattern.permute.xlu0 0
        %972 = vperm.xlu0 %971, %v945
        %v973 = vpop.permute.xlu0 %972
        %974 = vset.pattern.permute.xlu0 0
        %975 = vperm.xlu0 %974, %v946
        %v976 = vpop.permute.xlu0 %975
        %977 = vset.pattern.permute.xlu0 0
        %978 = vperm.xlu0 %977, %v947
        %v979 = vpop.permute.xlu0 %978
        %980 = vset.pattern.permute.xlu0 0
        %981 = vperm.xlu0 %980, %v948
        %v982 = vpop.permute.xlu0 %981
        %983 = vset.pattern.permute.xlu0 0
        %984 = vperm.xlu0 %983, %v949
        %v985 = vpop.permute.xlu0 %984
        %986 = vset.pattern.permute.xlu0 0
        %987 = vperm.xlu0 %986, %v950
        %v988 = vpop.permute.xlu0 %987
        %989 = vset.pattern.permute.xlu0 0
        %990 = vperm.xlu0 %989, %v951
        %v991 = vpop.permute.xlu0 %990
        %992 = vset.pattern.permute.xlu0 0
        %993 = vperm.xlu0 %992, %v952
        %v994 = vpop.permute.xlu0 %993
        %995 = vset.pattern.permute.xlu0 0
        %996 = vperm.xlu0 %995, %v953
        %v997 = vpop.permute.xlu0 %996
        %998 = vset.pattern.permute.xlu0 0
        %999 = vperm.xlu0 %998, %v954
        %v1000 = vpop.permute.xlu0 %999
        %1001 = vset.pattern.permute.xlu0 0
        %1002 = vperm.xlu0 %1001, %v955
        %v1003 = vpop.permute.xlu0 %1002
        %vm1004 = vcmp.eq.s32.totalorder %v958, 1
        %vm1005 = vcmp.eq.s32.totalorder %v961, 1
        %vm1006 = vcmp.eq.s32.totalorder %v964, 1
        %vm1007 = vcmp.eq.s32.totalorder %v967, 1
        %vm1008 = vcmp.eq.s32.totalorder %v970, 1
        %vm1009 = vcmp.eq.s32.totalorder %v973, 1
        %vm1010 = vcmp.eq.s32.totalorder %v976, 1
        %vm1011 = vcmp.eq.s32.totalorder %v979, 1
        %vm1012 = vcmp.eq.s32.totalorder %v982, 1
        %vm1013 = vcmp.eq.s32.totalorder %v985, 1
        %vm1014 = vcmp.eq.s32.totalorder %v988, 1
        %vm1015 = vcmp.eq.s32.totalorder %v991, 1
        %vm1016 = vcmp.eq.s32.totalorder %v994, 1
        %vm1017 = vcmp.eq.s32.totalorder %v997, 1
        %vm1018 = vcmp.eq.s32.totalorder %v1000, 1
        %vm1019 = vcmp.eq.s32.totalorder %v1003, 1
        %v1020 = vsel %vm1004, %v690, -1e+30
        %v1021 = vsel %vm1005, %v691, -1e+30
        %v1022 = vsel %vm1006, %v692, -1e+30
        %v1023 = vsel %vm1007, %v693, -1e+30
        %v1024 = vsel %vm1008, %v694, -1e+30
        %v1025 = vsel %vm1009, %v695, -1e+30
        %v1026 = vsel %vm1010, %v696, -1e+30
        %v1027 = vsel %vm1011, %v697, -1e+30
        %v1028 = vsel %vm1012, %v698, -1e+30
        %v1029 = vsel %vm1013, %v699, -1e+30
        %v1030 = vsel %vm1014, %v700, -1e+30
        %v1031 = vsel %vm1015, %v701, -1e+30
        %v1032 = vsel %vm1016, %v702, -1e+30
        %v1033 = vsel %vm1017, %v703, -1e+30
        %v1034 = vsel %vm1018, %v704, -1e+30
        %v1035 = vsel %vm1019, %v705, -1e+30
        %v1036 = vmax.f32 %v1020, %v1024
        %v1037 = vmax.f32 %v1021, %v1025
        %v1038 = vmax.f32 %v1022, %v1026
        %v1039 = vmax.f32 %v1023, %v1027
        %v1040 = vmax.f32 %v1036, %v1028
        %v1041 = vmax.f32 %v1037, %v1029
        %v1042 = vmax.f32 %v1038, %v1030
        %v1043 = vmax.f32 %v1039, %v1031
        %v1044 = vmax.f32 %v1040, %v1032
        %v1045 = vmax.f32 %v1041, %v1033
        %v1046 = vmax.f32 %v1042, %v1034
        %v1047 = vmax.f32 %v1043, %v1035
        %v1048 = vmax.f32 %v1044, %v1045
        %v1049 = vmax.f32 %v1046, %v1047
        %v1050 = vmax.f32 %v1048, %v1049
        %v1051 = vrot.slane %v1050, 4
        %v1052 = vmax.f32 %v1050, %v1051
        %v1053 = vrot.slane %v1052, 2
        %v1054 = vmax.f32 %v1052, %v1053
        %v1055 = vrot.slane %v1054, 1
        %v1056 = vmax.f32 %v1054, %v1055
        %v1057 = vsel %vm610, 1, 0
        %v1058 = vsel %vm611, 1, 0
        %v1059 = vsel %vm612, 1, 0
        %v1060 = vsel %vm613, 1, 0
        %v1061 = vsel %vm614, 1, 0
        %v1062 = vsel %vm615, 1, 0
        %v1063 = vsel %vm616, 1, 0
        %v1064 = vsel %vm617, 1, 0
        %v1065 = vsel %vm618, 1, 0
        %v1066 = vsel %vm619, 1, 0
        %v1067 = vsel %vm620, 1, 0
        %v1068 = vsel %vm621, 1, 0
        %v1069 = vsel %vm622, 1, 0
        %v1070 = vsel %vm623, 1, 0
        %v1071 = vsel %vm624, 1, 0
        %v1072 = vsel %vm625, 1, 0
        %1073 = vset.pattern.permute.xlu0 0
        %1074 = vperm.xlu0 %1073, %v1057
        %v1075 = vpop.permute.xlu0 %1074
        %1076 = vset.pattern.permute.xlu0 0
        %1077 = vperm.xlu0 %1076, %v1058
        %v1078 = vpop.permute.xlu0 %1077
        %1079 = vset.pattern.permute.xlu0 0
        %1080 = vperm.xlu0 %1079, %v1059
        %v1081 = vpop.permute.xlu0 %1080
        %1082 = vset.pattern.permute.xlu0 0
        %1083 = vperm.xlu0 %1082, %v1060
        %v1084 = vpop.permute.xlu0 %1083
        %1085 = vset.pattern.permute.xlu0 0
        %1086 = vperm.xlu0 %1085, %v1061
        %v1087 = vpop.permute.xlu0 %1086
        %1088 = vset.pattern.permute.xlu0 0
        %1089 = vperm.xlu0 %1088, %v1062
        %v1090 = vpop.permute.xlu0 %1089
        %1091 = vset.pattern.permute.xlu0 0
        %1092 = vperm.xlu0 %1091, %v1063
        %v1093 = vpop.permute.xlu0 %1092
        %1094 = vset.pattern.permute.xlu0 0
        %1095 = vperm.xlu0 %1094, %v1064
        %v1096 = vpop.permute.xlu0 %1095
        %1097 = vset.pattern.permute.xlu0 0
        %1098 = vperm.xlu0 %1097, %v1065
        %v1099 = vpop.permute.xlu0 %1098
        %1100 = vset.pattern.permute.xlu0 0
        %1101 = vperm.xlu0 %1100, %v1066
        %v1102 = vpop.permute.xlu0 %1101
        %1103 = vset.pattern.permute.xlu0 0
        %1104 = vperm.xlu0 %1103, %v1067
        %v1105 = vpop.permute.xlu0 %1104
        %1106 = vset.pattern.permute.xlu0 0
        %1107 = vperm.xlu0 %1106, %v1068
        %v1108 = vpop.permute.xlu0 %1107
        %1109 = vset.pattern.permute.xlu0 0
        %1110 = vperm.xlu0 %1109, %v1069
        %v1111 = vpop.permute.xlu0 %1110
        %1112 = vset.pattern.permute.xlu0 0
        %1113 = vperm.xlu0 %1112, %v1070
        %v1114 = vpop.permute.xlu0 %1113
        %1115 = vset.pattern.permute.xlu0 0
        %1116 = vperm.xlu0 %1115, %v1071
        %v1117 = vpop.permute.xlu0 %1116
        %1118 = vset.pattern.permute.xlu0 0
        %1119 = vperm.xlu0 %1118, %v1072
        %v1120 = vpop.permute.xlu0 %1119
        %vm1121 = vcmp.eq.s32.totalorder %v1075, 1
        %vm1122 = vcmp.eq.s32.totalorder %v1078, 1
        %vm1123 = vcmp.eq.s32.totalorder %v1081, 1
        %vm1124 = vcmp.eq.s32.totalorder %v1084, 1
        %vm1125 = vcmp.eq.s32.totalorder %v1087, 1
        %vm1126 = vcmp.eq.s32.totalorder %v1090, 1
        %vm1127 = vcmp.eq.s32.totalorder %v1093, 1
        %vm1128 = vcmp.eq.s32.totalorder %v1096, 1
        %vm1129 = vcmp.eq.s32.totalorder %v1099, 1
        %vm1130 = vcmp.eq.s32.totalorder %v1102, 1
        %vm1131 = vcmp.eq.s32.totalorder %v1105, 1
        %vm1132 = vcmp.eq.s32.totalorder %v1108, 1
        %vm1133 = vcmp.eq.s32.totalorder %v1111, 1
        %vm1134 = vcmp.eq.s32.totalorder %v1114, 1
        %vm1135 = vcmp.eq.s32.totalorder %v1117, 1
        %vm1136 = vcmp.eq.s32.totalorder %v1120, 1
        %v1137 = vsel %vm1121, %v690, -1e+30
        %v1138 = vsel %vm1122, %v691, -1e+30
        %v1139 = vsel %vm1123, %v692, -1e+30
        %v1140 = vsel %vm1124, %v693, -1e+30
        %v1141 = vsel %vm1125, %v694, -1e+30
        %v1142 = vsel %vm1126, %v695, -1e+30
        %v1143 = vsel %vm1127, %v696, -1e+30
        %v1144 = vsel %vm1128, %v697, -1e+30
        %v1145 = vsel %vm1129, %v698, -1e+30
        %v1146 = vsel %vm1130, %v699, -1e+30
        %v1147 = vsel %vm1131, %v700, -1e+30
        %v1148 = vsel %vm1132, %v701, -1e+30
        %v1149 = vsel %vm1133, %v702, -1e+30
        %v1150 = vsel %vm1134, %v703, -1e+30
        %v1151 = vsel %vm1135, %v704, -1e+30
        %v1152 = vsel %vm1136, %v705, -1e+30
        %v1153 = vmax.f32 %v1137, %v1141
        %v1154 = vmax.f32 %v1138, %v1142
        %v1155 = vmax.f32 %v1139, %v1143
        %v1156 = vmax.f32 %v1140, %v1144
        %v1157 = vmax.f32 %v1153, %v1145
        %v1158 = vmax.f32 %v1154, %v1146
        %v1159 = vmax.f32 %v1155, %v1147
        %v1160 = vmax.f32 %v1156, %v1148
        %v1161 = vmax.f32 %v1157, %v1149
        %v1162 = vmax.f32 %v1158, %v1150
        %v1163 = vmax.f32 %v1159, %v1151
        %v1164 = vmax.f32 %v1160, %v1152
        %v1165 = vmax.f32 %v1161, %v1162
        %v1166 = vmax.f32 %v1163, %v1164
        %v1167 = vmax.f32 %v1165, %v1166
        %v1168 = vrot.slane %v1167, 4
        %v1169 = vmax.f32 %v1167, %v1168
        %v1170 = vrot.slane %v1169, 2
        %v1171 = vmax.f32 %v1169, %v1170
        %v1172 = vrot.slane %v1171, 1
        %v1173 = vmax.f32 %v1171, %v1172
        %v1174 = vsel %vm626, 1, 0
        %v1175 = vsel %vm627, 1, 0
        %v1176 = vsel %vm628, 1, 0
        %v1177 = vsel %vm629, 1, 0
        %v1178 = vsel %vm630, 1, 0
        %v1179 = vsel %vm631, 1, 0
        %v1180 = vsel %vm632, 1, 0
        %v1181 = vsel %vm633, 1, 0
        %v1182 = vsel %vm634, 1, 0
        %v1183 = vsel %vm635, 1, 0
        %v1184 = vsel %vm636, 1, 0
        %v1185 = vsel %vm637, 1, 0
        %v1186 = vsel %vm638, 1, 0
        %v1187 = vsel %vm639, 1, 0
        %v1188 = vsel %vm640, 1, 0
        %v1189 = vsel %vm641, 1, 0
        %1190 = vset.pattern.permute.xlu0 0
        %1191 = vperm.xlu0 %1190, %v1174
        %v1192 = vpop.permute.xlu0 %1191
        %1193 = vset.pattern.permute.xlu0 0
        %1194 = vperm.xlu0 %1193, %v1175
        %v1195 = vpop.permute.xlu0 %1194
        %1196 = vset.pattern.permute.xlu0 0
        %1197 = vperm.xlu0 %1196, %v1176
        %v1198 = vpop.permute.xlu0 %1197
        %1199 = vset.pattern.permute.xlu0 0
        %1200 = vperm.xlu0 %1199, %v1177
        %v1201 = vpop.permute.xlu0 %1200
        %1202 = vset.pattern.permute.xlu0 0
        %1203 = vperm.xlu0 %1202, %v1178
        %v1204 = vpop.permute.xlu0 %1203
        %1205 = vset.pattern.permute.xlu0 0
        %1206 = vperm.xlu0 %1205, %v1179
        %v1207 = vpop.permute.xlu0 %1206
        %1208 = vset.pattern.permute.xlu0 0
        %1209 = vperm.xlu0 %1208, %v1180
        %v1210 = vpop.permute.xlu0 %1209
        %1211 = vset.pattern.permute.xlu0 0
        %1212 = vperm.xlu0 %1211, %v1181
        %v1213 = vpop.permute.xlu0 %1212
        %1214 = vset.pattern.permute.xlu0 0
        %1215 = vperm.xlu0 %1214, %v1182
        %v1216 = vpop.permute.xlu0 %1215
        %1217 = vset.pattern.permute.xlu0 0
        %1218 = vperm.xlu0 %1217, %v1183
        %v1219 = vpop.permute.xlu0 %1218
        %1220 = vset.pattern.permute.xlu0 0
        %1221 = vperm.xlu0 %1220, %v1184
        %v1222 = vpop.permute.xlu0 %1221
        %1223 = vset.pattern.permute.xlu0 0
        %1224 = vperm.xlu0 %1223, %v1185
        %v1225 = vpop.permute.xlu0 %1224
        %1226 = vset.pattern.permute.xlu0 0
        %1227 = vperm.xlu0 %1226, %v1186
        %v1228 = vpop.permute.xlu0 %1227
        %1229 = vset.pattern.permute.xlu0 0
        %1230 = vperm.xlu0 %1229, %v1187
        %v1231 = vpop.permute.xlu0 %1230
        %1232 = vset.pattern.permute.xlu0 0
        %1233 = vperm.xlu0 %1232, %v1188
        %v1234 = vpop.permute.xlu0 %1233
        %1235 = vset.pattern.permute.xlu0 0
        %1236 = vperm.xlu0 %1235, %v1189
        %v1237 = vpop.permute.xlu0 %1236
        %vm1238 = vcmp.eq.s32.totalorder %v1192, 1
        %vm1239 = vcmp.eq.s32.totalorder %v1195, 1
        %vm1240 = vcmp.eq.s32.totalorder %v1198, 1
        %vm1241 = vcmp.eq.s32.totalorder %v1201, 1
        %vm1242 = vcmp.eq.s32.totalorder %v1204, 1
        %vm1243 = vcmp.eq.s32.totalorder %v1207, 1
        %vm1244 = vcmp.eq.s32.totalorder %v1210, 1
        %vm1245 = vcmp.eq.s32.totalorder %v1213, 1
        %vm1246 = vcmp.eq.s32.totalorder %v1216, 1
        %vm1247 = vcmp.eq.s32.totalorder %v1219, 1
        %vm1248 = vcmp.eq.s32.totalorder %v1222, 1
        %vm1249 = vcmp.eq.s32.totalorder %v1225, 1
        %vm1250 = vcmp.eq.s32.totalorder %v1228, 1
        %vm1251 = vcmp.eq.s32.totalorder %v1231, 1
        %vm1252 = vcmp.eq.s32.totalorder %v1234, 1
        %vm1253 = vcmp.eq.s32.totalorder %v1237, 1
        %v1254 = vsel %vm1238, %v690, -1e+30
        %v1255 = vsel %vm1239, %v691, -1e+30
        %v1256 = vsel %vm1240, %v692, -1e+30
        %v1257 = vsel %vm1241, %v693, -1e+30
        %v1258 = vsel %vm1242, %v694, -1e+30
        %v1259 = vsel %vm1243, %v695, -1e+30
        %v1260 = vsel %vm1244, %v696, -1e+30
        %v1261 = vsel %vm1245, %v697, -1e+30
        %v1262 = vsel %vm1246, %v698, -1e+30
        %v1263 = vsel %vm1247, %v699, -1e+30
        %v1264 = vsel %vm1248, %v700, -1e+30
        %v1265 = vsel %vm1249, %v701, -1e+30
        %v1266 = vsel %vm1250, %v702, -1e+30
        %v1267 = vsel %vm1251, %v703, -1e+30
        %v1268 = vsel %vm1252, %v704, -1e+30
        %v1269 = vsel %vm1253, %v705, -1e+30
        %v1270 = vmax.f32 %v1254, %v1258
        %v1271 = vmax.f32 %v1255, %v1259
        %v1272 = vmax.f32 %v1256, %v1260
        %v1273 = vmax.f32 %v1257, %v1261
        %v1274 = vmax.f32 %v1270, %v1262
        %v1275 = vmax.f32 %v1271, %v1263
        %v1276 = vmax.f32 %v1272, %v1264
        %v1277 = vmax.f32 %v1273, %v1265
        %v1278 = vmax.f32 %v1274, %v1266
        %v1279 = vmax.f32 %v1275, %v1267
        %v1280 = vmax.f32 %v1276, %v1268
        %v1281 = vmax.f32 %v1277, %v1269
        %v1282 = vmax.f32 %v1278, %v1279
        %v1283 = vmax.f32 %v1280, %v1281
        %v1284 = vmax.f32 %v1282, %v1283
        %v1285 = vrot.slane %v1284, 4
        %v1286 = vmax.f32 %v1284, %v1285
        %v1287 = vrot.slane %v1286, 2
        %v1288 = vmax.f32 %v1286, %v1287
        %v1289 = vrot.slane %v1288, 1
        %v1290 = vmax.f32 %v1288, %v1289
        %v1291 = vsel %vm642, 1, 0
        %v1292 = vsel %vm643, 1, 0
        %v1293 = vsel %vm644, 1, 0
        %v1294 = vsel %vm645, 1, 0
        %v1295 = vsel %vm646, 1, 0
        %v1296 = vsel %vm647, 1, 0
        %v1297 = vsel %vm648, 1, 0
        %v1298 = vsel %vm649, 1, 0
        %v1299 = vsel %vm650, 1, 0
        %v1300 = vsel %vm651, 1, 0
        %v1301 = vsel %vm652, 1, 0
        %v1302 = vsel %vm653, 1, 0
        %v1303 = vsel %vm654, 1, 0
        %v1304 = vsel %vm655, 1, 0
        %v1305 = vsel %vm656, 1, 0
        %v1306 = vsel %vm657, 1, 0
        %1307 = vset.pattern.permute.xlu0 0
        %1308 = vperm.xlu0 %1307, %v1291
        %v1309 = vpop.permute.xlu0 %1308
        %1310 = vset.pattern.permute.xlu0 0
        %1311 = vperm.xlu0 %1310, %v1292
        %v1312 = vpop.permute.xlu0 %1311
        %1313 = vset.pattern.permute.xlu0 0
        %1314 = vperm.xlu0 %1313, %v1293
        %v1315 = vpop.permute.xlu0 %1314
        %1316 = vset.pattern.permute.xlu0 0
        %1317 = vperm.xlu0 %1316, %v1294
        %v1318 = vpop.permute.xlu0 %1317
        %1319 = vset.pattern.permute.xlu0 0
        %1320 = vperm.xlu0 %1319, %v1295
        %v1321 = vpop.permute.xlu0 %1320
        %1322 = vset.pattern.permute.xlu0 0
        %1323 = vperm.xlu0 %1322, %v1296
        %v1324 = vpop.permute.xlu0 %1323
        %1325 = vset.pattern.permute.xlu0 0
        %1326 = vperm.xlu0 %1325, %v1297
        %v1327 = vpop.permute.xlu0 %1326
        %1328 = vset.pattern.permute.xlu0 0
        %1329 = vperm.xlu0 %1328, %v1298
        %v1330 = vpop.permute.xlu0 %1329
        %1331 = vset.pattern.permute.xlu0 0
        %1332 = vperm.xlu0 %1331, %v1299
        %v1333 = vpop.permute.xlu0 %1332
        %1334 = vset.pattern.permute.xlu0 0
        %1335 = vperm.xlu0 %1334, %v1300
        %v1336 = vpop.permute.xlu0 %1335
        %1337 = vset.pattern.permute.xlu0 0
        %1338 = vperm.xlu0 %1337, %v1301
        %v1339 = vpop.permute.xlu0 %1338
        %1340 = vset.pattern.permute.xlu0 0
        %1341 = vperm.xlu0 %1340, %v1302
        %v1342 = vpop.permute.xlu0 %1341
        %1343 = vset.pattern.permute.xlu0 0
        %1344 = vperm.xlu0 %1343, %v1303
        %v1345 = vpop.permute.xlu0 %1344
        %1346 = vset.pattern.permute.xlu0 0
        %1347 = vperm.xlu0 %1346, %v1304
        %v1348 = vpop.permute.xlu0 %1347
        %1349 = vset.pattern.permute.xlu0 0
        %1350 = vperm.xlu0 %1349, %v1305
        %v1351 = vpop.permute.xlu0 %1350
        %1352 = vset.pattern.permute.xlu0 0
        %1353 = vperm.xlu0 %1352, %v1306
        %v1354 = vpop.permute.xlu0 %1353
        %vm1355 = vcmp.eq.s32.totalorder %v1309, 1
        %vm1356 = vcmp.eq.s32.totalorder %v1312, 1
        %vm1357 = vcmp.eq.s32.totalorder %v1315, 1
        %vm1358 = vcmp.eq.s32.totalorder %v1318, 1
        %vm1359 = vcmp.eq.s32.totalorder %v1321, 1
        %vm1360 = vcmp.eq.s32.totalorder %v1324, 1
        %vm1361 = vcmp.eq.s32.totalorder %v1327, 1
        %vm1362 = vcmp.eq.s32.totalorder %v1330, 1
        %vm1363 = vcmp.eq.s32.totalorder %v1333, 1
        %vm1364 = vcmp.eq.s32.totalorder %v1336, 1
        %vm1365 = vcmp.eq.s32.totalorder %v1339, 1
        %vm1366 = vcmp.eq.s32.totalorder %v1342, 1
        %vm1367 = vcmp.eq.s32.totalorder %v1345, 1
        %vm1368 = vcmp.eq.s32.totalorder %v1348, 1
        %vm1369 = vcmp.eq.s32.totalorder %v1351, 1
        %vm1370 = vcmp.eq.s32.totalorder %v1354, 1
        %v1371 = vsel %vm1355, %v690, -1e+30
        %v1372 = vsel %vm1356, %v691, -1e+30
        %v1373 = vsel %vm1357, %v692, -1e+30
        %v1374 = vsel %vm1358, %v693, -1e+30
        %v1375 = vsel %vm1359, %v694, -1e+30
        %v1376 = vsel %vm1360, %v695, -1e+30
        %v1377 = vsel %vm1361, %v696, -1e+30
        %v1378 = vsel %vm1362, %v697, -1e+30
        %v1379 = vsel %vm1363, %v698, -1e+30
        %v1380 = vsel %vm1364, %v699, -1e+30
        %v1381 = vsel %vm1365, %v700, -1e+30
        %v1382 = vsel %vm1366, %v701, -1e+30
        %v1383 = vsel %vm1367, %v702, -1e+30
        %v1384 = vsel %vm1368, %v703, -1e+30
        %v1385 = vsel %vm1369, %v704, -1e+30
        %v1386 = vsel %vm1370, %v705, -1e+30
        %v1387 = vmax.f32 %v1371, %v1375
        %v1388 = vmax.f32 %v1372, %v1376
        %v1389 = vmax.f32 %v1373, %v1377
        %v1390 = vmax.f32 %v1374, %v1378
        %v1391 = vmax.f32 %v1387, %v1379
        %v1392 = vmax.f32 %v1388, %v1380
        %v1393 = vmax.f32 %v1389, %v1381
        %v1394 = vmax.f32 %v1390, %v1382
        %v1395 = vmax.f32 %v1391, %v1383
        %v1396 = vmax.f32 %v1392, %v1384
        %v1397 = vmax.f32 %v1393, %v1385
        %v1398 = vmax.f32 %v1394, %v1386
        %v1399 = vmax.f32 %v1395, %v1396
        %v1400 = vmax.f32 %v1397, %v1398
        %v1401 = vmax.f32 %v1399, %v1400
        %v1402 = vrot.slane %v1401, 4
        %v1403 = vmax.f32 %v1401, %v1402
        %v1404 = vrot.slane %v1403, 2
        %v1405 = vmax.f32 %v1403, %v1404
        %v1406 = vrot.slane %v1405, 1
        %v1407 = vmax.f32 %v1405, %v1406
        %v1408 = vsel %vm658, 1, 0
        %v1409 = vsel %vm659, 1, 0
        %v1410 = vsel %vm660, 1, 0
        %v1411 = vsel %vm661, 1, 0
        %v1412 = vsel %vm662, 1, 0
        %v1413 = vsel %vm663, 1, 0
        %v1414 = vsel %vm664, 1, 0
        %v1415 = vsel %vm665, 1, 0
        %v1416 = vsel %vm666, 1, 0
        %v1417 = vsel %vm667, 1, 0
        %v1418 = vsel %vm668, 1, 0
        %v1419 = vsel %vm669, 1, 0
        %v1420 = vsel %vm670, 1, 0
        %v1421 = vsel %vm671, 1, 0
        %v1422 = vsel %vm672, 1, 0
        %v1423 = vsel %vm673, 1, 0
        %1424 = vset.pattern.permute.xlu0 0
        %1425 = vperm.xlu0 %1424, %v1408
        %v1426 = vpop.permute.xlu0 %1425
        %1427 = vset.pattern.permute.xlu0 0
        %1428 = vperm.xlu0 %1427, %v1409
        %v1429 = vpop.permute.xlu0 %1428
        %1430 = vset.pattern.permute.xlu0 0
        %1431 = vperm.xlu0 %1430, %v1410
        %v1432 = vpop.permute.xlu0 %1431
        %1433 = vset.pattern.permute.xlu0 0
        %1434 = vperm.xlu0 %1433, %v1411
        %v1435 = vpop.permute.xlu0 %1434
        %1436 = vset.pattern.permute.xlu0 0
        %1437 = vperm.xlu0 %1436, %v1412
        %v1438 = vpop.permute.xlu0 %1437
        %1439 = vset.pattern.permute.xlu0 0
        %1440 = vperm.xlu0 %1439, %v1413
        %v1441 = vpop.permute.xlu0 %1440
        %1442 = vset.pattern.permute.xlu0 0
        %1443 = vperm.xlu0 %1442, %v1414
        %v1444 = vpop.permute.xlu0 %1443
        %1445 = vset.pattern.permute.xlu0 0
        %1446 = vperm.xlu0 %1445, %v1415
        %v1447 = vpop.permute.xlu0 %1446
        %1448 = vset.pattern.permute.xlu0 0
        %1449 = vperm.xlu0 %1448, %v1416
        %v1450 = vpop.permute.xlu0 %1449
        %1451 = vset.pattern.permute.xlu0 0
        %1452 = vperm.xlu0 %1451, %v1417
        %v1453 = vpop.permute.xlu0 %1452
        %1454 = vset.pattern.permute.xlu0 0
        %1455 = vperm.xlu0 %1454, %v1418
        %v1456 = vpop.permute.xlu0 %1455
        %1457 = vset.pattern.permute.xlu0 0
        %1458 = vperm.xlu0 %1457, %v1419
        %v1459 = vpop.permute.xlu0 %1458
        %1460 = vset.pattern.permute.xlu0 0
        %1461 = vperm.xlu0 %1460, %v1420
        %v1462 = vpop.permute.xlu0 %1461
        %1463 = vset.pattern.permute.xlu0 0
        %1464 = vperm.xlu0 %1463, %v1421
        %v1465 = vpop.permute.xlu0 %1464
        %1466 = vset.pattern.permute.xlu0 0
        %1467 = vperm.xlu0 %1466, %v1422
        %v1468 = vpop.permute.xlu0 %1467
        %1469 = vset.pattern.permute.xlu0 0
        %1470 = vperm.xlu0 %1469, %v1423
        %v1471 = vpop.permute.xlu0 %1470
        %vm1472 = vcmp.eq.s32.totalorder %v1426, 1
        %vm1473 = vcmp.eq.s32.totalorder %v1429, 1
        %vm1474 = vcmp.eq.s32.totalorder %v1432, 1
        %vm1475 = vcmp.eq.s32.totalorder %v1435, 1
        %vm1476 = vcmp.eq.s32.totalorder %v1438, 1
        %vm1477 = vcmp.eq.s32.totalorder %v1441, 1
        %vm1478 = vcmp.eq.s32.totalorder %v1444, 1
        %vm1479 = vcmp.eq.s32.totalorder %v1447, 1
        %vm1480 = vcmp.eq.s32.totalorder %v1450, 1
        %vm1481 = vcmp.eq.s32.totalorder %v1453, 1
        %vm1482 = vcmp.eq.s32.totalorder %v1456, 1
        %vm1483 = vcmp.eq.s32.totalorder %v1459, 1
        %vm1484 = vcmp.eq.s32.totalorder %v1462, 1
        %vm1485 = vcmp.eq.s32.totalorder %v1465, 1
        %vm1486 = vcmp.eq.s32.totalorder %v1468, 1
        %vm1487 = vcmp.eq.s32.totalorder %v1471, 1
        %v1488 = vsel %vm1472, %v690, -1e+30
        %v1489 = vsel %vm1473, %v691, -1e+30
        %v1490 = vsel %vm1474, %v692, -1e+30
        %v1491 = vsel %vm1475, %v693, -1e+30
        %v1492 = vsel %vm1476, %v694, -1e+30
        %v1493 = vsel %vm1477, %v695, -1e+30
        %v1494 = vsel %vm1478, %v696, -1e+30
        %v1495 = vsel %vm1479, %v697, -1e+30
        %v1496 = vsel %vm1480, %v698, -1e+30
        %v1497 = vsel %vm1481, %v699, -1e+30
        %v1498 = vsel %vm1482, %v700, -1e+30
        %v1499 = vsel %vm1483, %v701, -1e+30
        %v1500 = vsel %vm1484, %v702, -1e+30
        %v1501 = vsel %vm1485, %v703, -1e+30
        %v1502 = vsel %vm1486, %v704, -1e+30
        %v1503 = vsel %vm1487, %v705, -1e+30
        %v1504 = vmax.f32 %v1488, %v1492
        %v1505 = vmax.f32 %v1489, %v1493
        %v1506 = vmax.f32 %v1490, %v1494
        %v1507 = vmax.f32 %v1491, %v1495
        %v1508 = vmax.f32 %v1504, %v1496
        %v1509 = vmax.f32 %v1505, %v1497
        %v1510 = vmax.f32 %v1506, %v1498
        %v1511 = vmax.f32 %v1507, %v1499
        %v1512 = vmax.f32 %v1508, %v1500
        %v1513 = vmax.f32 %v1509, %v1501
        %v1514 = vmax.f32 %v1510, %v1502
        %v1515 = vmax.f32 %v1511, %v1503
        %v1516 = vmax.f32 %v1512, %v1513
        %v1517 = vmax.f32 %v1514, %v1515
        %v1518 = vmax.f32 %v1516, %v1517
        %v1519 = vrot.slane %v1518, 4
        %v1520 = vmax.f32 %v1518, %v1519
        %v1521 = vrot.slane %v1520, 2
        %v1522 = vmax.f32 %v1520, %v1521
        %v1523 = vrot.slane %v1522, 1
        %v1524 = vmax.f32 %v1522, %v1523
        %v1525 = vsel %vm674, 1, 0
        %v1526 = vsel %vm675, 1, 0
        %v1527 = vsel %vm676, 1, 0
        %v1528 = vsel %vm677, 1, 0
        %v1529 = vsel %vm678, 1, 0
        %v1530 = vsel %vm679, 1, 0
        %v1531 = vsel %vm680, 1, 0
        %v1532 = vsel %vm681, 1, 0
        %v1533 = vsel %vm682, 1, 0
        %v1534 = vsel %vm683, 1, 0
        %v1535 = vsel %vm684, 1, 0
        %v1536 = vsel %vm685, 1, 0
        %v1537 = vsel %vm686, 1, 0
        %v1538 = vsel %vm687, 1, 0
        %v1539 = vsel %vm688, 1, 0
        %v1540 = vsel %vm689, 1, 0
        %1541 = vset.pattern.permute.xlu0 0
        %1542 = vperm.xlu0 %1541, %v1525
        %v1543 = vpop.permute.xlu0 %1542
        %1544 = vset.pattern.permute.xlu0 0
        %1545 = vperm.xlu0 %1544, %v1526
        %v1546 = vpop.permute.xlu0 %1545
        %1547 = vset.pattern.permute.xlu0 0
        %1548 = vperm.xlu0 %1547, %v1527
        %v1549 = vpop.permute.xlu0 %1548
        %1550 = vset.pattern.permute.xlu0 0
        %1551 = vperm.xlu0 %1550, %v1528
        %v1552 = vpop.permute.xlu0 %1551
        %1553 = vset.pattern.permute.xlu0 0
        %1554 = vperm.xlu0 %1553, %v1529
        %v1555 = vpop.permute.xlu0 %1554
        %1556 = vset.pattern.permute.xlu0 0
        %1557 = vperm.xlu0 %1556, %v1530
        %v1558 = vpop.permute.xlu0 %1557
        %1559 = vset.pattern.permute.xlu0 0
        %1560 = vperm.xlu0 %1559, %v1531
        %v1561 = vpop.permute.xlu0 %1560
        %1562 = vset.pattern.permute.xlu0 0
        %1563 = vperm.xlu0 %1562, %v1532
        %v1564 = vpop.permute.xlu0 %1563
        %1565 = vset.pattern.permute.xlu0 0
        %1566 = vperm.xlu0 %1565, %v1533
        %v1567 = vpop.permute.xlu0 %1566
        %1568 = vset.pattern.permute.xlu0 0
        %1569 = vperm.xlu0 %1568, %v1534
        %v1570 = vpop.permute.xlu0 %1569
        %1571 = vset.pattern.permute.xlu0 0
        %1572 = vperm.xlu0 %1571, %v1535
        %v1573 = vpop.permute.xlu0 %1572
        %1574 = vset.pattern.permute.xlu0 0
        %1575 = vperm.xlu0 %1574, %v1536
        %v1576 = vpop.permute.xlu0 %1575
        %1577 = vset.pattern.permute.xlu0 0
        %1578 = vperm.xlu0 %1577, %v1537
        %v1579 = vpop.permute.xlu0 %1578
        %1580 = vset.pattern.permute.xlu0 0
        %1581 = vperm.xlu0 %1580, %v1538
        %v1582 = vpop.permute.xlu0 %1581
        %1583 = vset.pattern.permute.xlu0 0
        %1584 = vperm.xlu0 %1583, %v1539
        %v1585 = vpop.permute.xlu0 %1584
        %1586 = vset.pattern.permute.xlu0 0
        %1587 = vperm.xlu0 %1586, %v1540
        %v1588 = vpop.permute.xlu0 %1587
        %vm1589 = vcmp.eq.s32.totalorder %v1543, 1
        %vm1590 = vcmp.eq.s32.totalorder %v1546, 1
        %vm1591 = vcmp.eq.s32.totalorder %v1549, 1
        %vm1592 = vcmp.eq.s32.totalorder %v1552, 1
        %vm1593 = vcmp.eq.s32.totalorder %v1555, 1
        %vm1594 = vcmp.eq.s32.totalorder %v1558, 1
        %vm1595 = vcmp.eq.s32.totalorder %v1561, 1
        %vm1596 = vcmp.eq.s32.totalorder %v1564, 1
        %vm1597 = vcmp.eq.s32.totalorder %v1567, 1
        %vm1598 = vcmp.eq.s32.totalorder %v1570, 1
        %vm1599 = vcmp.eq.s32.totalorder %v1573, 1
        %vm1600 = vcmp.eq.s32.totalorder %v1576, 1
        %vm1601 = vcmp.eq.s32.totalorder %v1579, 1
        %vm1602 = vcmp.eq.s32.totalorder %v1582, 1
        %vm1603 = vcmp.eq.s32.totalorder %v1585, 1
        %vm1604 = vcmp.eq.s32.totalorder %v1588, 1
        %v1605 = vsel %vm1589, %v690, -1e+30
        %v1606 = vsel %vm1590, %v691, -1e+30
        %v1607 = vsel %vm1591, %v692, -1e+30
        %v1608 = vsel %vm1592, %v693, -1e+30
        %v1609 = vsel %vm1593, %v694, -1e+30
        %v1610 = vsel %vm1594, %v695, -1e+30
        %v1611 = vsel %vm1595, %v696, -1e+30
        %v1612 = vsel %vm1596, %v697, -1e+30
        %v1613 = vsel %vm1597, %v698, -1e+30
        %v1614 = vsel %vm1598, %v699, -1e+30
        %v1615 = vsel %vm1599, %v700, -1e+30
        %v1616 = vsel %vm1600, %v701, -1e+30
        %v1617 = vsel %vm1601, %v702, -1e+30
        %v1618 = vsel %vm1602, %v703, -1e+30
        %v1619 = vsel %vm1603, %v704, -1e+30
        %v1620 = vsel %vm1604, %v705, -1e+30
        %v1621 = vmax.f32 %v1605, %v1609
        %v1622 = vmax.f32 %v1606, %v1610
        %v1623 = vmax.f32 %v1607, %v1611
        %v1624 = vmax.f32 %v1608, %v1612
        %v1625 = vmax.f32 %v1621, %v1613
        %v1626 = vmax.f32 %v1622, %v1614
        %v1627 = vmax.f32 %v1623, %v1615
        %v1628 = vmax.f32 %v1624, %v1616
        %v1629 = vmax.f32 %v1625, %v1617
        %v1630 = vmax.f32 %v1626, %v1618
        %v1631 = vmax.f32 %v1627, %v1619
        %v1632 = vmax.f32 %v1628, %v1620
        %v1633 = vmax.f32 %v1629, %v1630
        %v1634 = vmax.f32 %v1631, %v1632
        %v1635 = vmax.f32 %v1633, %v1634
        %v1636 = vrot.slane %v1635, 4
        %v1637 = vmax.f32 %v1635, %v1636
        %v1638 = vrot.slane %v1637, 2
        %v1639 = vmax.f32 %v1637, %v1638
        %v1640 = vrot.slane %v1639, 1
        %v1641 = vmax.f32 %v1639, %v1640
        %vm1642 = vcmask 1040384
        %v1643 = vsel %vm1642, %v822, %v939
        %vm1644 = vcmask 1041408
        %v1645 = vsel %vm1644, %v1643, %v1056
        %vm1646 = vcmask 1042432
        %v1647 = vsel %vm1646, %v1645, %v1173
        %vm1648 = vcmask 1043456
        %v1649 = vsel %vm1648, %v1647, %v1290
        %vm1650 = vcmask 1044480
        %v1651 = vsel %vm1650, %v1649, %v1407
        %vm1652 = vcmask 1045504
        %v1653 = vsel %vm1652, %v1651, %v1524
        %vm1654 = vcmask 1046528
        %v1655 = vsel %vm1654, %v1653, %v1641
        %v1656 = vld [vmem:[#allocation2] sm:$0xff]
        %v1657 = vmax.f32 %v1656, %v1655
        %1658 = vst [vmem:[#allocation2] sm:$0xff] %v1657
        %v1659 = vld [vmem:[%s451 + $0x8] sm:$0xff]
        %v1660 = vld [vmem:[%s451 + $0x28] sm:$0xff]
        %v1661 = vld [vmem:[%s451 + $0x48] sm:$0xff]
        %v1662 = vld [vmem:[%s451 + $0x68] sm:$0xff]
        %v1663 = vld [vmem:[%s451 + $0x88] sm:$0xff]
        %v1664 = vld [vmem:[%s451 + $0xa8] sm:$0xff]
        %v1665 = vld [vmem:[%s451 + $0xc8] sm:$0xff]
        %v1666 = vld [vmem:[%s451 + $0xe8] sm:$0xff]
        %v1667 = vld [vmem:[%s451 + $0x108] sm:$0xff]
        %v1668 = vld [vmem:[%s451 + $0x128] sm:$0xff]
        %v1669 = vld [vmem:[%s451 + $0x148] sm:$0xff]
        %v1670 = vld [vmem:[%s451 + $0x168] sm:$0xff]
        %v1671 = vld [vmem:[%s451 + $0x188] sm:$0xff]
        %v1672 = vld [vmem:[%s451 + $0x1a8] sm:$0xff]
        %v1673 = vld [vmem:[%s451 + $0x1c8] sm:$0xff]
        %v1674 = vld [vmem:[%s451 + $0x1e8] sm:$0xff]
        %v1675 = vsel %vm770, %v1659, -1e+30
        %v1676 = vsel %vm771, %v1660, -1e+30
        %v1677 = vsel %vm772, %v1661, -1e+30
        %v1678 = vsel %vm773, %v1662, -1e+30
        %v1679 = vsel %vm774, %v1663, -1e+30
        %v1680 = vsel %vm775, %v1664, -1e+30
        %v1681 = vsel %vm776, %v1665, -1e+30
        %v1682 = vsel %vm777, %v1666, -1e+30
        %v1683 = vsel %vm778, %v1667, -1e+30
        %v1684 = vsel %vm779, %v1668, -1e+30
        %v1685 = vsel %vm780, %v1669, -1e+30
        %v1686 = vsel %vm781, %v1670, -1e+30
        %v1687 = vsel %vm782, %v1671, -1e+30
        %v1688 = vsel %vm783, %v1672, -1e+30
        %v1689 = vsel %vm784, %v1673, -1e+30
        %v1690 = vsel %vm785, %v1674, -1e+30
        %v1691 = vmax.f32 %v1675, %v1679
        %v1692 = vmax.f32 %v1676, %v1680
        %v1693 = vmax.f32 %v1677, %v1681
        %v1694 = vmax.f32 %v1678, %v1682
        %v1695 = vmax.f32 %v1691, %v1683
        %v1696 = vmax.f32 %v1692, %v1684
        %v1697 = vmax.f32 %v1693, %v1685
        %v1698 = vmax.f32 %v1694, %v1686
        %v1699 = vmax.f32 %v1695, %v1687
        %v1700 = vmax.f32 %v1696, %v1688
        %v1701 = vmax.f32 %v1697, %v1689
        %v1702 = vmax.f32 %v1698, %v1690
        %v1703 = vmax.f32 %v1699, %v1700
        %v1704 = vmax.f32 %v1701, %v1702
        %v1705 = vmax.f32 %v1703, %v1704
        %v1706 = vrot.slane %v1705, 4
        %v1707 = vmax.f32 %v1705, %v1706
        %v1708 = vrot.slane %v1707, 2
        %v1709 = vmax.f32 %v1707, %v1708
        %v1710 = vrot.slane %v1709, 1
        %v1711 = vmax.f32 %v1709, %v1710
        %v1712 = vsel %vm887, %v1659, -1e+30
        %v1713 = vsel %vm888, %v1660, -1e+30
        %v1714 = vsel %vm889, %v1661, -1e+30
        %v1715 = vsel %vm890, %v1662, -1e+30
        %v1716 = vsel %vm891, %v1663, -1e+30
        %v1717 = vsel %vm892, %v1664, -1e+30
        %v1718 = vsel %vm893, %v1665, -1e+30
        %v1719 = vsel %vm894, %v1666, -1e+30
        %v1720 = vsel %vm895, %v1667, -1e+30
        %v1721 = vsel %vm896, %v1668, -1e+30
        %v1722 = vsel %vm897, %v1669, -1e+30
        %v1723 = vsel %vm898, %v1670, -1e+30
        %v1724 = vsel %vm899, %v1671, -1e+30
        %v1725 = vsel %vm900, %v1672, -1e+30
        %v1726 = vsel %vm901, %v1673, -1e+30
        %v1727 = vsel %vm902, %v1674, -1e+30
        %v1728 = vmax.f32 %v1712, %v1716
        %v1729 = vmax.f32 %v1713, %v1717
        %v1730 = vmax.f32 %v1714, %v1718
        %v1731 = vmax.f32 %v1715, %v1719
        %v1732 = vmax.f32 %v1728, %v1720
        %v1733 = vmax.f32 %v1729, %v1721
        %v1734 = vmax.f32 %v1730, %v1722
        %v1735 = vmax.f32 %v1731, %v1723
        %v1736 = vmax.f32 %v1732, %v1724
        %v1737 = vmax.f32 %v1733, %v1725
        %v1738 = vmax.f32 %v1734, %v1726
        %v1739 = vmax.f32 %v1735, %v1727
        %v1740 = vmax.f32 %v1736, %v1737
        %v1741 = vmax.f32 %v1738, %v1739
        %v1742 = vmax.f32 %v1740, %v1741
        %v1743 = vrot.slane %v1742, 4
        %v1744 = vmax.f32 %v1742, %v1743
        %v1745 = vrot.slane %v1744, 2
        %v1746 = vmax.f32 %v1744, %v1745
        %v1747 = vrot.slane %v1746, 1
        %v1748 = vmax.f32 %v1746, %v1747
        %v1749 = vsel %vm1004, %v1659, -1e+30
        %v1750 = vsel %vm1005, %v1660, -1e+30
        %v1751 = vsel %vm1006, %v1661, -1e+30
        %v1752 = vsel %vm1007, %v1662, -1e+30
        %v1753 = vsel %vm1008, %v1663, -1e+30
        %v1754 = vsel %vm1009, %v1664, -1e+30
        %v1755 = vsel %vm1010, %v1665, -1e+30
        %v1756 = vsel %vm1011, %v1666, -1e+30
        %v1757 = vsel %vm1012, %v1667, -1e+30
        %v1758 = vsel %vm1013, %v1668, -1e+30
        %v1759 = vsel %vm1014, %v1669, -1e+30
        %v1760 = vsel %vm1015, %v1670, -1e+30
        %v1761 = vsel %vm1016, %v1671, -1e+30
        %v1762 = vsel %vm1017, %v1672, -1e+30
        %v1763 = vsel %vm1018, %v1673, -1e+30
        %v1764 = vsel %vm1019, %v1674, -1e+30
        %v1765 = vmax.f32 %v1749, %v1753
        %v1766 = vmax.f32 %v1750, %v1754
        %v1767 = vmax.f32 %v1751, %v1755
        %v1768 = vmax.f32 %v1752, %v1756
        %v1769 = vmax.f32 %v1765, %v1757
        %v1770 = vmax.f32 %v1766, %v1758
        %v1771 = vmax.f32 %v1767, %v1759
        %v1772 = vmax.f32 %v1768, %v1760
        %v1773 = vmax.f32 %v1769, %v1761
        %v1774 = vmax.f32 %v1770, %v1762
        %v1775 = vmax.f32 %v1771, %v1763
        %v1776 = vmax.f32 %v1772, %v1764
        %v1777 = vmax.f32 %v1773, %v1774
        %v1778 = vmax.f32 %v1775, %v1776
        %v1779 = vmax.f32 %v1777, %v1778
        %v1780 = vrot.slane %v1779, 4
        %v1781 = vmax.f32 %v1779, %v1780
        %v1782 = vrot.slane %v1781, 2
        %v1783 = vmax.f32 %v1781, %v1782
        %v1784 = vrot.slane %v1783, 1
        %v1785 = vmax.f32 %v1783, %v1784
        %v1786 = vsel %vm1121, %v1659, -1e+30
        %v1787 = vsel %vm1122, %v1660, -1e+30
        %v1788 = vsel %vm1123, %v1661, -1e+30
        %v1789 = vsel %vm1124, %v1662, -1e+30
        %v1790 = vsel %vm1125, %v1663, -1e+30
        %v1791 = vsel %vm1126, %v1664, -1e+30
        %v1792 = vsel %vm1127, %v1665, -1e+30
        %v1793 = vsel %vm1128, %v1666, -1e+30
        %v1794 = vsel %vm1129, %v1667, -1e+30
        %v1795 = vsel %vm1130, %v1668, -1e+30
        %v1796 = vsel %vm1131, %v1669, -1e+30
        %v1797 = vsel %vm1132, %v1670, -1e+30
        %v1798 = vsel %vm1133, %v1671, -1e+30
        %v1799 = vsel %vm1134, %v1672, -1e+30
        %v1800 = vsel %vm1135, %v1673, -1e+30
        %v1801 = vsel %vm1136, %v1674, -1e+30
        %v1802 = vmax.f32 %v1786, %v1790
        %v1803 = vmax.f32 %v1787, %v1791
        %v1804 = vmax.f32 %v1788, %v1792
        %v1805 = vmax.f32 %v1789, %v1793
        %v1806 = vmax.f32 %v1802, %v1794
        %v1807 = vmax.f32 %v1803, %v1795
        %v1808 = vmax.f32 %v1804, %v1796
        %v1809 = vmax.f32 %v1805, %v1797
        %v1810 = vmax.f32 %v1806, %v1798
        %v1811 = vmax.f32 %v1807, %v1799
        %v1812 = vmax.f32 %v1808, %v1800
        %v1813 = vmax.f32 %v1809, %v1801
        %v1814 = vmax.f32 %v1810, %v1811
        %v1815 = vmax.f32 %v1812, %v1813
        %v1816 = vmax.f32 %v1814, %v1815
        %v1817 = vrot.slane %v1816, 4
        %v1818 = vmax.f32 %v1816, %v1817
        %v1819 = vrot.slane %v1818, 2
        %v1820 = vmax.f32 %v1818, %v1819
        %v1821 = vrot.slane %v1820, 1
        %v1822 = vmax.f32 %v1820, %v1821
        %v1823 = vsel %vm1238, %v1659, -1e+30
        %v1824 = vsel %vm1239, %v1660, -1e+30
        %v1825 = vsel %vm1240, %v1661, -1e+30
        %v1826 = vsel %vm1241, %v1662, -1e+30
        %v1827 = vsel %vm1242, %v1663, -1e+30
        %v1828 = vsel %vm1243, %v1664, -1e+30
        %v1829 = vsel %vm1244, %v1665, -1e+30
        %v1830 = vsel %vm1245, %v1666, -1e+30
        %v1831 = vsel %vm1246, %v1667, -1e+30
        %v1832 = vsel %vm1247, %v1668, -1e+30
        %v1833 = vsel %vm1248, %v1669, -1e+30
        %v1834 = vsel %vm1249, %v1670, -1e+30
        %v1835 = vsel %vm1250, %v1671, -1e+30
        %v1836 = vsel %vm1251, %v1672, -1e+30
        %v1837 = vsel %vm1252, %v1673, -1e+30
        %v1838 = vsel %vm1253, %v1674, -1e+30
        %v1839 = vmax.f32 %v1823, %v1827
        %v1840 = vmax.f32 %v1824, %v1828
        %v1841 = vmax.f32 %v1825, %v1829
        %v1842 = vmax.f32 %v1826, %v1830
        %v1843 = vmax.f32 %v1839, %v1831
        %v1844 = vmax.f32 %v1840, %v1832
        %v1845 = vmax.f32 %v1841, %v1833
        %v1846 = vmax.f32 %v1842, %v1834
        %v1847 = vmax.f32 %v1843, %v1835
        %v1848 = vmax.f32 %v1844, %v1836
        %v1849 = vmax.f32 %v1845, %v1837
        %v1850 = vmax.f32 %v1846, %v1838
        %v1851 = vmax.f32 %v1847, %v1848
        %v1852 = vmax.f32 %v1849, %v1850
        %v1853 = vmax.f32 %v1851, %v1852
        %v1854 = vrot.slane %v1853, 4
        %v1855 = vmax.f32 %v1853, %v1854
        %v1856 = vrot.slane %v1855, 2
        %v1857 = vmax.f32 %v1855, %v1856
        %v1858 = vrot.slane %v1857, 1
        %v1859 = vmax.f32 %v1857, %v1858
        %v1860 = vsel %vm1355, %v1659, -1e+30
        %v1861 = vsel %vm1356, %v1660, -1e+30
        %v1862 = vsel %vm1357, %v1661, -1e+30
        %v1863 = vsel %vm1358, %v1662, -1e+30
        %v1864 = vsel %vm1359, %v1663, -1e+30
        %v1865 = vsel %vm1360, %v1664, -1e+30
        %v1866 = vsel %vm1361, %v1665, -1e+30
        %v1867 = vsel %vm1362, %v1666, -1e+30
        %v1868 = vsel %vm1363, %v1667, -1e+30
        %v1869 = vsel %vm1364, %v1668, -1e+30
        %v1870 = vsel %vm1365, %v1669, -1e+30
        %v1871 = vsel %vm1366, %v1670, -1e+30
        %v1872 = vsel %vm1367, %v1671, -1e+30
        %v1873 = vsel %vm1368, %v1672, -1e+30
        %v1874 = vsel %vm1369, %v1673, -1e+30
        %v1875 = vsel %vm1370, %v1674, -1e+30
        %v1876 = vmax.f32 %v1860, %v1864
        %v1877 = vmax.f32 %v1861, %v1865
        %v1878 = vmax.f32 %v1862, %v1866
        %v1879 = vmax.f32 %v1863, %v1867
        %v1880 = vmax.f32 %v1876, %v1868
        %v1881 = vmax.f32 %v1877, %v1869
        %v1882 = vmax.f32 %v1878, %v1870
        %v1883 = vmax.f32 %v1879, %v1871
        %v1884 = vmax.f32 %v1880, %v1872
        %v1885 = vmax.f32 %v1881, %v1873
        %v1886 = vmax.f32 %v1882, %v1874
        %v1887 = vmax.f32 %v1883, %v1875
        %v1888 = vmax.f32 %v1884, %v1885
        %v1889 = vmax.f32 %v1886, %v1887
        %v1890 = vmax.f32 %v1888, %v1889
        %v1891 = vrot.slane %v1890, 4
        %v1892 = vmax.f32 %v1890, %v1891
        %v1893 = vrot.slane %v1892, 2
        %v1894 = vmax.f32 %v1892, %v1893
        %v1895 = vrot.slane %v1894, 1
        %v1896 = vmax.f32 %v1894, %v1895
        %v1897 = vsel %vm1472, %v1659, -1e+30
        %v1898 = vsel %vm1473, %v1660, -1e+30
        %v1899 = vsel %vm1474, %v1661, -1e+30
        %v1900 = vsel %vm1475, %v1662, -1e+30
        %v1901 = vsel %vm1476, %v1663, -1e+30
        %v1902 = vsel %vm1477, %v1664, -1e+30
        %v1903 = vsel %vm1478, %v1665, -1e+30
        %v1904 = vsel %vm1479, %v1666, -1e+30
        %v1905 = vsel %vm1480, %v1667, -1e+30
        %v1906 = vsel %vm1481, %v1668, -1e+30
        %v1907 = vsel %vm1482, %v1669, -1e+30
        %v1908 = vsel %vm1483, %v1670, -1e+30
        %v1909 = vsel %vm1484, %v1671, -1e+30
        %v1910 = vsel %vm1485, %v1672, -1e+30
        %v1911 = vsel %vm1486, %v1673, -1e+30
        %v1912 = vsel %vm1487, %v1674, -1e+30
        %v1913 = vmax.f32 %v1897, %v1901
        %v1914 = vmax.f32 %v1898, %v1902
        %v1915 = vmax.f32 %v1899, %v1903
        %v1916 = vmax.f32 %v1900, %v1904
        %v1917 = vmax.f32 %v1913, %v1905
        %v1918 = vmax.f32 %v1914, %v1906
        %v1919 = vmax.f32 %v1915, %v1907
        %v1920 = vmax.f32 %v1916, %v1908
        %v1921 = vmax.f32 %v1917, %v1909
        %v1922 = vmax.f32 %v1918, %v1910
        %v1923 = vmax.f32 %v1919, %v1911
        %v1924 = vmax.f32 %v1920, %v1912
        %v1925 = vmax.f32 %v1921, %v1922
        %v1926 = vmax.f32 %v1923, %v1924
        %v1927 = vmax.f32 %v1925, %v1926
        %v1928 = vrot.slane %v1927, 4
        %v1929 = vmax.f32 %v1927, %v1928
        %v1930 = vrot.slane %v1929, 2
        %v1931 = vmax.f32 %v1929, %v1930
        %v1932 = vrot.slane %v1931, 1
        %v1933 = vmax.f32 %v1931, %v1932
        %v1934 = vsel %vm1589, %v1659, -1e+30
        %v1935 = vsel %vm1590, %v1660, -1e+30
        %v1936 = vsel %vm1591, %v1661, -1e+30
        %v1937 = vsel %vm1592, %v1662, -1e+30
        %v1938 = vsel %vm1593, %v1663, -1e+30
        %v1939 = vsel %vm1594, %v1664, -1e+30
        %v1940 = vsel %vm1595, %v1665, -1e+30
        %v1941 = vsel %vm1596, %v1666, -1e+30
        %v1942 = vsel %vm1597, %v1667, -1e+30
        %v1943 = vsel %vm1598, %v1668, -1e+30
        %v1944 = vsel %vm1599, %v1669, -1e+30
        %v1945 = vsel %vm1600, %v1670, -1e+30
        %v1946 = vsel %vm1601, %v1671, -1e+30
        %v1947 = vsel %vm1602, %v1672, -1e+30
        %v1948 = vsel %vm1603, %v1673, -1e+30
        %v1949 = vsel %vm1604, %v1674, -1e+30
        %v1950 = vmax.f32 %v1934, %v1938
        %v1951 = vmax.f32 %v1935, %v1939
        %v1952 = vmax.f32 %v1936, %v1940
        %v1953 = vmax.f32 %v1937, %v1941
        %v1954 = vmax.f32 %v1950, %v1942
        %v1955 = vmax.f32 %v1951, %v1943
        %v1956 = vmax.f32 %v1952, %v1944
        %v1957 = vmax.f32 %v1953, %v1945
        %v1958 = vmax.f32 %v1954, %v1946
        %v1959 = vmax.f32 %v1955, %v1947
        %v1960 = vmax.f32 %v1956, %v1948
        %v1961 = vmax.f32 %v1957, %v1949
        %v1962 = vmax.f32 %v1958, %v1959
        %v1963 = vmax.f32 %v1960, %v1961
        %v1964 = vmax.f32 %v1962, %v1963
        %v1965 = vrot.slane %v1964, 4
        %v1966 = vmax.f32 %v1964, %v1965
        %v1967 = vrot.slane %v1966, 2
        %v1968 = vmax.f32 %v1966, %v1967
        %v1969 = vrot.slane %v1968, 1
        %v1970 = vmax.f32 %v1968, %v1969
        %v1971 = vsel %vm1642, %v1711, %v1748
        %v1972 = vsel %vm1644, %v1971, %v1785
        %v1973 = vsel %vm1646, %v1972, %v1822
        %v1974 = vsel %vm1648, %v1973, %v1859
        %v1975 = vsel %vm1650, %v1974, %v1896
        %v1976 = vsel %vm1652, %v1975, %v1933
        %v1977 = vsel %vm1654, %v1976, %v1970
        %v1978 = vld [vmem:[#allocation2 + $0x8] sm:$0xff]
        %v1979 = vmax.f32 %v1978, %v1977
        %1980 = vst [vmem:[#allocation2 + $0x8] sm:$0xff] %v1979
        %v1981 = vld [vmem:[%s451 + $0x10] sm:$0xff]
        %v1982 = vld [vmem:[%s451 + $0x30] sm:$0xff]
        %v1983 = vld [vmem:[%s451 + $0x50] sm:$0xff]
        %v1984 = vld [vmem:[%s451 + $0x70] sm:$0xff]
        %v1985 = vld [vmem:[%s451 + $0x90] sm:$0xff]
        %v1986 = vld [vmem:[%s451 + $0xb0] sm:$0xff]
        %v1987 = vld [vmem:[%s451 + $0xd0] sm:$0xff]
        %v1988 = vld [vmem:[%s451 + $0xf0] sm:$0xff]
        %v1989 = vld [vmem:[%s451 + $0x110] sm:$0xff]
        %v1990 = vld [vmem:[%s451 + $0x130] sm:$0xff]
        %v1991 = vld [vmem:[%s451 + $0x150] sm:$0xff]
        %v1992 = vld [vmem:[%s451 + $0x170] sm:$0xff]
        %v1993 = vld [vmem:[%s451 + $0x190] sm:$0xff]
        %v1994 = vld [vmem:[%s451 + $0x1b0] sm:$0xff]
        %v1995 = vld [vmem:[%s451 + $0x1d0] sm:$0xff]
        %v1996 = vld [vmem:[%s451 + $0x1f0] sm:$0xff]
        %v1997 = vsel %vm770, %v1981, -1e+30
        %v1998 = vsel %vm771, %v1982, -1e+30
        %v1999 = vsel %vm772, %v1983, -1e+30
        %v2000 = vsel %vm773, %v1984, -1e+30
        %v2001 = vsel %vm774, %v1985, -1e+30
        %v2002 = vsel %vm775, %v1986, -1e+30
        %v2003 = vsel %vm776, %v1987, -1e+30
        %v2004 = vsel %vm777, %v1988, -1e+30
        %v2005 = vsel %vm778, %v1989, -1e+30
        %v2006 = vsel %vm779, %v1990, -1e+30
        %v2007 = vsel %vm780, %v1991, -1e+30
        %v2008 = vsel %vm781, %v1992, -1e+30
        %v2009 = vsel %vm782, %v1993, -1e+30
        %v2010 = vsel %vm783, %v1994, -1e+30
        %v2011 = vsel %vm784, %v1995, -1e+30
        %v2012 = vsel %vm785, %v1996, -1e+30
        %v2013 = vmax.f32 %v1997, %v2001
        %v2014 = vmax.f32 %v1998, %v2002
        %v2015 = vmax.f32 %v1999, %v2003
        %v2016 = vmax.f32 %v2000, %v2004
        %v2017 = vmax.f32 %v2013, %v2005
        %v2018 = vmax.f32 %v2014, %v2006
        %v2019 = vmax.f32 %v2015, %v2007
        %v2020 = vmax.f32 %v2016, %v2008
        %v2021 = vmax.f32 %v2017, %v2009
        %v2022 = vmax.f32 %v2018, %v2010
        %v2023 = vmax.f32 %v2019, %v2011
        %v2024 = vmax.f32 %v2020, %v2012
        %v2025 = vmax.f32 %v2021, %v2022
        %v2026 = vmax.f32 %v2023, %v2024
        %v2027 = vmax.f32 %v2025, %v2026
        %v2028 = vrot.slane %v2027, 4
        %v2029 = vmax.f32 %v2027, %v2028
        %v2030 = vrot.slane %v2029, 2
        %v2031 = vmax.f32 %v2029, %v2030
        %v2032 = vrot.slane %v2031, 1
        %v2033 = vmax.f32 %v2031, %v2032
        %v2034 = vsel %vm887, %v1981, -1e+30
        %v2035 = vsel %vm888, %v1982, -1e+30
        %v2036 = vsel %vm889, %v1983, -1e+30
        %v2037 = vsel %vm890, %v1984, -1e+30
        %v2038 = vsel %vm891, %v1985, -1e+30
        %v2039 = vsel %vm892, %v1986, -1e+30
        %v2040 = vsel %vm893, %v1987, -1e+30
        %v2041 = vsel %vm894, %v1988, -1e+30
        %v2042 = vsel %vm895, %v1989, -1e+30
        %v2043 = vsel %vm896, %v1990, -1e+30
        %v2044 = vsel %vm897, %v1991, -1e+30
        %v2045 = vsel %vm898, %v1992, -1e+30
        %v2046 = vsel %vm899, %v1993, -1e+30
        %v2047 = vsel %vm900, %v1994, -1e+30
        %v2048 = vsel %vm901, %v1995, -1e+30
        %v2049 = vsel %vm902, %v1996, -1e+30
        %v2050 = vmax.f32 %v2034, %v2038
        %v2051 = vmax.f32 %v2035, %v2039
        %v2052 = vmax.f32 %v2036, %v2040
        %v2053 = vmax.f32 %v2037, %v2041
        %v2054 = vmax.f32 %v2050, %v2042
        %v2055 = vmax.f32 %v2051, %v2043
        %v2056 = vmax.f32 %v2052, %v2044
        %v2057 = vmax.f32 %v2053, %v2045
        %v2058 = vmax.f32 %v2054, %v2046
        %v2059 = vmax.f32 %v2055, %v2047
        %v2060 = vmax.f32 %v2056, %v2048
        %v2061 = vmax.f32 %v2057, %v2049
        %v2062 = vmax.f32 %v2058, %v2059
        %v2063 = vmax.f32 %v2060, %v2061
        %v2064 = vmax.f32 %v2062, %v2063
        %v2065 = vrot.slane %v2064, 4
        %v2066 = vmax.f32 %v2064, %v2065
        %v2067 = vrot.slane %v2066, 2
        %v2068 = vmax.f32 %v2066, %v2067
        %v2069 = vrot.slane %v2068, 1
        %v2070 = vmax.f32 %v2068, %v2069
        %v2071 = vsel %vm1004, %v1981, -1e+30
        %v2072 = vsel %vm1005, %v1982, -1e+30
        %v2073 = vsel %vm1006, %v1983, -1e+30
        %v2074 = vsel %vm1007, %v1984, -1e+30
        %v2075 = vsel %vm1008, %v1985, -1e+30
        %v2076 = vsel %vm1009, %v1986, -1e+30
        %v2077 = vsel %vm1010, %v1987, -1e+30
        %v2078 = vsel %vm1011, %v1988, -1e+30
        %v2079 = vsel %vm1012, %v1989, -1e+30
        %v2080 = vsel %vm1013, %v1990, -1e+30
        %v2081 = vsel %vm1014, %v1991, -1e+30
        %v2082 = vsel %vm1015, %v1992, -1e+30
        %v2083 = vsel %vm1016, %v1993, -1e+30
        %v2084 = vsel %vm1017, %v1994, -1e+30
        %v2085 = vsel %vm1018, %v1995, -1e+30
        %v2086 = vsel %vm1019, %v1996, -1e+30
        %v2087 = vmax.f32 %v2071, %v2075
        %v2088 = vmax.f32 %v2072, %v2076
        %v2089 = vmax.f32 %v2073, %v2077
        %v2090 = vmax.f32 %v2074, %v2078
        %v2091 = vmax.f32 %v2087, %v2079
        %v2092 = vmax.f32 %v2088, %v2080
        %v2093 = vmax.f32 %v2089, %v2081
        %v2094 = vmax.f32 %v2090, %v2082
        %v2095 = vmax.f32 %v2091, %v2083
        %v2096 = vmax.f32 %v2092, %v2084
        %v2097 = vmax.f32 %v2093, %v2085
        %v2098 = vmax.f32 %v2094, %v2086
        %v2099 = vmax.f32 %v2095, %v2096
        %v2100 = vmax.f32 %v2097, %v2098
        %v2101 = vmax.f32 %v2099, %v2100
        %v2102 = vrot.slane %v2101, 4
        %v2103 = vmax.f32 %v2101, %v2102
        %v2104 = vrot.slane %v2103, 2
        %v2105 = vmax.f32 %v2103, %v2104
        %v2106 = vrot.slane %v2105, 1
        %v2107 = vmax.f32 %v2105, %v2106
        %v2108 = vsel %vm1121, %v1981, -1e+30
        %v2109 = vsel %vm1122, %v1982, -1e+30
        %v2110 = vsel %vm1123, %v1983, -1e+30
        %v2111 = vsel %vm1124, %v1984, -1e+30
        %v2112 = vsel %vm1125, %v1985, -1e+30
        %v2113 = vsel %vm1126, %v1986, -1e+30
        %v2114 = vsel %vm1127, %v1987, -1e+30
        %v2115 = vsel %vm1128, %v1988, -1e+30
        %v2116 = vsel %vm1129, %v1989, -1e+30
        %v2117 = vsel %vm1130, %v1990, -1e+30
        %v2118 = vsel %vm1131, %v1991, -1e+30
        %v2119 = vsel %vm1132, %v1992, -1e+30
        %v2120 = vsel %vm1133, %v1993, -1e+30
        %v2121 = vsel %vm1134, %v1994, -1e+30
        %v2122 = vsel %vm1135, %v1995, -1e+30
        %v2123 = vsel %vm1136, %v1996, -1e+30
        %v2124 = vmax.f32 %v2108, %v2112
        %v2125 = vmax.f32 %v2109, %v2113
        %v2126 = vmax.f32 %v2110, %v2114
        %v2127 = vmax.f32 %v2111, %v2115
        %v2128 = vmax.f32 %v2124, %v2116
        %v2129 = vmax.f32 %v2125, %v2117
        %v2130 = vmax.f32 %v2126, %v2118
        %v2131 = vmax.f32 %v2127, %v2119
        %v2132 = vmax.f32 %v2128, %v2120
        %v2133 = vmax.f32 %v2129, %v2121
        %v2134 = vmax.f32 %v2130, %v2122
        %v2135 = vmax.f32 %v2131, %v2123
        %v2136 = vmax.f32 %v2132, %v2133
        %v2137 = vmax.f32 %v2134, %v2135
        %v2138 = vmax.f32 %v2136, %v2137
        %v2139 = vrot.slane %v2138, 4
        %v2140 = vmax.f32 %v2138, %v2139
        %v2141 = vrot.slane %v2140, 2
        %v2142 = vmax.f32 %v2140, %v2141
        %v2143 = vrot.slane %v2142, 1
        %v2144 = vmax.f32 %v2142, %v2143
        %v2145 = vsel %vm1238, %v1981, -1e+30
        %v2146 = vsel %vm1239, %v1982, -1e+30
        %v2147 = vsel %vm1240, %v1983, -1e+30
        %v2148 = vsel %vm1241, %v1984, -1e+30
        %v2149 = vsel %vm1242, %v1985, -1e+30
        %v2150 = vsel %vm1243, %v1986, -1e+30
        %v2151 = vsel %vm1244, %v1987, -1e+30
        %v2152 = vsel %vm1245, %v1988, -1e+30
        %v2153 = vsel %vm1246, %v1989, -1e+30
        %v2154 = vsel %vm1247, %v1990, -1e+30
        %v2155 = vsel %vm1248, %v1991, -1e+30
        %v2156 = vsel %vm1249, %v1992, -1e+30
        %v2157 = vsel %vm1250, %v1993, -1e+30
        %v2158 = vsel %vm1251, %v1994, -1e+30
        %v2159 = vsel %vm1252, %v1995, -1e+30
        %v2160 = vsel %vm1253, %v1996, -1e+30
        %v2161 = vmax.f32 %v2145, %v2149
        %v2162 = vmax.f32 %v2146, %v2150
        %v2163 = vmax.f32 %v2147, %v2151
        %v2164 = vmax.f32 %v2148, %v2152
        %v2165 = vmax.f32 %v2161, %v2153
        %v2166 = vmax.f32 %v2162, %v2154
        %v2167 = vmax.f32 %v2163, %v2155
        %v2168 = vmax.f32 %v2164, %v2156
        %v2169 = vmax.f32 %v2165, %v2157
        %v2170 = vmax.f32 %v2166, %v2158
        %v2171 = vmax.f32 %v2167, %v2159
        %v2172 = vmax.f32 %v2168, %v2160
        %v2173 = vmax.f32 %v2169, %v2170
        %v2174 = vmax.f32 %v2171, %v2172
        %v2175 = vmax.f32 %v2173, %v2174
        %v2176 = vrot.slane %v2175, 4
        %v2177 = vmax.f32 %v2175, %v2176
        %v2178 = vrot.slane %v2177, 2
        %v2179 = vmax.f32 %v2177, %v2178
        %v2180 = vrot.slane %v2179, 1
        %v2181 = vmax.f32 %v2179, %v2180
        %v2182 = vsel %vm1355, %v1981, -1e+30
        %v2183 = vsel %vm1356, %v1982, -1e+30
        %v2184 = vsel %vm1357, %v1983, -1e+30
        %v2185 = vsel %vm1358, %v1984, -1e+30
        %v2186 = vsel %vm1359, %v1985, -1e+30
        %v2187 = vsel %vm1360, %v1986, -1e+30
        %v2188 = vsel %vm1361, %v1987, -1e+30
        %v2189 = vsel %vm1362, %v1988, -1e+30
        %v2190 = vsel %vm1363, %v1989, -1e+30
        %v2191 = vsel %vm1364, %v1990, -1e+30
        %v2192 = vsel %vm1365, %v1991, -1e+30
        %v2193 = vsel %vm1366, %v1992, -1e+30
        %v2194 = vsel %vm1367, %v1993, -1e+30
        %v2195 = vsel %vm1368, %v1994, -1e+30
        %v2196 = vsel %vm1369, %v1995, -1e+30
        %v2197 = vsel %vm1370, %v1996, -1e+30
        %v2198 = vmax.f32 %v2182, %v2186
        %v2199 = vmax.f32 %v2183, %v2187
        %v2200 = vmax.f32 %v2184, %v2188
        %v2201 = vmax.f32 %v2185, %v2189
        %v2202 = vmax.f32 %v2198, %v2190
        %v2203 = vmax.f32 %v2199, %v2191
        %v2204 = vmax.f32 %v2200, %v2192
        %v2205 = vmax.f32 %v2201, %v2193
        %v2206 = vmax.f32 %v2202, %v2194
        %v2207 = vmax.f32 %v2203, %v2195
        %v2208 = vmax.f32 %v2204, %v2196
        %v2209 = vmax.f32 %v2205, %v2197
        %v2210 = vmax.f32 %v2206, %v2207
        %v2211 = vmax.f32 %v2208, %v2209
        %v2212 = vmax.f32 %v2210, %v2211
        %v2213 = vrot.slane %v2212, 4
        %v2214 = vmax.f32 %v2212, %v2213
        %v2215 = vrot.slane %v2214, 2
        %v2216 = vmax.f32 %v2214, %v2215
        %v2217 = vrot.slane %v2216, 1
        %v2218 = vmax.f32 %v2216, %v2217
        %v2219 = vsel %vm1472, %v1981, -1e+30
        %v2220 = vsel %vm1473, %v1982, -1e+30
        %v2221 = vsel %vm1474, %v1983, -1e+30
        %v2222 = vsel %vm1475, %v1984, -1e+30
        %v2223 = vsel %vm1476, %v1985, -1e+30
        %v2224 = vsel %vm1477, %v1986, -1e+30
        %v2225 = vsel %vm1478, %v1987, -1e+30
        %v2226 = vsel %vm1479, %v1988, -1e+30
        %v2227 = vsel %vm1480, %v1989, -1e+30
        %v2228 = vsel %vm1481, %v1990, -1e+30
        %v2229 = vsel %vm1482, %v1991, -1e+30
        %v2230 = vsel %vm1483, %v1992, -1e+30
        %v2231 = vsel %vm1484, %v1993, -1e+30
        %v2232 = vsel %vm1485, %v1994, -1e+30
        %v2233 = vsel %vm1486, %v1995, -1e+30
        %v2234 = vsel %vm1487, %v1996, -1e+30
        %v2235 = vmax.f32 %v2219, %v2223
        %v2236 = vmax.f32 %v2220, %v2224
        %v2237 = vmax.f32 %v2221, %v2225
        %v2238 = vmax.f32 %v2222, %v2226
        %v2239 = vmax.f32 %v2235, %v2227
        %v2240 = vmax.f32 %v2236, %v2228
        %v2241 = vmax.f32 %v2237, %v2229
        %v2242 = vmax.f32 %v2238, %v2230
        %v2243 = vmax.f32 %v2239, %v2231
        %v2244 = vmax.f32 %v2240, %v2232
        %v2245 = vmax.f32 %v2241, %v2233
        %v2246 = vmax.f32 %v2242, %v2234
        %v2247 = vmax.f32 %v2243, %v2244
        %v2248 = vmax.f32 %v2245, %v2246
        %v2249 = vmax.f32 %v2247, %v2248
        %v2250 = vrot.slane %v2249, 4
        %v2251 = vmax.f32 %v2249, %v2250
        %v2252 = vrot.slane %v2251, 2
        %v2253 = vmax.f32 %v2251, %v2252
        %v2254 = vrot.slane %v2253, 1
        %v2255 = vmax.f32 %v2253, %v2254
        %v2256 = vsel %vm1589, %v1981, -1e+30
        %v2257 = vsel %vm1590, %v1982, -1e+30
        %v2258 = vsel %vm1591, %v1983, -1e+30
        %v2259 = vsel %vm1592, %v1984, -1e+30
        %v2260 = vsel %vm1593, %v1985, -1e+30
        %v2261 = vsel %vm1594, %v1986, -1e+30
        %v2262 = vsel %vm1595, %v1987, -1e+30
        %v2263 = vsel %vm1596, %v1988, -1e+30
        %v2264 = vsel %vm1597, %v1989, -1e+30
        %v2265 = vsel %vm1598, %v1990, -1e+30
        %v2266 = vsel %vm1599, %v1991, -1e+30
        %v2267 = vsel %vm1600, %v1992, -1e+30
        %v2268 = vsel %vm1601, %v1993, -1e+30
        %v2269 = vsel %vm1602, %v1994, -1e+30
        %v2270 = vsel %vm1603, %v1995, -1e+30
        %v2271 = vsel %vm1604, %v1996, -1e+30
        %v2272 = vmax.f32 %v2256, %v2260
        %v2273 = vmax.f32 %v2257, %v2261
        %v2274 = vmax.f32 %v2258, %v2262
        %v2275 = vmax.f32 %v2259, %v2263
        %v2276 = vmax.f32 %v2272, %v2264
        %v2277 = vmax.f32 %v2273, %v2265
        %v2278 = vmax.f32 %v2274, %v2266
        %v2279 = vmax.f32 %v2275, %v2267
        %v2280 = vmax.f32 %v2276, %v2268
        %v2281 = vmax.f32 %v2277, %v2269
        %v2282 = vmax.f32 %v2278, %v2270
        %v2283 = vmax.f32 %v2279, %v2271
        %v2284 = vmax.f32 %v2280, %v2281
        %v2285 = vmax.f32 %v2282, %v2283
        %v2286 = vmax.f32 %v2284, %v2285
        %v2287 = vrot.slane %v2286, 4
        %v2288 = vmax.f32 %v2286, %v2287
        %v2289 = vrot.slane %v2288, 2
        %v2290 = vmax.f32 %v2288, %v2289
        %v2291 = vrot.slane %v2290, 1
        %v2292 = vmax.f32 %v2290, %v2291
        %v2293 = vsel %vm1642, %v2033, %v2070
        %v2294 = vsel %vm1644, %v2293, %v2107
        %v2295 = vsel %vm1646, %v2294, %v2144
        %v2296 = vsel %vm1648, %v2295, %v2181
        %v2297 = vsel %vm1650, %v2296, %v2218
        %v2298 = vsel %vm1652, %v2297, %v2255
        %v2299 = vsel %vm1654, %v2298, %v2292
        %v2300 = vld [vmem:[#allocation2 + $0x10] sm:$0xff]
        %v2301 = vmax.f32 %v2300, %v2299
        %2302 = vst [vmem:[#allocation2 + $0x10] sm:$0xff] %v2301
        %v2303 = vld [vmem:[%s451 + $0x18] sm:$0xff]
        %v2304 = vld [vmem:[%s451 + $0x38] sm:$0xff]
        %v2305 = vld [vmem:[%s451 + $0x58] sm:$0xff]
        %v2306 = vld [vmem:[%s451 + $0x78] sm:$0xff]
        %v2307 = vld [vmem:[%s451 + $0x98] sm:$0xff]
        %v2308 = vld [vmem:[%s451 + $0xb8] sm:$0xff]
        %v2309 = vld [vmem:[%s451 + $0xd8] sm:$0xff]
        %v2310 = vld [vmem:[%s451 + $0xf8] sm:$0xff]
        %v2311 = vld [vmem:[%s451 + $0x118] sm:$0xff]
        %v2312 = vld [vmem:[%s451 + $0x138] sm:$0xff]
        %v2313 = vld [vmem:[%s451 + $0x158] sm:$0xff]
        %v2314 = vld [vmem:[%s451 + $0x178] sm:$0xff]
        %v2315 = vld [vmem:[%s451 + $0x198] sm:$0xff]
        %v2316 = vld [vmem:[%s451 + $0x1b8] sm:$0xff]
        %v2317 = vld [vmem:[%s451 + $0x1d8] sm:$0xff]
        %v2318 = vld [vmem:[%s451 + $0x1f8] sm:$0xff]
        %v2319 = vsel %vm770, %v2303, -1e+30
        %v2320 = vsel %vm771, %v2304, -1e+30
        %v2321 = vsel %vm772, %v2305, -1e+30
        %v2322 = vsel %vm773, %v2306, -1e+30
        %v2323 = vsel %vm774, %v2307, -1e+30
        %v2324 = vsel %vm775, %v2308, -1e+30
        %v2325 = vsel %vm776, %v2309, -1e+30
        %v2326 = vsel %vm777, %v2310, -1e+30
        %v2327 = vsel %vm778, %v2311, -1e+30
        %v2328 = vsel %vm779, %v2312, -1e+30
        %v2329 = vsel %vm780, %v2313, -1e+30
        %v2330 = vsel %vm781, %v2314, -1e+30
        %v2331 = vsel %vm782, %v2315, -1e+30
        %v2332 = vsel %vm783, %v2316, -1e+30
        %v2333 = vsel %vm784, %v2317, -1e+30
        %v2334 = vsel %vm785, %v2318, -1e+30
        %v2335 = vmax.f32 %v2319, %v2323
        %v2336 = vmax.f32 %v2320, %v2324
        %v2337 = vmax.f32 %v2321, %v2325
        %v2338 = vmax.f32 %v2322, %v2326
        %v2339 = vmax.f32 %v2335, %v2327
        %v2340 = vmax.f32 %v2336, %v2328
        %v2341 = vmax.f32 %v2337, %v2329
        %v2342 = vmax.f32 %v2338, %v2330
        %v2343 = vmax.f32 %v2339, %v2331
        %v2344 = vmax.f32 %v2340, %v2332
        %v2345 = vmax.f32 %v2341, %v2333
        %v2346 = vmax.f32 %v2342, %v2334
        %v2347 = vmax.f32 %v2343, %v2344
        %v2348 = vmax.f32 %v2345, %v2346
        %v2349 = vmax.f32 %v2347, %v2348
        %v2350 = vrot.slane %v2349, 4
        %v2351 = vmax.f32 %v2349, %v2350
        %v2352 = vrot.slane %v2351, 2
        %v2353 = vmax.f32 %v2351, %v2352
        %v2354 = vrot.slane %v2353, 1
        %v2355 = vmax.f32 %v2353, %v2354
        %v2356 = vsel %vm887, %v2303, -1e+30
        %v2357 = vsel %vm888, %v2304, -1e+30
        %v2358 = vsel %vm889, %v2305, -1e+30
        %v2359 = vsel %vm890, %v2306, -1e+30
        %v2360 = vsel %vm891, %v2307, -1e+30
        %v2361 = vsel %vm892, %v2308, -1e+30
        %v2362 = vsel %vm893, %v2309, -1e+30
        %v2363 = vsel %vm894, %v2310, -1e+30
        %v2364 = vsel %vm895, %v2311, -1e+30
        %v2365 = vsel %vm896, %v2312, -1e+30
        %v2366 = vsel %vm897, %v2313, -1e+30
        %v2367 = vsel %vm898, %v2314, -1e+30
        %v2368 = vsel %vm899, %v2315, -1e+30
        %v2369 = vsel %vm900, %v2316, -1e+30
        %v2370 = vsel %vm901, %v2317, -1e+30
        %v2371 = vsel %vm902, %v2318, -1e+30
        %v2372 = vmax.f32 %v2356, %v2360
        %v2373 = vmax.f32 %v2357, %v2361
        %v2374 = vmax.f32 %v2358, %v2362
        %v2375 = vmax.f32 %v2359, %v2363
        %v2376 = vmax.f32 %v2372, %v2364
        %v2377 = vmax.f32 %v2373, %v2365
        %v2378 = vmax.f32 %v2374, %v2366
        %v2379 = vmax.f32 %v2375, %v2367
        %v2380 = vmax.f32 %v2376, %v2368
        %v2381 = vmax.f32 %v2377, %v2369
        %v2382 = vmax.f32 %v2378, %v2370
        %v2383 = vmax.f32 %v2379, %v2371
        %v2384 = vmax.f32 %v2380, %v2381
        %v2385 = vmax.f32 %v2382, %v2383
        %v2386 = vmax.f32 %v2384, %v2385
        %v2387 = vrot.slane %v2386, 4
        %v2388 = vmax.f32 %v2386, %v2387
        %v2389 = vrot.slane %v2388, 2
        %v2390 = vmax.f32 %v2388, %v2389
        %v2391 = vrot.slane %v2390, 1
        %v2392 = vmax.f32 %v2390, %v2391
        %v2393 = vsel %vm1004, %v2303, -1e+30
        %v2394 = vsel %vm1005, %v2304, -1e+30
        %v2395 = vsel %vm1006, %v2305, -1e+30
        %v2396 = vsel %vm1007, %v2306, -1e+30
        %v2397 = vsel %vm1008, %v2307, -1e+30
        %v2398 = vsel %vm1009, %v2308, -1e+30
        %v2399 = vsel %vm1010, %v2309, -1e+30
        %v2400 = vsel %vm1011, %v2310, -1e+30
        %v2401 = vsel %vm1012, %v2311, -1e+30
        %v2402 = vsel %vm1013, %v2312, -1e+30
        %v2403 = vsel %vm1014, %v2313, -1e+30
        %v2404 = vsel %vm1015, %v2314, -1e+30
        %v2405 = vsel %vm1016, %v2315, -1e+30
        %v2406 = vsel %vm1017, %v2316, -1e+30
        %v2407 = vsel %vm1018, %v2317, -1e+30
        %v2408 = vsel %vm1019, %v2318, -1e+30
        %v2409 = vmax.f32 %v2393, %v2397
        %v2410 = vmax.f32 %v2394, %v2398
        %v2411 = vmax.f32 %v2395, %v2399
        %v2412 = vmax.f32 %v2396, %v2400
        %v2413 = vmax.f32 %v2409, %v2401
        %v2414 = vmax.f32 %v2410, %v2402
        %v2415 = vmax.f32 %v2411, %v2403
        %v2416 = vmax.f32 %v2412, %v2404
        %v2417 = vmax.f32 %v2413, %v2405
        %v2418 = vmax.f32 %v2414, %v2406
        %v2419 = vmax.f32 %v2415, %v2407
        %v2420 = vmax.f32 %v2416, %v2408
        %v2421 = vmax.f32 %v2417, %v2418
        %v2422 = vmax.f32 %v2419, %v2420
        %v2423 = vmax.f32 %v2421, %v2422
        %v2424 = vrot.slane %v2423, 4
        %v2425 = vmax.f32 %v2423, %v2424
        %v2426 = vrot.slane %v2425, 2
        %v2427 = vmax.f32 %v2425, %v2426
        %v2428 = vrot.slane %v2427, 1
        %v2429 = vmax.f32 %v2427, %v2428
        %v2430 = vsel %vm1121, %v2303, -1e+30
        %v2431 = vsel %vm1122, %v2304, -1e+30
        %v2432 = vsel %vm1123, %v2305, -1e+30
        %v2433 = vsel %vm1124, %v2306, -1e+30
        %v2434 = vsel %vm1125, %v2307, -1e+30
        %v2435 = vsel %vm1126, %v2308, -1e+30
        %v2436 = vsel %vm1127, %v2309, -1e+30
        %v2437 = vsel %vm1128, %v2310, -1e+30
        %v2438 = vsel %vm1129, %v2311, -1e+30
        %v2439 = vsel %vm1130, %v2312, -1e+30
        %v2440 = vsel %vm1131, %v2313, -1e+30
        %v2441 = vsel %vm1132, %v2314, -1e+30
        %v2442 = vsel %vm1133, %v2315, -1e+30
        %v2443 = vsel %vm1134, %v2316, -1e+30
        %v2444 = vsel %vm1135, %v2317, -1e+30
        %v2445 = vsel %vm1136, %v2318, -1e+30
        %v2446 = vmax.f32 %v2430, %v2434
        %v2447 = vmax.f32 %v2431, %v2435
        %v2448 = vmax.f32 %v2432, %v2436
        %v2449 = vmax.f32 %v2433, %v2437
        %v2450 = vmax.f32 %v2446, %v2438
        %v2451 = vmax.f32 %v2447, %v2439
        %v2452 = vmax.f32 %v2448, %v2440
        %v2453 = vmax.f32 %v2449, %v2441
        %v2454 = vmax.f32 %v2450, %v2442
        %v2455 = vmax.f32 %v2451, %v2443
        %v2456 = vmax.f32 %v2452, %v2444
        %v2457 = vmax.f32 %v2453, %v2445
        %v2458 = vmax.f32 %v2454, %v2455
        %v2459 = vmax.f32 %v2456, %v2457
        %v2460 = vmax.f32 %v2458, %v2459
        %v2461 = vrot.slane %v2460, 4
        %v2462 = vmax.f32 %v2460, %v2461
        %v2463 = vrot.slane %v2462, 2
        %v2464 = vmax.f32 %v2462, %v2463
        %v2465 = vrot.slane %v2464, 1
        %v2466 = vmax.f32 %v2464, %v2465
        %v2467 = vsel %vm1238, %v2303, -1e+30
        %v2468 = vsel %vm1239, %v2304, -1e+30
        %v2469 = vsel %vm1240, %v2305, -1e+30
        %v2470 = vsel %vm1241, %v2306, -1e+30
        %v2471 = vsel %vm1242, %v2307, -1e+30
        %v2472 = vsel %vm1243, %v2308, -1e+30
        %v2473 = vsel %vm1244, %v2309, -1e+30
        %v2474 = vsel %vm1245, %v2310, -1e+30
        %v2475 = vsel %vm1246, %v2311, -1e+30
        %v2476 = vsel %vm1247, %v2312, -1e+30
        %v2477 = vsel %vm1248, %v2313, -1e+30
        %v2478 = vsel %vm1249, %v2314, -1e+30
        %v2479 = vsel %vm1250, %v2315, -1e+30
        %v2480 = vsel %vm1251, %v2316, -1e+30
        %v2481 = vsel %vm1252, %v2317, -1e+30
        %v2482 = vsel %vm1253, %v2318, -1e+30
        %v2483 = vmax.f32 %v2467, %v2471
        %v2484 = vmax.f32 %v2468, %v2472
        %v2485 = vmax.f32 %v2469, %v2473
        %v2486 = vmax.f32 %v2470, %v2474
        %v2487 = vmax.f32 %v2483, %v2475
        %v2488 = vmax.f32 %v2484, %v2476
        %v2489 = vmax.f32 %v2485, %v2477
        %v2490 = vmax.f32 %v2486, %v2478
        %v2491 = vmax.f32 %v2487, %v2479
        %v2492 = vmax.f32 %v2488, %v2480
        %v2493 = vmax.f32 %v2489, %v2481
        %v2494 = vmax.f32 %v2490, %v2482
        %v2495 = vmax.f32 %v2491, %v2492
        %v2496 = vmax.f32 %v2493, %v2494
        %v2497 = vmax.f32 %v2495, %v2496
        %v2498 = vrot.slane %v2497, 4
        %v2499 = vmax.f32 %v2497, %v2498
        %v2500 = vrot.slane %v2499, 2
        %v2501 = vmax.f32 %v2499, %v2500
        %v2502 = vrot.slane %v2501, 1
        %v2503 = vmax.f32 %v2501, %v2502
        %v2504 = vsel %vm1355, %v2303, -1e+30
        %v2505 = vsel %vm1356, %v2304, -1e+30
        %v2506 = vsel %vm1357, %v2305, -1e+30
        %v2507 = vsel %vm1358, %v2306, -1e+30
        %v2508 = vsel %vm1359, %v2307, -1e+30
        %v2509 = vsel %vm1360, %v2308, -1e+30
        %v2510 = vsel %vm1361, %v2309, -1e+30
        %v2511 = vsel %vm1362, %v2310, -1e+30
        %v2512 = vsel %vm1363, %v2311, -1e+30
        %v2513 = vsel %vm1364, %v2312, -1e+30
        %v2514 = vsel %vm1365, %v2313, -1e+30
        %v2515 = vsel %vm1366, %v2314, -1e+30
        %v2516 = vsel %vm1367, %v2315, -1e+30
        %v2517 = vsel %vm1368, %v2316, -1e+30
        %v2518 = vsel %vm1369, %v2317, -1e+30
        %v2519 = vsel %vm1370, %v2318, -1e+30
        %v2520 = vmax.f32 %v2504, %v2508
        %v2521 = vmax.f32 %v2505, %v2509
        %v2522 = vmax.f32 %v2506, %v2510
        %v2523 = vmax.f32 %v2507, %v2511
        %v2524 = vmax.f32 %v2520, %v2512
        %v2525 = vmax.f32 %v2521, %v2513
        %v2526 = vmax.f32 %v2522, %v2514
        %v2527 = vmax.f32 %v2523, %v2515
        %v2528 = vmax.f32 %v2524, %v2516
        %v2529 = vmax.f32 %v2525, %v2517
        %v2530 = vmax.f32 %v2526, %v2518
        %v2531 = vmax.f32 %v2527, %v2519
        %v2532 = vmax.f32 %v2528, %v2529
        %v2533 = vmax.f32 %v2530, %v2531
        %v2534 = vmax.f32 %v2532, %v2533
        %v2535 = vrot.slane %v2534, 4
        %v2536 = vmax.f32 %v2534, %v2535
        %v2537 = vrot.slane %v2536, 2
        %v2538 = vmax.f32 %v2536, %v2537
        %v2539 = vrot.slane %v2538, 1
        %v2540 = vmax.f32 %v2538, %v2539
        %v2541 = vsel %vm1472, %v2303, -1e+30
        %v2542 = vsel %vm1473, %v2304, -1e+30
        %v2543 = vsel %vm1474, %v2305, -1e+30
        %v2544 = vsel %vm1475, %v2306, -1e+30
        %v2545 = vsel %vm1476, %v2307, -1e+30
        %v2546 = vsel %vm1477, %v2308, -1e+30
        %v2547 = vsel %vm1478, %v2309, -1e+30
        %v2548 = vsel %vm1479, %v2310, -1e+30
        %v2549 = vsel %vm1480, %v2311, -1e+30
        %v2550 = vsel %vm1481, %v2312, -1e+30
        %v2551 = vsel %vm1482, %v2313, -1e+30
        %v2552 = vsel %vm1483, %v2314, -1e+30
        %v2553 = vsel %vm1484, %v2315, -1e+30
        %v2554 = vsel %vm1485, %v2316, -1e+30
        %v2555 = vsel %vm1486, %v2317, -1e+30
        %v2556 = vsel %vm1487, %v2318, -1e+30
        %v2557 = vmax.f32 %v2541, %v2545
        %v2558 = vmax.f32 %v2542, %v2546
        %v2559 = vmax.f32 %v2543, %v2547
        %v2560 = vmax.f32 %v2544, %v2548
        %v2561 = vmax.f32 %v2557, %v2549
        %v2562 = vmax.f32 %v2558, %v2550
        %v2563 = vmax.f32 %v2559, %v2551
        %v2564 = vmax.f32 %v2560, %v2552
        %v2565 = vmax.f32 %v2561, %v2553
        %v2566 = vmax.f32 %v2562, %v2554
        %v2567 = vmax.f32 %v2563, %v2555
        %v2568 = vmax.f32 %v2564, %v2556
        %v2569 = vmax.f32 %v2565, %v2566
        %v2570 = vmax.f32 %v2567, %v2568
        %v2571 = vmax.f32 %v2569, %v2570
        %v2572 = vrot.slane %v2571, 4
        %v2573 = vmax.f32 %v2571, %v2572
        %v2574 = vrot.slane %v2573, 2
        %v2575 = vmax.f32 %v2573, %v2574
        %v2576 = vrot.slane %v2575, 1
        %v2577 = vmax.f32 %v2575, %v2576
        %v2578 = vsel %vm1589, %v2303, -1e+30
        %v2579 = vsel %vm1590, %v2304, -1e+30
        %v2580 = vsel %vm1591, %v2305, -1e+30
        %v2581 = vsel %vm1592, %v2306, -1e+30
        %v2582 = vsel %vm1593, %v2307, -1e+30
        %v2583 = vsel %vm1594, %v2308, -1e+30
        %v2584 = vsel %vm1595, %v2309, -1e+30
        %v2585 = vsel %vm1596, %v2310, -1e+30
        %v2586 = vsel %vm1597, %v2311, -1e+30
        %v2587 = vsel %vm1598, %v2312, -1e+30
        %v2588 = vsel %vm1599, %v2313, -1e+30
        %v2589 = vsel %vm1600, %v2314, -1e+30
        %v2590 = vsel %vm1601, %v2315, -1e+30
        %v2591 = vsel %vm1602, %v2316, -1e+30
        %v2592 = vsel %vm1603, %v2317, -1e+30
        %v2593 = vsel %vm1604, %v2318, -1e+30
        %v2594 = vmax.f32 %v2578, %v2582
        %v2595 = vmax.f32 %v2579, %v2583
        %v2596 = vmax.f32 %v2580, %v2584
        %v2597 = vmax.f32 %v2581, %v2585
        %v2598 = vmax.f32 %v2594, %v2586
        %v2599 = vmax.f32 %v2595, %v2587
        %v2600 = vmax.f32 %v2596, %v2588
        %v2601 = vmax.f32 %v2597, %v2589
        %v2602 = vmax.f32 %v2598, %v2590
        %v2603 = vmax.f32 %v2599, %v2591
        %v2604 = vmax.f32 %v2600, %v2592
        %v2605 = vmax.f32 %v2601, %v2593
        %v2606 = vmax.f32 %v2602, %v2603
        %v2607 = vmax.f32 %v2604, %v2605
        %v2608 = vmax.f32 %v2606, %v2607
        %v2609 = vrot.slane %v2608, 4
        %v2610 = vmax.f32 %v2608, %v2609
        %v2611 = vrot.slane %v2610, 2
        %v2612 = vmax.f32 %v2610, %v2611
        %v2613 = vrot.slane %v2612, 1
        %v2614 = vmax.f32 %v2612, %v2613
        %v2615 = vsel %vm1642, %v2355, %v2392
        %v2616 = vsel %vm1644, %v2615, %v2429
        %v2617 = vsel %vm1646, %v2616, %v2466
        %v2618 = vsel %vm1648, %v2617, %v2503
        %v2619 = vsel %vm1650, %v2618, %v2540
        %v2620 = vsel %vm1652, %v2619, %v2577
        %v2621 = vsel %vm1654, %v2620, %v2614
        %v2622 = vld [vmem:[#allocation2 + $0x18] sm:$0xff]
        %v2623 = vmax.f32 %v2622, %v2621
        %2624 = vst [vmem:[#allocation2 + $0x18] sm:$0xff] %v2623
        %p2625 = scmp.eq.s32.totalorder %s31, 2
        // Predicated region
        $region105: #{tpu_custom_call.1} parent=63 // pred_check
          %p2626 = pneg %p2625
        $region106: #{tpu_custom_call.1} parent=63 // pred_check_branch
          %2628 = sbr.rel (%p2626) target = $region108
        $region107: #{tpu_custom_call.1} parent=63 // pred_region
          %v2629 = vld [vmem:[#allocation2] sm:$0xff]
          %v2630 = vld [vmem:[#allocation2 + $0x8] sm:$0xff]
          %v2631 = vld [vmem:[#allocation2 + $0x10] sm:$0xff]
          %v2632 = vld [vmem:[#allocation2 + $0x18] sm:$0xff]
          %v2633 = vld [vmem:[#allocation9] sm:$0xf]
          %v2634 = vld [vmem:[#allocation10] sm:$0xf]
          %v2635 = vadd.f32 %v2629, %v2630
          %v2636 = vadd.f32 %v2635, %v2631
          %v2637 = vadd.f32 %v2636, %v2632
          %2638 = vadd.xlane.f32.xlu0 %v2637
          %v2639 = vpop.xlane.xlu0 %2638
          %v2640 = vrcp.pop 512.0
          %v2641 = vmul.f32 512.0, %v2640
          %v2642 = vsub.f32 1.0, %v2641
          %v2643 = vmul.f32 %v2640, %v2642
          %v2644 = vadd.f32 %v2640, %v2643
          %vm2645 = vweird.f32 %v2640
          %v2646 = vsel %vm2645, %v2640, %v2644
          %v2647 = vmul.f32 %v2639, %v2646
          %v2648 = vsub.f32 %v2629, %v2647
          %v2649 = vsub.f32 %v2630, %v2647
          %v2650 = vsub.f32 %v2631, %v2647
          %v2651 = vsub.f32 %v2632, %v2647
          %v2652 = vmul.f32 %v2648, %v2648
          %v2653 = vmul.f32 %v2649, %v2649
          %v2654 = vmul.f32 %v2650, %v2650
          %v2655 = vmul.f32 %v2651, %v2651
          %v2656 = vadd.f32 %v2652, %v2653
          %v2657 = vadd.f32 %v2656, %v2654
          %v2658 = vadd.f32 %v2657, %v2655
          %2659 = vadd.xlane.f32.xlu0 %v2658
          %v2660 = vpop.xlane.xlu0 %2659
          %v2661 = vmul.f32 %v2660, %v2646
          %v2662 = vadd.f32 %v2661, 1e-05
          %v2663 = vrsqrt.pop %v2662
          %v2664 = vmul.f32 %v2663, %v2662
          %v2665 = vmul.f32 %v2664, %v2663
          %v2666 = vmul.f32 0.5, %v2665
          %v2667 = vsub.f32 1.5, %v2666
          %v2668 = vmul.f32 %v2663, %v2667
          %vm2669 = vweird.f32 %v2662
          %vm2670 = vweird.f32 %v2663
          %vm2671 = vmor %vm2669, %vm2670
          %v2672 = vsel %vm2671, %v2663, %v2668
          %v2673 = vmul.f32 %v2648, %v2672
          %v2674 = vmul.f32 %v2649, %v2672
          %v2675 = vmul.f32 %v2650, %v2672
          %v2676 = vmul.f32 %v2651, %v2672
          %v2678 = vperm.slane %v2633, 0
          %v2679 = vperm.slane %v2633, 1
          %v2680 = vperm.slane %v2633, 2
          %v2681 = vperm.slane %v2633, 3
          %v2686 = vmul.f32 %v2673, %v2678
          %v2687 = vmul.f32 %v2674, %v2679
          %v2688 = vmul.f32 %v2675, %v2680
          %v2689 = vmul.f32 %v2676, %v2681
          %v2691 = vperm.slane %v2634, 0
          %v2692 = vperm.slane %v2634, 1
          %v2693 = vperm.slane %v2634, 2
          %v2694 = vperm.slane %v2634, 3
          %v2699 = vadd.f32 %v2686, %v2691
          %v2700 = vadd.f32 %v2687, %v2692
          %v2701 = vadd.f32 %v2688, %v2693
          %v2702 = vadd.f32 %v2689, %v2694
          %vm2703 = vcmp.gt.f32.partialorder %v2699, 0.0
          %vm2704 = vcmp.gt.f32.partialorder %v2700, 0.0
          %vm2705 = vcmp.gt.f32.partialorder %v2701, 0.0
          %vm2706 = vcmp.gt.f32.partialorder %v2702, 0.0
          %v2707 = vmul.f32 %v2699, 1.442695
          %v2708 = vpow.pop %v2707
          %v2709 = vmul.f32 %v2700, 1.442695
          %v2710 = vpow.pop %v2709
          %v2711 = vmul.f32 %v2701, 1.442695
          %v2712 = vpow.pop %v2711
          %v2713 = vmul.f32 %v2702, 1.442695
          %v2714 = vpow.pop %v2713
          %v2715 = vsub.f32 %v2708, 1.0
          %v2716 = vsub.f32 %v2710, 1.0
          %v2717 = vsub.f32 %v2712, 1.0
          %v2718 = vsub.f32 %v2714, 1.0
          %v2719 = vmul.f32 %v2715, 1.6732632
          %v2720 = vmul.f32 %v2716, 1.6732632
          %v2721 = vmul.f32 %v2717, 1.6732632
          %v2722 = vmul.f32 %v2718, 1.6732632
          %v2723 = vsel %vm2703, %v2699, %v2719
          %v2724 = vsel %vm2704, %v2700, %v2720
          %v2725 = vsel %vm2705, %v2701, %v2721
          %v2726 = vsel %vm2706, %v2702, %v2722
          %v2727 = vmul.f32 %v2723, 1.050701
          %v2728 = vmul.f32 %v2724, 1.050701
          %v2729 = vmul.f32 %v2725, 1.050701
          %v2730 = vmul.f32 %v2726, 1.050701
          %v2731 = vld [vmem:[#allocation7] sm:$0xff]
          %2732 = vst [vmem:[#allocation3] sm:$0xff] %v2731
          %2733 = vst [vmem:[#allocation3 + $0x8] sm:$0xff] %v2727
          %2734 = vst [vmem:[#allocation3 + $0x10] sm:$0xff] %v2728
          %2735 = vst [vmem:[#allocation3 + $0x18] sm:$0xff] %v2729
          %2736 = vst [vmem:[#allocation3 + $0x20] sm:$0xff] %v2730
          %v2737 = vld [vmem:[#allocation3] sm:$0xff]
          %v2738 = vld [vmem:[#allocation3 + $0x8] sm:$0xff]
          %v2739 = vld [vmem:[#allocation3 + $0x10] sm:$0xff]
          %v2740 = vld [vmem:[#allocation3 + $0x18] sm:$0xff]
          %v2741 = vld [vmem:[#allocation3 + $0x20] sm:$0xff]
          %v2742 = vld [vmem:[#allocation12] sm:$0xff]
          %v2743 = vld [vmem:[#allocation12 + $0x8] sm:$0xff]
          %v2744 = vld [vmem:[#allocation12 + $0x10] sm:$0xff]
          %v2745 = vld [vmem:[#allocation12 + $0x18] sm:$0xff]
          %v2746 = vld [vmem:[#allocation12 + $0x20] sm:$0xff]
          %v2747 = vld [vmem:[#allocation12 + $0x28] sm:$0xff]
          %v2748 = vld [vmem:[#allocation12 + $0x30] sm:$0xff]
          %v2749 = vld [vmem:[#allocation12 + $0x38] sm:$0xff]
          %v2750 = vld [vmem:[#allocation12 + $0x40] sm:$0xff]
          %v2751 = vld [vmem:[#allocation12 + $0x48] sm:$0xff]
          %v2752 = vld [vmem:[#allocation12 + $0x50] sm:$0xff]
          %v2753 = vld [vmem:[#allocation12 + $0x58] sm:$0xff]
          %v2754 = vld [vmem:[#allocation12 + $0x60] sm:$0xff]
          %v2755 = vld [vmem:[#allocation12 + $0x68] sm:$0xff]
          %v2756 = vld [vmem:[#allocation12 + $0x70] sm:$0xff]
          %v2757 = vld [vmem:[#allocation12 + $0x78] sm:$0xff]
          %v2758 = vld [vmem:[#allocation12 + $0x80] sm:$0xff]
          %v2759 = vld [vmem:[#allocation12 + $0x88] sm:$0xff]
          %v2760 = vld [vmem:[#allocation12 + $0x90] sm:$0xff]
          %v2761 = vld [vmem:[#allocation12 + $0x98] sm:$0xff]
          %v2762 = vld [vmem:[#allocation12 + $0xa0] sm:$0xff]
          %v2763 = vld [vmem:[#allocation12 + $0xa8] sm:$0xff]
          %v2764 = vld [vmem:[#allocation12 + $0xb0] sm:$0xff]
          %v2765 = vld [vmem:[#allocation12 + $0xb8] sm:$0xff]
          %v2766 = vld [vmem:[#allocation12 + $0xc0] sm:$0xff]
          %v2767 = vld [vmem:[#allocation12 + $0xc8] sm:$0xff]
          %v2768 = vld [vmem:[#allocation12 + $0xd0] sm:$0xff]
          %v2769 = vld [vmem:[#allocation12 + $0xd8] sm:$0xff]
          %v2770 = vld [vmem:[#allocation12 + $0xe0] sm:$0xff]
          %v2771 = vld [vmem:[#allocation12 + $0xe8] sm:$0xff]
          %v2772 = vld [vmem:[#allocation12 + $0xf0] sm:$0xff]
          %v2773 = vld [vmem:[#allocation12 + $0xf8] sm:$0xff]
          %v2774 = vld [vmem:[#allocation12 + $0x100] sm:$0xff]
          %v2775 = vld [vmem:[#allocation12 + $0x108] sm:$0xff]
          %v2776 = vld [vmem:[#allocation12 + $0x110] sm:$0xff]
          %v2777 = vld [vmem:[#allocation12 + $0x118] sm:$0xff]
          %v2778 = vld [vmem:[#allocation12 + $0x120] sm:$0xff]
          %v2779 = vld [vmem:[#allocation12 + $0x128] sm:$0xff]
          %v2780 = vld [vmem:[#allocation12 + $0x130] sm:$0xff]
          %v2781 = vld [vmem:[#allocation12 + $0x138] sm:$0xff]
          %v2782 = vld [vmem:[#allocation12 + $0x140] sm:$0xff]
          %v2783 = vld [vmem:[#allocation12 + $0x148] sm:$0xff]
          %v2784 = vld [vmem:[#allocation12 + $0x150] sm:$0xff]
          %v2785 = vld [vmem:[#allocation12 + $0x158] sm:$0xff]
          %v2786 = vld [vmem:[#allocation12 + $0x160] sm:$0xff]
          %v2787 = vld [vmem:[#allocation12 + $0x168] sm:$0xff]
          %v2788 = vld [vmem:[#allocation12 + $0x170] sm:$0xff]
          %v2789 = vld [vmem:[#allocation12 + $0x178] sm:$0xff]
          %v2790 = vld [vmem:[#allocation12 + $0x180] sm:$0xff]
          %v2791 = vld [vmem:[#allocation12 + $0x188] sm:$0xff]
          %v2792 = vld [vmem:[#allocation12 + $0x190] sm:$0xff]
          %v2793 = vld [vmem:[#allocation12 + $0x198] sm:$0xff]
          %v2794 = vld [vmem:[#allocation12 + $0x1a0] sm:$0xff]
          %v2795 = vld [vmem:[#allocation12 + $0x1a8] sm:$0xff]
          %v2796 = vld [vmem:[#allocation12 + $0x1b0] sm:$0xff]
          %v2797 = vld [vmem:[#allocation12 + $0x1b8] sm:$0xff]
          %v2798 = vld [vmem:[#allocation12 + $0x1c0] sm:$0xff]
          %v2799 = vld [vmem:[#allocation12 + $0x1c8] sm:$0xff]
          %v2800 = vld [vmem:[#allocation12 + $0x1d0] sm:$0xff]
          %v2801 = vld [vmem:[#allocation12 + $0x1d8] sm:$0xff]
          %v2802 = vld [vmem:[#allocation12 + $0x1e0] sm:$0xff]
          %v2803 = vld [vmem:[#allocation12 + $0x1e8] sm:$0xff]
          %v2804 = vld [vmem:[#allocation12 + $0x1f0] sm:$0xff]
          %v2805 = vld [vmem:[#allocation12 + $0x1f8] sm:$0xff]
          %v2806 = vld [vmem:[#allocation12 + $0x200] sm:$0xff]
          %v2807 = vld [vmem:[#allocation12 + $0x208] sm:$0xff]
          %v2808 = vld [vmem:[#allocation12 + $0x210] sm:$0xff]
          %v2809 = vld [vmem:[#allocation12 + $0x218] sm:$0xff]
          %v2810 = vld [vmem:[#allocation12 + $0x220] sm:$0xff]
          %v2811 = vld [vmem:[#allocation12 + $0x228] sm:$0xff]
          %v2812 = vld [vmem:[#allocation12 + $0x230] sm:$0xff]
          %v2813 = vld [vmem:[#allocation12 + $0x238] sm:$0xff]
          %v2814 = vld [vmem:[#allocation12 + $0x240] sm:$0xff]
          %v2815 = vld [vmem:[#allocation12 + $0x248] sm:$0xff]
          %v2816 = vld [vmem:[#allocation12 + $0x250] sm:$0xff]
          %v2817 = vld [vmem:[#allocation12 + $0x258] sm:$0xff]
          %v2818 = vld [vmem:[#allocation12 + $0x260] sm:$0xff]
          %v2819 = vld [vmem:[#allocation12 + $0x268] sm:$0xff]
          %v2820 = vld [vmem:[#allocation12 + $0x270] sm:$0xff]
          %v2821 = vld [vmem:[#allocation12 + $0x278] sm:$0xff]
          %v2822 = vld [vmem:[#allocation12 + $0x280] sm:$0xff]
          %v2823 = vld [vmem:[#allocation12 + $0x288] sm:$0xff]
          %v2824 = vld [vmem:[#allocation12 + $0x290] sm:$0xff]
          %v2825 = vld [vmem:[#allocation12 + $0x298] sm:$0xff]
          %v2826 = vld [vmem:[#allocation12 + $0x2a0] sm:$0xff]
          %v2827 = vld [vmem:[#allocation12 + $0x2a8] sm:$0xff]
          %v2828 = vld [vmem:[#allocation12 + $0x2b0] sm:$0xff]
          %v2829 = vld [vmem:[#allocation12 + $0x2b8] sm:$0xff]
          %v2830 = vld [vmem:[#allocation12 + $0x2c0] sm:$0xff]
          %v2831 = vld [vmem:[#allocation12 + $0x2c8] sm:$0xff]
          %v2832 = vld [vmem:[#allocation12 + $0x2d0] sm:$0xff]
          %v2833 = vld [vmem:[#allocation12 + $0x2d8] sm:$0xff]
          %v2834 = vld [vmem:[#allocation12 + $0x2e0] sm:$0xff]
          %v2835 = vld [vmem:[#allocation12 + $0x2e8] sm:$0xff]
          %v2836 = vld [vmem:[#allocation12 + $0x2f0] sm:$0xff]
          %v2837 = vld [vmem:[#allocation12 + $0x2f8] sm:$0xff]
          %v2838 = vld [vmem:[#allocation12 + $0x300] sm:$0xff]
          %v2839 = vld [vmem:[#allocation12 + $0x308] sm:$0xff]
          %v2840 = vld [vmem:[#allocation12 + $0x310] sm:$0xff]
          %v2841 = vld [vmem:[#allocation12 + $0x318] sm:$0xff]
          %v2842 = vld [vmem:[#allocation12 + $0x320] sm:$0xff]
          %v2843 = vld [vmem:[#allocation12 + $0x328] sm:$0xff]
          %v2844 = vld [vmem:[#allocation12 + $0x330] sm:$0xff]
          %v2845 = vld [vmem:[#allocation12 + $0x338] sm:$0xff]
          %v2846 = vld [vmem:[#allocation12 + $0x340] sm:$0xff]
          %v2847 = vld [vmem:[#allocation12 + $0x348] sm:$0xff]
          %v2848 = vld [vmem:[#allocation12 + $0x350] sm:$0xff]
          %v2849 = vld [vmem:[#allocation12 + $0x358] sm:$0xff]
          %v2850 = vld [vmem:[#allocation12 + $0x360] sm:$0xff]
          %v2851 = vld [vmem:[#allocation12 + $0x368] sm:$0xff]
          %v2852 = vld [vmem:[#allocation12 + $0x370] sm:$0xff]
          %v2853 = vld [vmem:[#allocation12 + $0x378] sm:$0xff]
          %v2854 = vld [vmem:[#allocation12 + $0x380] sm:$0xff]
          %v2855 = vld [vmem:[#allocation12 + $0x388] sm:$0xff]
          %v2856 = vld [vmem:[#allocation12 + $0x390] sm:$0xff]
          %v2857 = vld [vmem:[#allocation12 + $0x398] sm:$0xff]
          %v2858 = vld [vmem:[#allocation12 + $0x3a0] sm:$0xff]
          %v2859 = vld [vmem:[#allocation12 + $0x3a8] sm:$0xff]
          %v2860 = vld [vmem:[#allocation12 + $0x3b0] sm:$0xff]
          %v2861 = vld [vmem:[#allocation12 + $0x3b8] sm:$0xff]
          %v2862 = vld [vmem:[#allocation12 + $0x3c0] sm:$0xff]
          %v2863 = vld [vmem:[#allocation12 + $0x3c8] sm:$0xff]
          %v2864 = vld [vmem:[#allocation12 + $0x3d0] sm:$0xff]
          %v2865 = vld [vmem:[#allocation12 + $0x3d8] sm:$0xff]
          %v2866 = vld [vmem:[#allocation12 + $0x3e0] sm:$0xff]
          %v2867 = vld [vmem:[#allocation12 + $0x3e8] sm:$0xff]
          %v2868 = vld [vmem:[#allocation12 + $0x3f0] sm:$0xff]
          %v2869 = vld [vmem:[#allocation12 + $0x3f8] sm:$0xff]
          %v2870 = vld [vmem:[#allocation12 + $0x400] sm:$0xff]
          %v2871 = vld [vmem:[#allocation12 + $0x408] sm:$0xff]
          %v2872 = vld [vmem:[#allocation12 + $0x410] sm:$0xff]
          %v2873 = vld [vmem:[#allocation12 + $0x418] sm:$0xff]
          %v2874 = vld [vmem:[#allocation12 + $0x420] sm:$0xff]
          %v2875 = vld [vmem:[#allocation12 + $0x428] sm:$0xff]
          %v2876 = vld [vmem:[#allocation12 + $0x430] sm:$0xff]
          %v2877 = vld [vmem:[#allocation12 + $0x438] sm:$0xff]
          %v2878 = vld [vmem:[#allocation12 + $0x440] sm:$0xff]
          %v2879 = vld [vmem:[#allocation12 + $0x448] sm:$0xff]
          %v2880 = vld [vmem:[#allocation12 + $0x450] sm:$0xff]
          %v2881 = vld [vmem:[#allocation12 + $0x458] sm:$0xff]
          %v2882 = vld [vmem:[#allocation12 + $0x460] sm:$0xff]
          %v2883 = vld [vmem:[#allocation12 + $0x468] sm:$0xff]
          %v2884 = vld [vmem:[#allocation12 + $0x470] sm:$0xff]
          %v2885 = vld [vmem:[#allocation12 + $0x478] sm:$0xff]
          %v2886 = vld [vmem:[#allocation12 + $0x480] sm:$0xff]
          %v2887 = vld [vmem:[#allocation12 + $0x488] sm:$0xff]
          %v2888 = vld [vmem:[#allocation12 + $0x490] sm:$0xff]
          %v2889 = vld [vmem:[#allocation12 + $0x498] sm:$0xff]
          %v2890 = vld [vmem:[#allocation12 + $0x4a0] sm:$0xff]
          %v2891 = vld [vmem:[#allocation12 + $0x4a8] sm:$0xff]
          %v2892 = vld [vmem:[#allocation12 + $0x4b0] sm:$0xff]
          %v2893 = vld [vmem:[#allocation12 + $0x4b8] sm:$0xff]
          %v2894 = vld [vmem:[#allocation12 + $0x4c0] sm:$0xff]
          %v2895 = vld [vmem:[#allocation12 + $0x4c8] sm:$0xff]
          %v2896 = vld [vmem:[#allocation12 + $0x4d0] sm:$0xff]
          %v2897 = vld [vmem:[#allocation12 + $0x4d8] sm:$0xff]
          %v2898 = vld [vmem:[#allocation12 + $0x4e0] sm:$0xff]
          %v2899 = vld [vmem:[#allocation12 + $0x4e8] sm:$0xff]
          %v2900 = vld [vmem:[#allocation12 + $0x4f0] sm:$0xff]
          %v2901 = vld [vmem:[#allocation12 + $0x4f8] sm:$0xff]
          %v2902 = vld [vmem:[#allocation12 + $0x500] sm:$0xff]
          %v2903 = vld [vmem:[#allocation12 + $0x508] sm:$0xff]
          %v2904 = vld [vmem:[#allocation12 + $0x510] sm:$0xff]
          %v2905 = vld [vmem:[#allocation12 + $0x518] sm:$0xff]
          %v2906 = vld [vmem:[#allocation12 + $0x520] sm:$0xff]
          %v2907 = vld [vmem:[#allocation12 + $0x528] sm:$0xff]
          %v2908 = vld [vmem:[#allocation12 + $0x530] sm:$0xff]
          %v2909 = vld [vmem:[#allocation12 + $0x538] sm:$0xff]
          %v2910 = vld [vmem:[#allocation12 + $0x540] sm:$0xff]
          %v2911 = vld [vmem:[#allocation12 + $0x548] sm:$0xff]
          %v2912 = vld [vmem:[#allocation12 + $0x550] sm:$0xff]
          %v2913 = vld [vmem:[#allocation12 + $0x558] sm:$0xff]
          %v2914 = vld [vmem:[#allocation12 + $0x560] sm:$0xff]
          %v2915 = vld [vmem:[#allocation12 + $0x568] sm:$0xff]
          %v2916 = vld [vmem:[#allocation12 + $0x570] sm:$0xff]
          %v2917 = vld [vmem:[#allocation12 + $0x578] sm:$0xff]
          %v2918 = vld [vmem:[#allocation12 + $0x580] sm:$0xff]
          %v2919 = vld [vmem:[#allocation12 + $0x588] sm:$0xff]
          %v2920 = vld [vmem:[#allocation12 + $0x590] sm:$0xff]
          %v2921 = vld [vmem:[#allocation12 + $0x598] sm:$0xff]
          %v2922 = vld [vmem:[#allocation12 + $0x5a0] sm:$0xff]
          %v2923 = vld [vmem:[#allocation12 + $0x5a8] sm:$0xff]
          %v2924 = vld [vmem:[#allocation12 + $0x5b0] sm:$0xff]
          %v2925 = vld [vmem:[#allocation12 + $0x5b8] sm:$0xff]
          %v2926 = vld [vmem:[#allocation12 + $0x5c0] sm:$0xff]
          %v2927 = vld [vmem:[#allocation12 + $0x5c8] sm:$0xff]
          %v2928 = vld [vmem:[#allocation12 + $0x5d0] sm:$0xff]
          %v2929 = vld [vmem:[#allocation12 + $0x5d8] sm:$0xff]
          %v2930 = vld [vmem:[#allocation12 + $0x5e0] sm:$0xff]
          %v2931 = vld [vmem:[#allocation12 + $0x5e8] sm:$0xff]
          %v2932 = vld [vmem:[#allocation12 + $0x5f0] sm:$0xff]
          %v2933 = vld [vmem:[#allocation12 + $0x5f8] sm:$0xff]
          %v2934 = vld [vmem:[#allocation12 + $0x600] sm:$0xff]
          %v2935 = vld [vmem:[#allocation12 + $0x608] sm:$0xff]
          %v2936 = vld [vmem:[#allocation12 + $0x610] sm:$0xff]
          %v2937 = vld [vmem:[#allocation12 + $0x618] sm:$0xff]
          %v2938 = vld [vmem:[#allocation12 + $0x620] sm:$0xff]
          %v2939 = vld [vmem:[#allocation12 + $0x628] sm:$0xff]
          %v2940 = vld [vmem:[#allocation12 + $0x630] sm:$0xff]
          %v2941 = vld [vmem:[#allocation12 + $0x638] sm:$0xff]
          %v2942 = vld [vmem:[#allocation12 + $0x640] sm:$0xff]
          %v2943 = vld [vmem:[#allocation12 + $0x648] sm:$0xff]
          %v2944 = vld [vmem:[#allocation12 + $0x650] sm:$0xff]
          %v2945 = vld [vmem:[#allocation12 + $0x658] sm:$0xff]
          %v2946 = vld [vmem:[#allocation12 + $0x660] sm:$0xff]
          %v2947 = vld [vmem:[#allocation12 + $0x668] sm:$0xff]
          %v2948 = vld [vmem:[#allocation12 + $0x670] sm:$0xff]
          %v2949 = vld [vmem:[#allocation12 + $0x678] sm:$0xff]
          %v2950 = vld [vmem:[#allocation12 + $0x680] sm:$0xff]
          %v2951 = vld [vmem:[#allocation12 + $0x688] sm:$0xff]
          %v2952 = vld [vmem:[#allocation12 + $0x690] sm:$0xff]
          %v2953 = vld [vmem:[#allocation12 + $0x698] sm:$0xff]
          %v2954 = vld [vmem:[#allocation12 + $0x6a0] sm:$0xff]
          %v2955 = vld [vmem:[#allocation12 + $0x6a8] sm:$0xff]
          %v2956 = vld [vmem:[#allocation12 + $0x6b0] sm:$0xff]
          %v2957 = vld [vmem:[#allocation12 + $0x6b8] sm:$0xff]
          %v2958 = vld [vmem:[#allocation12 + $0x6c0] sm:$0xff]
          %v2959 = vld [vmem:[#allocation12 + $0x6c8] sm:$0xff]
          %v2960 = vld [vmem:[#allocation12 + $0x6d0] sm:$0xff]
          %v2961 = vld [vmem:[#allocation12 + $0x6d8] sm:$0xff]
          %v2962 = vld [vmem:[#allocation12 + $0x6e0] sm:$0xff]
          %v2963 = vld [vmem:[#allocation12 + $0x6e8] sm:$0xff]
          %v2964 = vld [vmem:[#allocation12 + $0x6f0] sm:$0xff]
          %v2965 = vld [vmem:[#allocation12 + $0x6f8] sm:$0xff]
          %v2966 = vld [vmem:[#allocation12 + $0x700] sm:$0xff]
          %v2967 = vld [vmem:[#allocation12 + $0x708] sm:$0xff]
          %v2968 = vld [vmem:[#allocation12 + $0x710] sm:$0xff]
          %v2969 = vld [vmem:[#allocation12 + $0x718] sm:$0xff]
          %v2970 = vld [vmem:[#allocation12 + $0x720] sm:$0xff]
          %v2971 = vld [vmem:[#allocation12 + $0x728] sm:$0xff]
          %v2972 = vld [vmem:[#allocation12 + $0x730] sm:$0xff]
          %v2973 = vld [vmem:[#allocation12 + $0x738] sm:$0xff]
          %v2974 = vld [vmem:[#allocation12 + $0x740] sm:$0xff]
          %v2975 = vld [vmem:[#allocation12 + $0x748] sm:$0xff]
          %v2976 = vld [vmem:[#allocation12 + $0x750] sm:$0xff]
          %v2977 = vld [vmem:[#allocation12 + $0x758] sm:$0xff]
          %v2978 = vld [vmem:[#allocation12 + $0x760] sm:$0xff]
          %v2979 = vld [vmem:[#allocation12 + $0x768] sm:$0xff]
          %v2980 = vld [vmem:[#allocation12 + $0x770] sm:$0xff]
          %v2981 = vld [vmem:[#allocation12 + $0x778] sm:$0xff]
          %v2982 = vld [vmem:[#allocation12 + $0x780] sm:$0xff]
          %v2983 = vld [vmem:[#allocation12 + $0x788] sm:$0xff]
          %v2984 = vld [vmem:[#allocation12 + $0x790] sm:$0xff]
          %v2985 = vld [vmem:[#allocation12 + $0x798] sm:$0xff]
          %v2986 = vld [vmem:[#allocation12 + $0x7a0] sm:$0xff]
          %v2987 = vld [vmem:[#allocation12 + $0x7a8] sm:$0xff]
          %v2988 = vld [vmem:[#allocation12 + $0x7b0] sm:$0xff]
          %v2989 = vld [vmem:[#allocation12 + $0x7b8] sm:$0xff]
          %v2990 = vld [vmem:[#allocation12 + $0x7c0] sm:$0xff]
          %v2991 = vld [vmem:[#allocation12 + $0x7c8] sm:$0xff]
          %v2992 = vld [vmem:[#allocation12 + $0x7d0] sm:$0xff]
          %v2993 = vld [vmem:[#allocation12 + $0x7d8] sm:$0xff]
          %v2994 = vld [vmem:[#allocation12 + $0x7e0] sm:$0xff]
          %v2995 = vld [vmem:[#allocation12 + $0x7e8] sm:$0xff]
          %v2996 = vld [vmem:[#allocation12 + $0x7f0] sm:$0xff]
          %v2997 = vld [vmem:[#allocation12 + $0x7f8] sm:$0xff]
          %v2998 = vld [vmem:[#allocation12 + $0x800] sm:$0xff]
          %v2999 = vld [vmem:[#allocation12 + $0x808] sm:$0xff]
          %v3000 = vld [vmem:[#allocation12 + $0x810] sm:$0xff]
          %v3001 = vld [vmem:[#allocation12 + $0x818] sm:$0xff]
          %v3002 = vld [vmem:[#allocation12 + $0x820] sm:$0xff]
          %v3003 = vld [vmem:[#allocation12 + $0x828] sm:$0xff]
          %v3004 = vld [vmem:[#allocation12 + $0x830] sm:$0xff]
          %v3005 = vld [vmem:[#allocation12 + $0x838] sm:$0xff]
          %v3006 = vld [vmem:[#allocation12 + $0x840] sm:$0xff]
          %v3007 = vld [vmem:[#allocation12 + $0x848] sm:$0xff]
          %v3008 = vld [vmem:[#allocation12 + $0x850] sm:$0xff]
          %v3009 = vld [vmem:[#allocation12 + $0x858] sm:$0xff]
          %v3010 = vld [vmem:[#allocation12 + $0x860] sm:$0xff]
          %v3011 = vld [vmem:[#allocation12 + $0x868] sm:$0xff]
          %v3012 = vld [vmem:[#allocation12 + $0x870] sm:$0xff]
          %v3013 = vld [vmem:[#allocation12 + $0x878] sm:$0xff]
          %v3014 = vld [vmem:[#allocation12 + $0x880] sm:$0xff]
          %v3015 = vld [vmem:[#allocation12 + $0x888] sm:$0xff]
          %v3016 = vld [vmem:[#allocation12 + $0x890] sm:$0xff]
          %v3017 = vld [vmem:[#allocation12 + $0x898] sm:$0xff]
          %v3018 = vld [vmem:[#allocation12 + $0x8a0] sm:$0xff]
          %v3019 = vld [vmem:[#allocation12 + $0x8a8] sm:$0xff]
          %v3020 = vld [vmem:[#allocation12 + $0x8b0] sm:$0xff]
          %v3021 = vld [vmem:[#allocation12 + $0x8b8] sm:$0xff]
          %v3022 = vld [vmem:[#allocation12 + $0x8c0] sm:$0xff]
          %v3023 = vld [vmem:[#allocation12 + $0x8c8] sm:$0xff]
          %v3024 = vld [vmem:[#allocation12 + $0x8d0] sm:$0xff]
          %v3025 = vld [vmem:[#allocation12 + $0x8d8] sm:$0xff]
          %v3026 = vld [vmem:[#allocation12 + $0x8e0] sm:$0xff]
          %v3027 = vld [vmem:[#allocation12 + $0x8e8] sm:$0xff]
          %v3028 = vld [vmem:[#allocation12 + $0x8f0] sm:$0xff]
          %v3029 = vld [vmem:[#allocation12 + $0x8f8] sm:$0xff]
          %v3030 = vld [vmem:[#allocation12 + $0x900] sm:$0xff]
          %v3031 = vld [vmem:[#allocation12 + $0x908] sm:$0xff]
          %v3032 = vld [vmem:[#allocation12 + $0x910] sm:$0xff]
          %v3033 = vld [vmem:[#allocation12 + $0x918] sm:$0xff]
          %v3034 = vld [vmem:[#allocation12 + $0x920] sm:$0xff]
          %v3035 = vld [vmem:[#allocation12 + $0x928] sm:$0xff]
          %v3036 = vld [vmem:[#allocation12 + $0x930] sm:$0xff]
          %v3037 = vld [vmem:[#allocation12 + $0x938] sm:$0xff]
          %v3038 = vld [vmem:[#allocation12 + $0x940] sm:$0xff]
          %v3039 = vld [vmem:[#allocation12 + $0x948] sm:$0xff]
          %v3040 = vld [vmem:[#allocation12 + $0x950] sm:$0xff]
          %v3041 = vld [vmem:[#allocation12 + $0x958] sm:$0xff]
          %v3042 = vld [vmem:[#allocation12 + $0x960] sm:$0xff]
          %v3043 = vld [vmem:[#allocation12 + $0x968] sm:$0xff]
          %v3044 = vld [vmem:[#allocation12 + $0x970] sm:$0xff]
          %v3045 = vld [vmem:[#allocation12 + $0x978] sm:$0xff]
          %v3046 = vld [vmem:[#allocation12 + $0x980] sm:$0xff]
          %v3047 = vld [vmem:[#allocation12 + $0x988] sm:$0xff]
          %v3048 = vld [vmem:[#allocation12 + $0x990] sm:$0xff]
          %v3049 = vld [vmem:[#allocation12 + $0x998] sm:$0xff]
          %v3050 = vld [vmem:[#allocation12 + $0x9a0] sm:$0xff]
          %v3051 = vld [vmem:[#allocation12 + $0x9a8] sm:$0xff]
          %v3052 = vld [vmem:[#allocation12 + $0x9b0] sm:$0xff]
          %v3053 = vld [vmem:[#allocation12 + $0x9b8] sm:$0xff]
          %v3054 = vld [vmem:[#allocation12 + $0x9c0] sm:$0xff]
          %v3055 = vld [vmem:[#allocation12 + $0x9c8] sm:$0xff]
          %v3056 = vld [vmem:[#allocation12 + $0x9d0] sm:$0xff]
          %v3057 = vld [vmem:[#allocation12 + $0x9d8] sm:$0xff]
          %v3058 = vld [vmem:[#allocation12 + $0x9e0] sm:$0xff]
          %v3059 = vld [vmem:[#allocation12 + $0x9e8] sm:$0xff]
          %v3060 = vld [vmem:[#allocation12 + $0x9f0] sm:$0xff]
          %v3061 = vld [vmem:[#allocation12 + $0x9f8] sm:$0xff]
          %v3062 = vld [vmem:[#allocation13] sm:$0xf]
          %v3064 = vperm.slane %v3062, 0
          %v3065 = vperm.slane %v3062, 1
          %v3066 = vperm.slane %v3062, 2
          %v3067 = vperm.slane %v3062, 3
          %3072 = vmatpush.msra.mxu0 %v2802
          %3073 = vmatpush.msra.mxu0 %v2798
          %3074 = vmatpush.msra.mxu0 %v2794
          %3075 = vmatpush.msra.mxu0 %v2790
          %3076 = vmatpush.msra.mxu0 %v2786
          %3077 = vmatpush.msra.mxu0 %v2782
          %3078 = vmatpush.msra.mxu0 %v2778
          %3079 = vmatpush.msra.mxu0 %v2774
          %3080 = vmatpush.msra.mxu0 %v2770
          %3081 = vmatpush.msra.mxu0 %v2766
          %3082 = vmatpush.msra.mxu0 %v2762
          %3083 = vmatpush.msra.mxu0 %v2758
          %3084 = vmatpush.msra.mxu0 %v2754
          %3085 = vmatpush.msra.mxu0 %v2750
          %3086 = vmatpush.msra.mxu0 %v2746
          %3087 = vmatpush.msra.mxu0 %v2742
          %3088 = vmatmul.f32.gmra.mxu0 %v2737
          %v3089 = vpop.f32.mrf.mxu0
          %v3090 = vadd.f32 %v3064, %v3089
          %3091 = vdwg.mxu0
          %3092 = vmatpush.msra.mxu0 %v2866
          %3093 = vmatpush.msra.mxu0 %v2862
          %3094 = vmatpush.msra.mxu0 %v2858
          %3095 = vmatpush.msra.mxu0 %v2854
          %3096 = vmatpush.msra.mxu0 %v2850
          %3097 = vmatpush.msra.mxu0 %v2846
          %3098 = vmatpush.msra.mxu0 %v2842
          %3099 = vmatpush.msra.mxu0 %v2838
          %3100 = vmatpush.msra.mxu0 %v2834
          %3101 = vmatpush.msra.mxu0 %v2830
          %3102 = vmatpush.msra.mxu0 %v2826
          %3103 = vmatpush.msra.mxu0 %v2822
          %3104 = vmatpush.msra.mxu0 %v2818
          %3105 = vmatpush.msra.mxu0 %v2814
          %3106 = vmatpush.msra.mxu0 %v2810
          %3107 = vmatpush.msra.mxu0 %v2806
          %3108 = vmatmul.f32.gmra.mxu0 %v2738
          %v3109 = vpop.f32.mrf.mxu0
          %v3110 = vadd.f32 %v3090, %v3109
          %3111 = vdwg.mxu0
          %3112 = vmatpush.msra.mxu0 %v2930
          %3113 = vmatpush.msra.mxu0 %v2926
          %3114 = vmatpush.msra.mxu0 %v2922
          %3115 = vmatpush.msra.mxu0 %v2918
          %3116 = vmatpush.msra.mxu0 %v2914
          %3117 = vmatpush.msra.mxu0 %v2910
          %3118 = vmatpush.msra.mxu0 %v2906
          %3119 = vmatpush.msra.mxu0 %v2902
          %3120 = vmatpush.msra.mxu0 %v2898
          %3121 = vmatpush.msra.mxu0 %v2894
          %3122 = vmatpush.msra.mxu0 %v2890
          %3123 = vmatpush.msra.mxu0 %v2886
          %3124 = vmatpush.msra.mxu0 %v2882
          %3125 = vmatpush.msra.mxu0 %v2878
          %3126 = vmatpush.msra.mxu0 %v2874
          %3127 = vmatpush.msra.mxu0 %v2870
          %3128 = vmatmul.f32.gmra.mxu0 %v2739
          %v3129 = vpop.f32.mrf.mxu0
          %v3130 = vadd.f32 %v3110, %v3129
          %3131 = vdwg.mxu0
          %3132 = vmatpush.msra.mxu0 %v2994
          %3133 = vmatpush.msra.mxu0 %v2990
          %3134 = vmatpush.msra.mxu0 %v2986
          %3135 = vmatpush.msra.mxu0 %v2982
          %3136 = vmatpush.msra.mxu0 %v2978
          %3137 = vmatpush.msra.mxu0 %v2974
          %3138 = vmatpush.msra.mxu0 %v2970
          %3139 = vmatpush.msra.mxu0 %v2966
          %3140 = vmatpush.msra.mxu0 %v2962
          %3141 = vmatpush.msra.mxu0 %v2958
          %3142 = vmatpush.msra.mxu0 %v2954
          %3143 = vmatpush.msra.mxu0 %v2950
          %3144 = vmatpush.msra.mxu0 %v2946
          %3145 = vmatpush.msra.mxu0 %v2942
          %3146 = vmatpush.msra.mxu0 %v2938
          %3147 = vmatpush.msra.mxu0 %v2934
          %3148 = vmatmul.f32.gmra.mxu0 %v2740
          %v3149 = vpop.f32.mrf.mxu0
          %v3150 = vadd.f32 %v3130, %v3149
          %3151 = vdwg.mxu0
          %3152 = vmatpush.msra.mxu0 %v3058
          %3153 = vmatpush.msra.mxu0 %v3054
          %3154 = vmatpush.msra.mxu0 %v3050
          %3155 = vmatpush.msra.mxu0 %v3046
          %3156 = vmatpush.msra.mxu0 %v3042
          %3157 = vmatpush.msra.mxu0 %v3038
          %3158 = vmatpush.msra.mxu0 %v3034
          %3159 = vmatpush.msra.mxu0 %v3030
          %3160 = vmatpush.msra.mxu0 %v3026
          %3161 = vmatpush.msra.mxu0 %v3022
          %3162 = vmatpush.msra.mxu0 %v3018
          %3163 = vmatpush.msra.mxu0 %v3014
          %3164 = vmatpush.msra.mxu0 %v3010
          %3165 = vmatpush.msra.mxu0 %v3006
          %3166 = vmatpush.msra.mxu0 %v3002
          %3167 = vmatpush.msra.mxu0 %v2998
          %3168 = vmatmul.f32.gmra.mxu0 %v2741
          %v3169 = vpop.f32.mrf.mxu0
          %v3170 = vadd.f32 %v3150, %v3169
          %3171 = vdwg.mxu0
          %3172 = vmatpush.msra.mxu0 %v2803
          %3173 = vmatpush.msra.mxu0 %v2799
          %3174 = vmatpush.msra.mxu0 %v2795
          %3175 = vmatpush.msra.mxu0 %v2791
          %3176 = vmatpush.msra.mxu0 %v2787
          %3177 = vmatpush.msra.mxu0 %v2783
          %3178 = vmatpush.msra.mxu0 %v2779
          %3179 = vmatpush.msra.mxu0 %v2775
          %3180 = vmatpush.msra.mxu0 %v2771
          %3181 = vmatpush.msra.mxu0 %v2767
          %3182 = vmatpush.msra.mxu0 %v2763
          %3183 = vmatpush.msra.mxu0 %v2759
          %3184 = vmatpush.msra.mxu0 %v2755
          %3185 = vmatpush.msra.mxu0 %v2751
          %3186 = vmatpush.msra.mxu0 %v2747
          %3187 = vmatpush.msra.mxu0 %v2743
          %3188 = vmatmul.f32.gmra.mxu0 %v2737
          %v3189 = vpop.f32.mrf.mxu0
          %v3190 = vadd.f32 %v3065, %v3189
          %3191 = vdwg.mxu0
          %3192 = vmatpush.msra.mxu0 %v2867
          %3193 = vmatpush.msra.mxu0 %v2863
          %3194 = vmatpush.msra.mxu0 %v2859
          %3195 = vmatpush.msra.mxu0 %v2855
          %3196 = vmatpush.msra.mxu0 %v2851
          %3197 = vmatpush.msra.mxu0 %v2847
          %3198 = vmatpush.msra.mxu0 %v2843
          %3199 = vmatpush.msra.mxu0 %v2839
          %3200 = vmatpush.msra.mxu0 %v2835
          %3201 = vmatpush.msra.mxu0 %v2831
          %3202 = vmatpush.msra.mxu0 %v2827
          %3203 = vmatpush.msra.mxu0 %v2823
          %3204 = vmatpush.msra.mxu0 %v2819
          %3205 = vmatpush.msra.mxu0 %v2815
          %3206 = vmatpush.msra.mxu0 %v2811
          %3207 = vmatpush.msra.mxu0 %v2807
          %3208 = vmatmul.f32.gmra.mxu0 %v2738
          %v3209 = vpop.f32.mrf.mxu0
          %v3210 = vadd.f32 %v3190, %v3209
          %3211 = vdwg.mxu0
          %3212 = vmatpush.msra.mxu0 %v2931
          %3213 = vmatpush.msra.mxu0 %v2927
          %3214 = vmatpush.msra.mxu0 %v2923
          %3215 = vmatpush.msra.mxu0 %v2919
          %3216 = vmatpush.msra.mxu0 %v2915
          %3217 = vmatpush.msra.mxu0 %v2911
          %3218 = vmatpush.msra.mxu0 %v2907
          %3219 = vmatpush.msra.mxu0 %v2903
          %3220 = vmatpush.msra.mxu0 %v2899
          %3221 = vmatpush.msra.mxu0 %v2895
          %3222 = vmatpush.msra.mxu0 %v2891
          %3223 = vmatpush.msra.mxu0 %v2887
          %3224 = vmatpush.msra.mxu0 %v2883
          %3225 = vmatpush.msra.mxu0 %v2879
          %3226 = vmatpush.msra.mxu0 %v2875
          %3227 = vmatpush.msra.mxu0 %v2871
          %3228 = vmatmul.f32.gmra.mxu0 %v2739
          %v3229 = vpop.f32.mrf.mxu0
          %v3230 = vadd.f32 %v3210, %v3229
          %3231 = vdwg.mxu0
          %3232 = vmatpush.msra.mxu0 %v2995
          %3233 = vmatpush.msra.mxu0 %v2991
          %3234 = vmatpush.msra.mxu0 %v2987
          %3235 = vmatpush.msra.mxu0 %v2983
          %3236 = vmatpush.msra.mxu0 %v2979
          %3237 = vmatpush.msra.mxu0 %v2975
          %3238 = vmatpush.msra.mxu0 %v2971
          %3239 = vmatpush.msra.mxu0 %v2967
          %3240 = vmatpush.msra.mxu0 %v2963
          %3241 = vmatpush.msra.mxu0 %v2959
          %3242 = vmatpush.msra.mxu0 %v2955
          %3243 = vmatpush.msra.mxu0 %v2951
          %3244 = vmatpush.msra.mxu0 %v2947
          %3245 = vmatpush.msra.mxu0 %v2943
          %3246 = vmatpush.msra.mxu0 %v2939
          %3247 = vmatpush.msra.mxu0 %v2935
          %3248 = vmatmul.f32.gmra.mxu0 %v2740
          %v3249 = vpop.f32.mrf.mxu0
          %v3250 = vadd.f32 %v3230, %v3249
          %3251 = vdwg.mxu0
          %3252 = vmatpush.msra.mxu0 %v3059
          %3253 = vmatpush.msra.mxu0 %v3055
          %3254 = vmatpush.msra.mxu0 %v3051
          %3255 = vmatpush.msra.mxu0 %v3047
          %3256 = vmatpush.msra.mxu0 %v3043
          %3257 = vmatpush.msra.mxu0 %v3039
          %3258 = vmatpush.msra.mxu0 %v3035
          %3259 = vmatpush.msra.mxu0 %v3031
          %3260 = vmatpush.msra.mxu0 %v3027
          %3261 = vmatpush.msra.mxu0 %v3023
          %3262 = vmatpush.msra.mxu0 %v3019
          %3263 = vmatpush.msra.mxu0 %v3015
          %3264 = vmatpush.msra.mxu0 %v3011
          %3265 = vmatpush.msra.mxu0 %v3007
          %3266 = vmatpush.msra.mxu0 %v3003
          %3267 = vmatpush.msra.mxu0 %v2999
          %3268 = vmatmul.f32.gmra.mxu0 %v2741
          %v3269 = vpop.f32.mrf.mxu0
          %v3270 = vadd.f32 %v3250, %v3269
          %3271 = vdwg.mxu0
          %3272 = vmatpush.msra.mxu0 %v2804
          %3273 = vmatpush.msra.mxu0 %v2800
          %3274 = vmatpush.msra.mxu0 %v2796
          %3275 = vmatpush.msra.mxu0 %v2792
          %3276 = vmatpush.msra.mxu0 %v2788
          %3277 = vmatpush.msra.mxu0 %v2784
          %3278 = vmatpush.msra.mxu0 %v2780
          %3279 = vmatpush.msra.mxu0 %v2776
          %3280 = vmatpush.msra.mxu0 %v2772
          %3281 = vmatpush.msra.mxu0 %v2768
          %3282 = vmatpush.msra.mxu0 %v2764
          %3283 = vmatpush.msra.mxu0 %v2760
          %3284 = vmatpush.msra.mxu0 %v2756
          %3285 = vmatpush.msra.mxu0 %v2752
          %3286 = vmatpush.msra.mxu0 %v2748
          %3287 = vmatpush.msra.mxu0 %v2744
          %3288 = vmatmul.f32.gmra.mxu0 %v2737
          %v3289 = vpop.f32.mrf.mxu0
          %v3290 = vadd.f32 %v3066, %v3289
          %3291 = vdwg.mxu0
          %3292 = vmatpush.msra.mxu0 %v2868
          %3293 = vmatpush.msra.mxu0 %v2864
          %3294 = vmatpush.msra.mxu0 %v2860
          %3295 = vmatpush.msra.mxu0 %v2856
          %3296 = vmatpush.msra.mxu0 %v2852
          %3297 = vmatpush.msra.mxu0 %v2848
          %3298 = vmatpush.msra.mxu0 %v2844
          %3299 = vmatpush.msra.mxu0 %v2840
          %3300 = vmatpush.msra.mxu0 %v2836
          %3301 = vmatpush.msra.mxu0 %v2832
          %3302 = vmatpush.msra.mxu0 %v2828
          %3303 = vmatpush.msra.mxu0 %v2824
          %3304 = vmatpush.msra.mxu0 %v2820
          %3305 = vmatpush.msra.mxu0 %v2816
          %3306 = vmatpush.msra.mxu0 %v2812
          %3307 = vmatpush.msra.mxu0 %v2808
          %3308 = vmatmul.f32.gmra.mxu0 %v2738
          %v3309 = vpop.f32.mrf.mxu0
          %v3310 = vadd.f32 %v3290, %v3309
          %3311 = vdwg.mxu0
          %3312 = vmatpush.msra.mxu0 %v2932
          %3313 = vmatpush.msra.mxu0 %v2928
          %3314 = vmatpush.msra.mxu0 %v2924
          %3315 = vmatpush.msra.mxu0 %v2920
          %3316 = vmatpush.msra.mxu0 %v2916
          %3317 = vmatpush.msra.mxu0 %v2912
          %3318 = vmatpush.msra.mxu0 %v2908
          %3319 = vmatpush.msra.mxu0 %v2904
          %3320 = vmatpush.msra.mxu0 %v2900
          %3321 = vmatpush.msra.mxu0 %v2896
          %3322 = vmatpush.msra.mxu0 %v2892
          %3323 = vmatpush.msra.mxu0 %v2888
          %3324 = vmatpush.msra.mxu0 %v2884
          %3325 = vmatpush.msra.mxu0 %v2880
          %3326 = vmatpush.msra.mxu0 %v2876
          %3327 = vmatpush.msra.mxu0 %v2872
          %3328 = vmatmul.f32.gmra.mxu0 %v2739
          %v3329 = vpop.f32.mrf.mxu0
          %v3330 = vadd.f32 %v3310, %v3329
          %3331 = vdwg.mxu0
          %3332 = vmatpush.msra.mxu0 %v2996
          %3333 = vmatpush.msra.mxu0 %v2992
          %3334 = vmatpush.msra.mxu0 %v2988
          %3335 = vmatpush.msra.mxu0 %v2984
          %3336 = vmatpush.msra.mxu0 %v2980
          %3337 = vmatpush.msra.mxu0 %v2976
          %3338 = vmatpush.msra.mxu0 %v2972
          %3339 = vmatpush.msra.mxu0 %v2968
          %3340 = vmatpush.msra.mxu0 %v2964
          %3341 = vmatpush.msra.mxu0 %v2960
          %3342 = vmatpush.msra.mxu0 %v2956
          %3343 = vmatpush.msra.mxu0 %v2952
          %3344 = vmatpush.msra.mxu0 %v2948
          %3345 = vmatpush.msra.mxu0 %v2944
          %3346 = vmatpush.msra.mxu0 %v2940
          %3347 = vmatpush.msra.mxu0 %v2936
          %3348 = vmatmul.f32.gmra.mxu0 %v2740
          %v3349 = vpop.f32.mrf.mxu0
          %v3350 = vadd.f32 %v3330, %v3349
          %3351 = vdwg.mxu0
          %3352 = vmatpush.msra.mxu0 %v3060
          %3353 = vmatpush.msra.mxu0 %v3056
          %3354 = vmatpush.msra.mxu0 %v3052
          %3355 = vmatpush.msra.mxu0 %v3048
          %3356 = vmatpush.msra.mxu0 %v3044
          %3357 = vmatpush.msra.mxu0 %v3040
          %3358 = vmatpush.msra.mxu0 %v3036
          %3359 = vmatpush.msra.mxu0 %v3032
          %3360 = vmatpush.msra.mxu0 %v3028
          %3361 = vmatpush.msra.mxu0 %v3024
          %3362 = vmatpush.msra.mxu0 %v3020
          %3363 = vmatpush.msra.mxu0 %v3016
          %3364 = vmatpush.msra.mxu0 %v3012
          %3365 = vmatpush.msra.mxu0 %v3008
          %3366 = vmatpush.msra.mxu0 %v3004
          %3367 = vmatpush.msra.mxu0 %v3000
          %3368 = vmatmul.f32.gmra.mxu0 %v2741
          %v3369 = vpop.f32.mrf.mxu0
          %v3370 = vadd.f32 %v3350, %v3369
          %3371 = vdwg.mxu0
          %3372 = vmatpush.msra.mxu0 %v2805
          %3373 = vmatpush.msra.mxu0 %v2801
          %3374 = vmatpush.msra.mxu0 %v2797
          %3375 = vmatpush.msra.mxu0 %v2793
          %3376 = vmatpush.msra.mxu0 %v2789
          %3377 = vmatpush.msra.mxu0 %v2785
          %3378 = vmatpush.msra.mxu0 %v2781
          %3379 = vmatpush.msra.mxu0 %v2777
          %3380 = vmatpush.msra.mxu0 %v2773
          %3381 = vmatpush.msra.mxu0 %v2769
          %3382 = vmatpush.msra.mxu0 %v2765
          %3383 = vmatpush.msra.mxu0 %v2761
          %3384 = vmatpush.msra.mxu0 %v2757
          %3385 = vmatpush.msra.mxu0 %v2753
          %3386 = vmatpush.msra.mxu0 %v2749
          %3387 = vmatpush.msra.mxu0 %v2745
          %3388 = vmatmul.f32.gmra.mxu0 %v2737
          %v3389 = vpop.f32.mrf.mxu0
          %v3390 = vadd.f32 %v3067, %v3389
          %3391 = vdwg.mxu0
          %3392 = vmatpush.msra.mxu0 %v2869
          %3393 = vmatpush.msra.mxu0 %v2865
          %3394 = vmatpush.msra.mxu0 %v2861
          %3395 = vmatpush.msra.mxu0 %v2857
          %3396 = vmatpush.msra.mxu0 %v2853
          %3397 = vmatpush.msra.mxu0 %v2849
          %3398 = vmatpush.msra.mxu0 %v2845
          %3399 = vmatpush.msra.mxu0 %v2841
          %3400 = vmatpush.msra.mxu0 %v2837
          %3401 = vmatpush.msra.mxu0 %v2833
          %3402 = vmatpush.msra.mxu0 %v2829
          %3403 = vmatpush.msra.mxu0 %v2825
          %3404 = vmatpush.msra.mxu0 %v2821
          %3405 = vmatpush.msra.mxu0 %v2817
          %3406 = vmatpush.msra.mxu0 %v2813
          %3407 = vmatpush.msra.mxu0 %v2809
          %3408 = vmatmul.f32.gmra.mxu0 %v2738
          %v3409 = vpop.f32.mrf.mxu0
          %v3410 = vadd.f32 %v3390, %v3409
          %3411 = vdwg.mxu0
          %3412 = vmatpush.msra.mxu0 %v2933
          %3413 = vmatpush.msra.mxu0 %v2929
          %3414 = vmatpush.msra.mxu0 %v2925
          %3415 = vmatpush.msra.mxu0 %v2921
          %3416 = vmatpush.msra.mxu0 %v2917
          %3417 = vmatpush.msra.mxu0 %v2913
          %3418 = vmatpush.msra.mxu0 %v2909
          %3419 = vmatpush.msra.mxu0 %v2905
          %3420 = vmatpush.msra.mxu0 %v2901
          %3421 = vmatpush.msra.mxu0 %v2897
          %3422 = vmatpush.msra.mxu0 %v2893
          %3423 = vmatpush.msra.mxu0 %v2889
          %3424 = vmatpush.msra.mxu0 %v2885
          %3425 = vmatpush.msra.mxu0 %v2881
          %3426 = vmatpush.msra.mxu0 %v2877
          %3427 = vmatpush.msra.mxu0 %v2873
          %3428 = vmatmul.f32.gmra.mxu0 %v2739
          %v3429 = vpop.f32.mrf.mxu0
          %v3430 = vadd.f32 %v3410, %v3429
          %3431 = vdwg.mxu0
          %3432 = vmatpush.msra.mxu0 %v2997
          %3433 = vmatpush.msra.mxu0 %v2993
          %3434 = vmatpush.msra.mxu0 %v2989
          %3435 = vmatpush.msra.mxu0 %v2985
          %3436 = vmatpush.msra.mxu0 %v2981
          %3437 = vmatpush.msra.mxu0 %v2977
          %3438 = vmatpush.msra.mxu0 %v2973
          %3439 = vmatpush.msra.mxu0 %v2969
          %3440 = vmatpush.msra.mxu0 %v2965
          %3441 = vmatpush.msra.mxu0 %v2961
          %3442 = vmatpush.msra.mxu0 %v2957
          %3443 = vmatpush.msra.mxu0 %v2953
          %3444 = vmatpush.msra.mxu0 %v2949
          %3445 = vmatpush.msra.mxu0 %v2945
          %3446 = vmatpush.msra.mxu0 %v2941
          %3447 = vmatpush.msra.mxu0 %v2937
          %3448 = vmatmul.f32.gmra.mxu0 %v2740
          %v3449 = vpop.f32.mrf.mxu0
          %v3450 = vadd.f32 %v3430, %v3449
          %3451 = vdwg.mxu0
          %3452 = vmatpush.msra.mxu0 %v3061
          %3453 = vmatpush.msra.mxu0 %v3057
          %3454 = vmatpush.msra.mxu0 %v3053
          %3455 = vmatpush.msra.mxu0 %v3049
          %3456 = vmatpush.msra.mxu0 %v3045
          %3457 = vmatpush.msra.mxu0 %v3041
          %3458 = vmatpush.msra.mxu0 %v3037
          %3459 = vmatpush.msra.mxu0 %v3033
          %3460 = vmatpush.msra.mxu0 %v3029
          %3461 = vmatpush.msra.mxu0 %v3025
          %3462 = vmatpush.msra.mxu0 %v3021
          %3463 = vmatpush.msra.mxu0 %v3017
          %3464 = vmatpush.msra.mxu0 %v3013
          %3465 = vmatpush.msra.mxu0 %v3009
          %3466 = vmatpush.msra.mxu0 %v3005
          %3467 = vmatpush.msra.mxu0 %v3001
          %3468 = vmatmul.f32.gmra.mxu0 %v2741
          %v3469 = vpop.f32.mrf.mxu0
          %v3470 = vadd.f32 %v3450, %v3469
          %3471 = vdwg.mxu0
          %v3472 = vld [vmem:[#allocation15] sm:$0xf]
          %v3473 = vld [vmem:[#allocation16] sm:$0xf]
          %v3474 = vadd.f32 %v3170, %v3270
          %v3475 = vadd.f32 %v3474, %v3370
          %v3476 = vadd.f32 %v3475, %v3470
          %3477 = vadd.xlane.f32.xlu0 %v3476
          %v3478 = vpop.xlane.xlu0 %3477
          %v3479 = vmul.f32 %v3478, %v2646
          %v3480 = vsub.f32 %v3170, %v3479
          %v3481 = vsub.f32 %v3270, %v3479
          %v3482 = vsub.f32 %v3370, %v3479
          %v3483 = vsub.f32 %v3470, %v3479
          %v3484 = vmul.f32 %v3480, %v3480
          %v3485 = vmul.f32 %v3481, %v3481
          %v3486 = vmul.f32 %v3482, %v3482
          %v3487 = vmul.f32 %v3483, %v3483
          %v3488 = vadd.f32 %v3484, %v3485
          %v3489 = vadd.f32 %v3488, %v3486
          %v3490 = vadd.f32 %v3489, %v3487
          %3491 = vadd.xlane.f32.xlu0 %v3490
          %v3492 = vpop.xlane.xlu0 %3491
          %v3493 = vmul.f32 %v3492, %v2646
          %v3494 = vadd.f32 %v3493, 1e-05
          %v3495 = vrsqrt.pop %v3494
          %v3496 = vmul.f32 %v3495, %v3494
          %v3497 = vmul.f32 %v3496, %v3495
          %v3498 = vmul.f32 0.5, %v3497
          %v3499 = vsub.f32 1.5, %v3498
          %v3500 = vmul.f32 %v3495, %v3499
          %vm3501 = vweird.f32 %v3494
          %vm3502 = vweird.f32 %v3495
          %vm3503 = vmor %vm3501, %vm3502
          %v3504 = vsel %vm3503, %v3495, %v3500
          %v3505 = vmul.f32 %v3480, %v3504
          %v3506 = vmul.f32 %v3481, %v3504
          %v3507 = vmul.f32 %v3482, %v3504
          %v3508 = vmul.f32 %v3483, %v3504
          %v3510 = vperm.slane %v3472, 0
          %v3511 = vperm.slane %v3472, 1
          %v3512 = vperm.slane %v3472, 2
          %v3513 = vperm.slane %v3472, 3
          %v3518 = vmul.f32 %v3505, %v3510
          %v3519 = vmul.f32 %v3506, %v3511
          %v3520 = vmul.f32 %v3507, %v3512
          %v3521 = vmul.f32 %v3508, %v3513
          %v3523 = vperm.slane %v3473, 0
          %v3524 = vperm.slane %v3473, 1
          %v3525 = vperm.slane %v3473, 2
          %v3526 = vperm.slane %v3473, 3
          %v3531 = vadd.f32 %v3518, %v3523
          %v3532 = vadd.f32 %v3519, %v3524
          %v3533 = vadd.f32 %v3520, %v3525
          %v3534 = vadd.f32 %v3521, %v3526
          %vm3535 = vcmp.gt.f32.partialorder %v3531, 0.0
          %vm3536 = vcmp.gt.f32.partialorder %v3532, 0.0
          %vm3537 = vcmp.gt.f32.partialorder %v3533, 0.0
          %vm3538 = vcmp.gt.f32.partialorder %v3534, 0.0
          %v3539 = vmul.f32 %v3531, 1.442695
          %v3540 = vpow.pop %v3539
          %v3541 = vmul.f32 %v3532, 1.442695
          %v3542 = vpow.pop %v3541
          %v3543 = vmul.f32 %v3533, 1.442695
          %v3544 = vpow.pop %v3543
          %v3545 = vmul.f32 %v3534, 1.442695
          %v3546 = vpow.pop %v3545
          %v3547 = vsub.f32 %v3540, 1.0
          %v3548 = vsub.f32 %v3542, 1.0
          %v3549 = vsub.f32 %v3544, 1.0
          %v3550 = vsub.f32 %v3546, 1.0
          %v3551 = vmul.f32 %v3547, 1.6732632
          %v3552 = vmul.f32 %v3548, 1.6732632
          %v3553 = vmul.f32 %v3549, 1.6732632
          %v3554 = vmul.f32 %v3550, 1.6732632
          %v3555 = vsel %vm3535, %v3531, %v3551
          %v3556 = vsel %vm3536, %v3532, %v3552
          %v3557 = vsel %vm3537, %v3533, %v3553
          %v3558 = vsel %vm3538, %v3534, %v3554
          %v3559 = vmul.f32 %v3555, 1.050701
          %v3560 = vmul.f32 %v3556, 1.050701
          %v3561 = vmul.f32 %v3557, 1.050701
          %v3562 = vmul.f32 %v3558, 1.050701
          %v3563 = vld [vmem:[#allocation18] sm:$0xf]
          %v3565 = vperm.slane %v3563, 0
          %v3566 = vperm.slane %v3563, 1
          %v3567 = vperm.slane %v3563, 2
          %v3568 = vperm.slane %v3563, 3
          %v3573 = vmul.f32 %v3559, %v3565
          %v3574 = vmul.f32 %v3560, %v3566
          %v3575 = vmul.f32 %v3561, %v3567
          %v3576 = vmul.f32 %v3562, %v3568
          %v3577 = vadd.f32 %v3573, %v3574
          %v3578 = vadd.f32 %v3577, %v3575
          %v3579 = vadd.f32 %v3578, %v3576
          %3580 = vadd.xlane.f32.xlu0 %v3579
          %v3581 = vpop.xlane.xlu0 %3580
          %v3582 = vld [vmem:[#allocation4] sm:$0x1]
          %v3584 = vperm.slane %v3582, 0
          %v3586 = vadd.f32 %v3581, %v3584
          %vm3587 = vcmask 7168
          %3588 = vst.msk [vmem:[%s11] sm:$0xff] %vm3587, %v3586
        $region108: #{tpu_custom_call.1} parent=63 // pred_fallthru
          _
        // Predicated region
        $region109: #{tpu_custom_call.1} parent=63 // pred_check
          %p3589 = pneg %p285
        $region110: #{tpu_custom_call.1} parent=63 // pred_check_branch
          %3591 = sbr.rel (%p3589) target = $region112
        $region111: #{tpu_custom_call.1} parent=63 // pred_region
          _
        $region112: #{tpu_custom_call.1} parent=63 // pred_fallthru
          _
        // Predicated region
        $region113: #{tpu_custom_call.1} parent=63 // pred_check
          %p3592 = pneg %p285
        $region114: #{tpu_custom_call.1} parent=63 // pred_check_branch
          %3594 = sbr.rel (%p3592) target = $region116
        $region115: #{tpu_custom_call.1} parent=63 // pred_region
          _
        $region116: #{tpu_custom_call.1} parent=63 // pred_fallthru
          _
      $region64: #{tpu_custom_call.1} parent=5 // pred_fallthru
        _
      %p3595 = scmp.le.s32.totalorder 2, %s26
      // Predicated region
      $region117: #{tpu_custom_call.1} parent=5 // pred_check
        %p3596 = pneg %p3595
      $region118: #{tpu_custom_call.1} parent=5 // pred_check_branch
        %3598 = sbr.rel (%p3596) target = $region120
      $region119: #{tpu_custom_call.1} parent=5 // pred_region
        %s3599 = ssub.s32 %s26, 2
      $region120: #{tpu_custom_call.1} parent=5 // pred_fallthru
        _
    $region6: #{tpu_custom_call.1} parent=1 // loop_footer
      %s30 = sadd.s32 1, %s26
    $region7: #{tpu_custom_call.1} parent=1 // loop_footer_branch
      %25 = sbr.rel target = $region3
    $region8: #{tpu_custom_call.1} parent=1 // loop_exit
      _
    %3600 = vsyncpa [#allocation6], 1
    %s3601 = scalar_lea.sflag [#allocation6], 1
    %3602 = vsyncpa %s3601, 1
    %3603 = vsyncpa [#allocation8], 1
    %3604 = vsyncpa [#allocation11], 1
    %3605 = vsyncpa [#allocation14], 1
    %3606 = vsyncpa [#allocation17], 1

</llo_original>
